<compile_context>
chip_gen: v7x
topology: tpu7x:2x2x1
jax: 0.10.0
libtpu: 0.0.40
codegen_flags: <defaults>
</compile_context>

<pallas_src>
import jax
import jax.numpy as jnp
from jax.experimental import pallas as pl
from jax.experimental.pallas import tpu as pltpu


# ---------------------------------------------------------------------------
# Kernel
# ---------------------------------------------------------------------------
def gru_encoder_kernel(x_ref,                         # (S*Bp, Ip)  all timesteps, flattened
                       wih0_ref, whh0_ref,            # (Ip, 3*Hp), (Hp, 3*Hp)
                       b0_ref, bhh0n_ref,             # (1, 3*Hp),  (1, Hp)
                       wih1_ref, whh1_ref,            # (Hp, 3*Hp), (Hp, 3*Hp)
                       b1_ref, bhh1n_ref,             # (1, 3*Hp),  (1, Hp)
                       h0_out_ref, h1_out_ref,        # (Bp, Hp), (Bp, Hp)
                       gi0_scr):                      # (S*Bp, 3*Hp) scratch
    SB, _ = x_ref.shape
    Bp, Hp = h0_out_ref.shape
    S = SB // Bp

    # Hoisted layer-0 input projection for ALL timesteps: one large MXU matmul.
    # Combined (b_ih + b_hh) bias for r/z and b_ih for n already folded into b0.
    gi0_scr[...] = (
        jnp.dot(x_ref[...], wih0_ref[...], preferred_element_type=jnp.float32)
        + b0_ref[...]
    )

    # Load weights / biases once; hoist broadcasts out of the loop.
    whh0 = whh0_ref[...]
    wih1 = wih1_ref[...]
    whh1 = whh1_ref[...]
    b1 = jnp.broadcast_to(b1_ref[...], (Bp, 3 * Hp))
    bhh0n = jnp.broadcast_to(bhh0n_ref[...], (Bp, Hp))
    bhh1n = jnp.broadcast_to(bhh1n_ref[...], (Bp, Hp))

    def gates(gi, gh, h, bhn):
        # PyTorch GRU cell (gate order [r, z, n]); biases for r/z pre-combined.
        r = jax.nn.sigmoid(gi[:, :Hp] + gh[:, :Hp])
        z = jax.nn.sigmoid(gi[:, Hp:2 * Hp] + gh[:, Hp:2 * Hp])
        n = jnp.tanh(gi[:, 2 * Hp:] + r * (gh[:, 2 * Hp:] + bhn))
        return n + z * (h - n)          # == (1 - z) * n + z * h

    def step(t, carry):
        h0, h1 = carry
        # layer 0: input projection already precomputed -> only h-dependent matmul.
        gi0 = gi0_scr[pl.ds(t * Bp, Bp), :]
        gh0 = jnp.dot(h0, whh0, preferred_element_type=jnp.float32)
        h0n = gates(gi0, gh0, h0, bhh0n)
        # TODO(synk): nn.GRU inter-layer dropout (p=0.5) is train-mode only;
        # inference semantics (identity) implemented here.
        # layer 1 (input is layer-0 output).
        gi1 = jnp.dot(h0n, wih1, preferred_element_type=jnp.float32) + b1
        gh1 = jnp.dot(h1, whh1, preferred_element_type=jnp.float32)
        h1n = gates(gi1, gh1, h1, bhh1n)
        return (h0n, h1n)

    zeros = jnp.zeros((Bp, Hp), jnp.float32)
    h0_fin, h1_fin = jax.lax.fori_loop(0, S, step, (zeros, zeros),
                                       unroll=(S <= 16))
    h0_out_ref[...] = h0_fin
    h1_out_ref[...] = h1_fin


# ---------------------------------------------------------------------------
# Wrapper: padding / lane-aligned weight layout / bias precombination
# ---------------------------------------------------------------------------
def _round_up(n, m):
    return ((n + m - 1) // m) * m


def _prep_gate_weight(w, in_pad, H, Hp):
    """(in_dim, 3H) with gates [r|z|n] -> (in_pad, 3*Hp), each gate in its own
    128-lane-aligned slab; padding is zero so padded lanes stay inert."""
    in_dim = w.shape[0]
    out = jnp.zeros((in_pad, 3 * Hp), jnp.float32)
    for g in range(3):
        out = out.at[:in_dim, g * Hp:g * Hp + H].set(w[:, g * H:(g + 1) * H])
    return out


def _prep_gate_bias(b, H, Hp):
    out = jnp.zeros((1, 3 * Hp), jnp.float32)
    for g in range(3):
        out = out.at[:, g * Hp:g * Hp + H].set(b[:, g * H:(g + 1) * H])
    return out


def encoder_rnn_forward(x, params):
    """x: (S, B, I) float32. Returns (h_n[0], h_n[1]), each (B, H).

    (Named 'hidden, cell' by the original PyTorch module, but a GRU has no cell
    state -- both outputs are final hidden states.)
    """
    S, B, I = x.shape
    H = params["whh0"].shape[0]
    Bp = _round_up(B, 8)
    Ip = _round_up(I, 128)
    Hp = _round_up(H, 128)

    # Pad input (zero rows/cols are inert) and flatten time into the sublane axis
    # so the hoisted layer-0 projection is one big matmul.
    x_p = jnp.zeros((S, Bp, Ip), jnp.float32).at[:, :B, :I].set(x.astype(jnp.float32))
    x2d = x_p.reshape(S * Bp, Ip)

    def combine_bias(bih, bhh):
        # Fold b_hh into b_ih for the r and z gates; keep n-gate input bias only
        # (n-gate hidden bias must stay inside r * (W_hn h + b_hn)).
        return jnp.concatenate([bih[:, :2 * H] + bhh[:, :2 * H], bih[:, 2 * H:]],
                               axis=1)

    wih0 = _prep_gate_weight(params["wih0"], Ip, H, Hp)
    whh0 = _prep_gate_weight(params["whh0"], Hp, H, Hp)
    b0 = _prep_gate_bias(combine_bias(params["bih0"], params["bhh0"]), H, Hp)
    bhh0n = jnp.zeros((1, Hp), jnp.float32).at[:, :H].set(params["bhh0"][:, 2 * H:])

    wih1 = _prep_gate_weight(params["wih1"], Hp, H, Hp)
    whh1 = _prep_gate_weight(params["whh1"], Hp, H, Hp)
    b1 = _prep_gate_bias(combine_bias(params["bih1"], params["bhh1"]), H, Hp)
    bhh1n = jnp.zeros((1, Hp), jnp.float32).at[:, :H].set(params["bhh1"][:, 2 * H:])

    vmem_spec = lambda: pl.BlockSpec(memory_space=pltpu.MemorySpace.VMEM)

    h0_p, h1_p = pl.pallas_call(
        gru_encoder_kernel,
        out_shape=(jax.ShapeDtypeStruct((Bp, Hp), jnp.float32),
                   jax.ShapeDtypeStruct((Bp, Hp), jnp.float32)),
        in_specs=[vmem_spec() for _ in range(9)],
        out_specs=(vmem_spec(), vmem_spec()),
        scratch_shapes=[pltpu.VMEM((S * Bp, 3 * Hp), jnp.float32)],
    )(x2d, wih0, whh0, b0, bhh0n, wih1, whh1, b1, bhh1n)

    return h0_p[:B, :H], h1_p[:B, :H]


# ---------------------------------------------------------------------------
# Parameter init (PyTorch GRU shapes, stored pre-transposed as (in, 3H))
# ---------------------------------------------------------------------------
def init_params(key, input_size, hidden_size):
    H = hidden_size
    k = 1.0 / jnp.sqrt(H)
    keys = jax.random.split(key, 8)
    u = lambda kk, shape: jax.random.uniform(kk, shape, jnp.float32, -k, k)
    return {
        # layer 0: weight_ih_l0 (3H, I) -> stored (I, 3H); weight_hh_l0 (3H, H) -> (H, 3H)
        "wih0": u(keys[0], (input_size, 3 * H)),
        "whh0": u(keys[1], (H, 3 * H)),
        "bih0": u(keys[2], (1, 3 * H)),
        "bhh0": u(keys[3], (1, 3 * H)),
        # layer 1: weight_ih_l1 (3H, H) -> (H, 3H)
        "wih1": u(keys[4], (H, 3 * H)),
        "whh1": u(keys[5], (H, 3 * H)),
        "bih1": u(keys[6], (1, 3 * H)),
        "bhh1": u(keys[7], (1, 3 * H)),
    }


# ---------------------------------------------------------------------------
# Pure-JAX reference (unpadded, straightforward PyTorch GRU math)
# ---------------------------------------------------------------------------
def _gru_cell_ref(x, h, wih, whh, bih, bhh, H):
    gi = jnp.dot(x, wih) + bih
    gh = jnp.dot(h, whh) + bhh
    r = jax.nn.sigmoid(gi[:, :H] + gh[:, :H])
    z = jax.nn.sigmoid(gi[:, H:2 * H] + gh[:, H:2 * H])
    n = jnp.tanh(gi[:, 2 * H:] + r * gh[:, 2 * H:])
    return (1.0 - z) * n + z * h


def _reference_forward(x, params):
    S, B, I = x.shape
    H = params["whh0"].shape[0]
    h0 = jnp.zeros((B, H), jnp.float32)
    h1 = jnp.zeros((B, H), jnp.float32)
    for t in range(S):
        h0 = _gru_cell_ref(x[t], h0, params["wih0"], params["whh0"],
                           params["bih0"], params["bhh0"], H)
        h1 = _gru_cell_ref(h0, h1, params["wih1"], params["whh1"],
                           params["bih1"], params["bhh1"], H)
    return h0, h1


if __name__ == "__main__":
    SEQ, BATCH, INPUT_SIZE, HIDDEN_SIZE = 8, 2, 16, 32

    root = jax.random.PRNGKey(0)
    k_x, k_p = jax.random.split(root)
    x = jax.random.normal(k_x, (SEQ, BATCH, INPUT_SIZE), jnp.float32)
    params = init_params(k_p, INPUT_SIZE, HIDDEN_SIZE)

    hidden, cell = encoder_rnn_forward(x, params)
    jax.block_until_ready((hidden, cell))

    ref_hidden, ref_cell = _reference_forward(x, params)
    assert hidden.shape == (BATCH, HIDDEN_SIZE) and cell.shape == (BATCH, HIDDEN_SIZE)
    assert jnp.allclose(hidden, ref_hidden, rtol=1e-3, atol=1e-3)
    assert jnp.allclose(cell, ref_cell, rtol=1e-3, atol=1e-3)

    print("KERNEL_OK")
</pallas_src>

<mosaic_0001>
module attributes {stable_mosaic.version = 11 : i64} {
  func.func @gru_encoder_kernel(%arg0: memref<64x128xf32, #tpu.memory_space<vmem>>, %arg1: memref<128x384xf32, #tpu.memory_space<vmem>>, %arg2: memref<128x384xf32, #tpu.memory_space<vmem>>, %arg3: memref<1x384xf32, #tpu.memory_space<vmem>>, %arg4: memref<1x128xf32, #tpu.memory_space<vmem>>, %arg5: memref<128x384xf32, #tpu.memory_space<vmem>>, %arg6: memref<128x384xf32, #tpu.memory_space<vmem>>, %arg7: memref<1x384xf32, #tpu.memory_space<vmem>>, %arg8: memref<1x128xf32, #tpu.memory_space<vmem>>, %arg9: memref<8x128xf32, #tpu.memory_space<vmem>>, %arg10: memref<8x128xf32, #tpu.memory_space<vmem>>, %arg11: memref<64x384xf32, #tpu.memory_space<vmem>>) attributes {dimension_semantics = [], scalar_prefetch = 0 : i64, scratch_operands = 1 : i64, tpu.core_type = #tpu.core_type<tc>} {
    %c0 = arith.constant 0 : index
    %c0_0 = arith.constant 0 : index
    %0 = vector.load %arg0[%c0, %c0_0] : memref<64x128xf32, #tpu.memory_space<vmem>>, vector<64x128xf32>
    %c0_1 = arith.constant 0 : index
    %c0_2 = arith.constant 0 : index
    %1 = vector.load %arg1[%c0_1, %c0_2] : memref<128x384xf32, #tpu.memory_space<vmem>>, vector<128x384xf32>
    %cst = arith.constant dense<0.000000e+00> : vector<64x384xf32>
    %2 = tpu.matmul %0, %1, %cst {dimension_numbers = #tpu.dot_dimension_numbers<[1], [0], [0], [1], [0, 0, 1, 1], [], []>} : vector<64x128xf32>, vector<128x384xf32>, vector<64x384xf32> -> vector<64x384xf32>
    %c0_3 = arith.constant 0 : index
    %c0_4 = arith.constant 0 : index
    %3 = vector.load %arg3[%c0_3, %c0_4] : memref<1x384xf32, #tpu.memory_space<vmem>>, vector<1x384xf32>
    %4 = vector.broadcast %3 : vector<1x384xf32> to vector<64x384xf32>
    %5 = arith.addf %2, %4 : vector<64x384xf32>
    %c0_5 = arith.constant 0 : index
    %c0_6 = arith.constant 0 : index
    %6 = vector.load %arg11[%c0_5, %c0_6] : memref<64x384xf32, #tpu.memory_space<vmem>>, vector<64x384xf32>
    tpu.vector_store %arg11[%c0_5, %c0_6], %5 {strides = array<i32>} : memref<64x384xf32, #tpu.memory_space<vmem>>, vector<64x384xf32>,
    %c0_7 = arith.constant 0 : index
    %c0_8 = arith.constant 0 : index
    %7 = vector.load %arg2[%c0_7, %c0_8] : memref<128x384xf32, #tpu.memory_space<vmem>>, vector<128x384xf32>
    %c0_9 = arith.constant 0 : index
    %c0_10 = arith.constant 0 : index
    %8 = vector.load %arg5[%c0_9, %c0_10] : memref<128x384xf32, #tpu.memory_space<vmem>>, vector<128x384xf32>
    %c0_11 = arith.constant 0 : index
    %c0_12 = arith.constant 0 : index
    %9 = vector.load %arg6[%c0_11, %c0_12] : memref<128x384xf32, #tpu.memory_space<vmem>>, vector<128x384xf32>
    %c0_13 = arith.constant 0 : index
    %c0_14 = arith.constant 0 : index
    %10 = vector.load %arg7[%c0_13, %c0_14] : memref<1x384xf32, #tpu.memory_space<vmem>>, vector<1x384xf32>
    %11 = vector.shape_cast %10 : vector<1x384xf32> to vector<1x384xf32>
    %12 = vector.broadcast %11 : vector<1x384xf32> to vector<8x384xf32>
    %c0_15 = arith.constant 0 : index
    %c0_16 = arith.constant 0 : index
    %13 = vector.load %arg4[%c0_15, %c0_16] : memref<1x128xf32, #tpu.memory_space<vmem>>, vector<1x128xf32>
    %14 = vector.shape_cast %13 : vector<1x128xf32> to vector<1x128xf32>
    %15 = vector.broadcast %14 : vector<1x128xf32> to vector<8x128xf32>
    %c0_17 = arith.constant 0 : index
    %c0_18 = arith.constant 0 : index
    %16 = vector.load %arg8[%c0_17, %c0_18] : memref<1x128xf32, #tpu.memory_space<vmem>>, vector<1x128xf32>
    %17 = vector.shape_cast %16 : vector<1x128xf32> to vector<1x128xf32>
    %18 = vector.broadcast %17 : vector<1x128xf32> to vector<8x128xf32>
    %cst_19 = arith.constant 0.000000e+00 : f32
    %19 = vector.broadcast %cst_19 : f32 to vector<8x128xf32>
    %c0_i32 = arith.constant 0 : i32
    %c8_i32 = arith.constant 8 : i32
    %20 = arith.muli %c0_i32, %c8_i32 : i32
    %21 = arith.index_cast %20 : i32 to index
    %c0_20 = arith.constant 0 : index
    %22 = vector.load %arg11[%21, %c0_20] : memref<64x384xf32, #tpu.memory_space<vmem>>, vector<8x384xf32>
    %cst_21 = arith.constant dense<0.000000e+00> : vector<8x384xf32>
    %23 = tpu.matmul %19, %7, %cst_21 {dimension_numbers = #tpu.dot_dimension_numbers<[1], [0], [0], [1], [0, 0, 1, 1], [], []>} : vector<8x128xf32>, vector<128x384xf32>, vector<8x384xf32> -> vector<8x384xf32>
    %24 = vector.extract_strided_slice %22 {offsets = [0, 0], sizes = [8, 128], strides = [1, 1]} : vector<8x384xf32> to vector<8x128xf32>
    %25 = vector.extract_strided_slice %23 {offsets = [0, 0], sizes = [8, 128], strides = [1, 1]} : vector<8x384xf32> to vector<8x128xf32>
    %26 = arith.addf %24, %25 : vector<8x128xf32>
    %27 = arith.negf %26 : vector<8x128xf32>
    %28 = math.exp %27 : vector<8x128xf32>
    %cst_22 = arith.constant 1.000000e+00 : f32
    %29 = vector.broadcast %cst_22 : f32 to vector<8x128xf32>
    %30 = arith.addf %29, %28 : vector<8x128xf32>
    %31 = arith.divf %29, %30 : vector<8x128xf32>
    %32 = vector.extract_strided_slice %22 {offsets = [0, 128], sizes = [8, 128], strides = [1, 1]} : vector<8x384xf32> to vector<8x128xf32>
    %33 = vector.extract_strided_slice %23 {offsets = [0, 128], sizes = [8, 128], strides = [1, 1]} : vector<8x384xf32> to vector<8x128xf32>
    %34 = arith.addf %32, %33 : vector<8x128xf32>
    %35 = arith.negf %34 : vector<8x128xf32>
    %36 = math.exp %35 : vector<8x128xf32>
    %cst_23 = arith.constant 1.000000e+00 : f32
    %37 = vector.broadcast %cst_23 : f32 to vector<8x128xf32>
    %38 = arith.addf %37, %36 : vector<8x128xf32>
    %39 = arith.divf %37, %38 : vector<8x128xf32>
    %40 = vector.extract_strided_slice %22 {offsets = [0, 256], sizes = [8, 128], strides = [1, 1]} : vector<8x384xf32> to vector<8x128xf32>
    %41 = vector.extract_strided_slice %23 {offsets = [0, 256], sizes = [8, 128], strides = [1, 1]} : vector<8x384xf32> to vector<8x128xf32>
    %42 = arith.addf %41, %15 : vector<8x128xf32>
    %43 = arith.mulf %31, %42 : vector<8x128xf32>
    %44 = arith.addf %40, %43 : vector<8x128xf32>
    %45 = math.tanh %44 : vector<8x128xf32>
    %46 = arith.subf %19, %45 : vector<8x128xf32>
    %47 = arith.mulf %39, %46 : vector<8x128xf32>
    %48 = arith.addf %45, %47 : vector<8x128xf32>
    %cst_24 = arith.constant dense<0.000000e+00> : vector<8x384xf32>
    %49 = tpu.matmul %48, %8, %cst_24 {dimension_numbers = #tpu.dot_dimension_numbers<[1], [0], [0], [1], [0, 0, 1, 1], [], []>} : vector<8x128xf32>, vector<128x384xf32>, vector<8x384xf32> -> vector<8x384xf32>
    %50 = arith.addf %49, %12 : vector<8x384xf32>
    %cst_25 = arith.constant dense<0.000000e+00> : vector<8x384xf32>
    %51 = tpu.matmul %19, %9, %cst_25 {dimension_numbers = #tpu.dot_dimension_numbers<[1], [0], [0], [1], [0, 0, 1, 1], [], []>} : vector<8x128xf32>, vector<128x384xf32>, vector<8x384xf32> -> vector<8x384xf32>
    %52 = vector.extract_strided_slice %50 {offsets = [0, 0], sizes = [8, 128], strides = [1, 1]} : vector<8x384xf32> to vector<8x128xf32>
    %53 = vector.extract_strided_slice %51 {offsets = [0, 0], sizes = [8, 128], strides = [1, 1]} : vector<8x384xf32> to vector<8x128xf32>
    %54 = arith.addf %52, %53 : vector<8x128xf32>
    %55 = arith.negf %54 : vector<8x128xf32>
    %56 = math.exp %55 : vector<8x128xf32>
    %cst_26 = arith.constant 1.000000e+00 : f32
    %57 = vector.broadcast %cst_26 : f32 to vector<8x128xf32>
    %58 = arith.addf %57, %56 : vector<8x128xf32>
    %59 = arith.divf %57, %58 : vector<8x128xf32>
    %60 = vector.extract_strided_slice %50 {offsets = [0, 128], sizes = [8, 128], strides = [1, 1]} : vector<8x384xf32> to vector<8x128xf32>
    %61 = vector.extract_strided_slice %51 {offsets = [0, 128], sizes = [8, 128], strides = [1, 1]} : vector<8x384xf32> to vector<8x128xf32>
    %62 = arith.addf %60, %61 : vector<8x128xf32>
    %63 = arith.negf %62 : vector<8x128xf32>
    %64 = math.exp %63 : vector<8x128xf32>
    %cst_27 = arith.constant 1.000000e+00 : f32
    %65 = vector.broadcast %cst_27 : f32 to vector<8x128xf32>
    %66 = arith.addf %65, %64 : vector<8x128xf32>
    %67 = arith.divf %65, %66 : vector<8x128xf32>
    %68 = vector.extract_strided_slice %50 {offsets = [0, 256], sizes = [8, 128], strides = [1, 1]} : vector<8x384xf32> to vector<8x128xf32>
    %69 = vector.extract_strided_slice %51 {offsets = [0, 256], sizes = [8, 128], strides = [1, 1]} : vector<8x384xf32> to vector<8x128xf32>
    %70 = arith.addf %69, %18 : vector<8x128xf32>
    %71 = arith.mulf %59, %70 : vector<8x128xf32>
    %72 = arith.addf %68, %71 : vector<8x128xf32>
    %73 = math.tanh %72 : vector<8x128xf32>
    %74 = arith.subf %19, %73 : vector<8x128xf32>
    %75 = arith.mulf %67, %74 : vector<8x128xf32>
    %76 = arith.addf %73, %75 : vector<8x128xf32>
    %c1_i32 = arith.constant 1 : i32
    %c8_i32_28 = arith.constant 8 : i32
    %77 = arith.muli %c1_i32, %c8_i32_28 : i32
    %78 = arith.index_cast %77 : i32 to index
    %c0_29 = arith.constant 0 : index
    %79 = vector.load %arg11[%78, %c0_29] : memref<64x384xf32, #tpu.memory_space<vmem>>, vector<8x384xf32>
    %cst_30 = arith.constant dense<0.000000e+00> : vector<8x384xf32>
    %80 = tpu.matmul %48, %7, %cst_30 {dimension_numbers = #tpu.dot_dimension_numbers<[1], [0], [0], [1], [0, 0, 1, 1], [], []>} : vector<8x128xf32>, vector<128x384xf32>, vector<8x384xf32> -> vector<8x384xf32>
    %81 = vector.extract_strided_slice %79 {offsets = [0, 0], sizes = [8, 128], strides = [1, 1]} : vector<8x384xf32> to vector<8x128xf32>
    %82 = vector.extract_strided_slice %80 {offsets = [0, 0], sizes = [8, 128], strides = [1, 1]} : vector<8x384xf32> to vector<8x128xf32>
    %83 = arith.addf %81, %82 : vector<8x128xf32>
    %84 = arith.negf %83 : vector<8x128xf32>
    %85 = math.exp %84 : vector<8x128xf32>
    %cst_31 = arith.constant 1.000000e+00 : f32
    %86 = vector.broadcast %cst_31 : f32 to vector<8x128xf32>
    %87 = arith.addf %86, %85 : vector<8x128xf32>
    %88 = arith.divf %86, %87 : vector<8x128xf32>
    %89 = vector.extract_strided_slice %79 {offsets = [0, 128], sizes = [8, 128], strides = [1, 1]} : vector<8x384xf32> to vector<8x128xf32>
    %90 = vector.extract_strided_slice %80 {offsets = [0, 128], sizes = [8, 128], strides = [1, 1]} : vector<8x384xf32> to vector<8x128xf32>
    %91 = arith.addf %89, %90 : vector<8x128xf32>
    %92 = arith.negf %91 : vector<8x128xf32>
    %93 = math.exp %92 : vector<8x128xf32>
    %cst_32 = arith.constant 1.000000e+00 : f32
    %94 = vector.broadcast %cst_32 : f32 to vector<8x128xf32>
    %95 = arith.addf %94, %93 : vector<8x128xf32>
    %96 = arith.divf %94, %95 : vector<8x128xf32>
    %97 = vector.extract_strided_slice %79 {offsets = [0, 256], sizes = [8, 128], strides = [1, 1]} : vector<8x384xf32> to vector<8x128xf32>
    %98 = vector.extract_strided_slice %80 {offsets = [0, 256], sizes = [8, 128], strides = [1, 1]} : vector<8x384xf32> to vector<8x128xf32>
    %99 = arith.addf %98, %15 : vector<8x128xf32>
    %100 = arith.mulf %88, %99 : vector<8x128xf32>
    %101 = arith.addf %97, %100 : vector<8x128xf32>
    %102 = math.tanh %101 : vector<8x128xf32>
    %103 = arith.subf %48, %102 : vector<8x128xf32>
    %104 = arith.mulf %96, %103 : vector<8x128xf32>
    %105 = arith.addf %102, %104 : vector<8x128xf32>
    %cst_33 = arith.constant dense<0.000000e+00> : vector<8x384xf32>
    %106 = tpu.matmul %105, %8, %cst_33 {dimension_numbers = #tpu.dot_dimension_numbers<[1], [0], [0], [1], [0, 0, 1, 1], [], []>} : vector<8x128xf32>, vector<128x384xf32>, vector<8x384xf32> -> vector<8x384xf32>
    %107 = arith.addf %106, %12 : vector<8x384xf32>
    %cst_34 = arith.constant dense<0.000000e+00> : vector<8x384xf32>
    %108 = tpu.matmul %76, %9, %cst_34 {dimension_numbers = #tpu.dot_dimension_numbers<[1], [0], [0], [1], [0, 0, 1, 1], [], []>} : vector<8x128xf32>, vector<128x384xf32>, vector<8x384xf32> -> vector<8x384xf32>
    %109 = vector.extract_strided_slice %107 {offsets = [0, 0], sizes = [8, 128], strides = [1, 1]} : vector<8x384xf32> to vector<8x128xf32>
    %110 = vector.extract_strided_slice %108 {offsets = [0, 0], sizes = [8, 128], strides = [1, 1]} : vector<8x384xf32> to vector<8x128xf32>
    %111 = arith.addf %109, %110 : vector<8x128xf32>
    %112 = arith.negf %111 : vector<8x128xf32>
    %113 = math.exp %112 : vector<8x128xf32>
    %cst_35 = arith.constant 1.000000e+00 : f32
    %114 = vector.broadcast %cst_35 : f32 to vector<8x128xf32>
    %115 = arith.addf %114, %113 : vector<8x128xf32>
    %116 = arith.divf %114, %115 : vector<8x128xf32>
    %117 = vector.extract_strided_slice %107 {offsets = [0, 128], sizes = [8, 128], strides = [1, 1]} : vector<8x384xf32> to vector<8x128xf32>
    %118 = vector.extract_strided_slice %108 {offsets = [0, 128], sizes = [8, 128], strides = [1, 1]} : vector<8x384xf32> to vector<8x128xf32>
    %119 = arith.addf %117, %118 : vector<8x128xf32>
    %120 = arith.negf %119 : vector<8x128xf32>
    %121 = math.exp %120 : vector<8x128xf32>
    %cst_36 = arith.constant 1.000000e+00 : f32
    %122 = vector.broadcast %cst_36 : f32 to vector<8x128xf32>
    %123 = arith.addf %122, %121 : vector<8x128xf32>
    %124 = arith.divf %122, %123 : vector<8x128xf32>
    %125 = vector.extract_strided_slice %107 {offsets = [0, 256], sizes = [8, 128], strides = [1, 1]} : vector<8x384xf32> to vector<8x128xf32>
    %126 = vector.extract_strided_slice %108 {offsets = [0, 256], sizes = [8, 128], strides = [1, 1]} : vector<8x384xf32> to vector<8x128xf32>
    %127 = arith.addf %126, %18 : vector<8x128xf32>
    %128 = arith.mulf %116, %127 : vector<8x128xf32>
    %129 = arith.addf %125, %128 : vector<8x128xf32>
    %130 = math.tanh %129 : vector<8x128xf32>
    %131 = arith.subf %76, %130 : vector<8x128xf32>
    %132 = arith.mulf %124, %131 : vector<8x128xf32>
    %133 = arith.addf %130, %132 : vector<8x128xf32>
    %c2_i32 = arith.constant 2 : i32
    %c8_i32_37 = arith.constant 8 : i32
    %134 = arith.muli %c2_i32, %c8_i32_37 : i32
    %135 = arith.index_cast %134 : i32 to index
    %c0_38 = arith.constant 0 : index
    %136 = vector.load %arg11[%135, %c0_38] : memref<64x384xf32, #tpu.memory_space<vmem>>, vector<8x384xf32>
    %cst_39 = arith.constant dense<0.000000e+00> : vector<8x384xf32>
    %137 = tpu.matmul %105, %7, %cst_39 {dimension_numbers = #tpu.dot_dimension_numbers<[1], [0], [0], [1], [0, 0, 1, 1], [], []>} : vector<8x128xf32>, vector<128x384xf32>, vector<8x384xf32> -> vector<8x384xf32>
    %138 = vector.extract_strided_slice %136 {offsets = [0, 0], sizes = [8, 128], strides = [1, 1]} : vector<8x384xf32> to vector<8x128xf32>
    %139 = vector.extract_strided_slice %137 {offsets = [0, 0], sizes = [8, 128], strides = [1, 1]} : vector<8x384xf32> to vector<8x128xf32>
    %140 = arith.addf %138, %139 : vector<8x128xf32>
    %141 = arith.negf %140 : vector<8x128xf32>
    %142 = math.exp %141 : vector<8x128xf32>
    %cst_40 = arith.constant 1.000000e+00 : f32
    %143 = vector.broadcast %cst_40 : f32 to vector<8x128xf32>
    %144 = arith.addf %143, %142 : vector<8x128xf32>
    %145 = arith.divf %143, %144 : vector<8x128xf32>
    %146 = vector.extract_strided_slice %136 {offsets = [0, 128], sizes = [8, 128], strides = [1, 1]} : vector<8x384xf32> to vector<8x128xf32>
    %147 = vector.extract_strided_slice %137 {offsets = [0, 128], sizes = [8, 128], strides = [1, 1]} : vector<8x384xf32> to vector<8x128xf32>
    %148 = arith.addf %146, %147 : vector<8x128xf32>
    %149 = arith.negf %148 : vector<8x128xf32>
    %150 = math.exp %149 : vector<8x128xf32>
    %cst_41 = arith.constant 1.000000e+00 : f32
    %151 = vector.broadcast %cst_41 : f32 to vector<8x128xf32>
    %152 = arith.addf %151, %150 : vector<8x128xf32>
    %153 = arith.divf %151, %152 : vector<8x128xf32>
    %154 = vector.extract_strided_slice %136 {offsets = [0, 256], sizes = [8, 128], strides = [1, 1]} : vector<8x384xf32> to vector<8x128xf32>
    %155 = vector.extract_strided_slice %137 {offsets = [0, 256], sizes = [8, 128], strides = [1, 1]} : vector<8x384xf32> to vector<8x128xf32>
    %156 = arith.addf %155, %15 : vector<8x128xf32>
    %157 = arith.mulf %145, %156 : vector<8x128xf32>
    %158 = arith.addf %154, %157 : vector<8x128xf32>
    %159 = math.tanh %158 : vector<8x128xf32>
    %160 = arith.subf %105, %159 : vector<8x128xf32>
    %161 = arith.mulf %153, %160 : vector<8x128xf32>
    %162 = arith.addf %159, %161 : vector<8x128xf32>
    %cst_42 = arith.constant dense<0.000000e+00> : vector<8x384xf32>
    %163 = tpu.matmul %162, %8, %cst_42 {dimension_numbers = #tpu.dot_dimension_numbers<[1], [0], [0], [1], [0, 0, 1, 1], [], []>} : vector<8x128xf32>, vector<128x384xf32>, vector<8x384xf32> -> vector<8x384xf32>
    %164 = arith.addf %163, %12 : vector<8x384xf32>
    %cst_43 = arith.constant dense<0.000000e+00> : vector<8x384xf32>
    %165 = tpu.matmul %133, %9, %cst_43 {dimension_numbers = #tpu.dot_dimension_numbers<[1], [0], [0], [1], [0, 0, 1, 1], [], []>} : vector<8x128xf32>, vector<128x384xf32>, vector<8x384xf32> -> vector<8x384xf32>
    %166 = vector.extract_strided_slice %164 {offsets = [0, 0], sizes = [8, 128], strides = [1, 1]} : vector<8x384xf32> to vector<8x128xf32>
    %167 = vector.extract_strided_slice %165 {offsets = [0, 0], sizes = [8, 128], strides = [1, 1]} : vector<8x384xf32> to vector<8x128xf32>
    %168 = arith.addf %166, %167 : vector<8x128xf32>
    %169 = arith.negf %168 : vector<8x128xf32>
    %170 = math.exp %169 : vector<8x128xf32>
    %cst_44 = arith.constant 1.000000e+00 : f32
    %171 = vector.broadcast %cst_44 : f32 to vector<8x128xf32>
    %172 = arith.addf %171, %170 : vector<8x128xf32>
    %173 = arith.divf %171, %172 : vector<8x128xf32>
    %174 = vector.extract_strided_slice %164 {offsets = [0, 128], sizes = [8, 128], strides = [1, 1]} : vector<8x384xf32> to vector<8x128xf32>
    %175 = vector.extract_strided_slice %165 {offsets = [0, 128], sizes = [8, 128], strides = [1, 1]} : vector<8x384xf32> to vector<8x128xf32>
    %176 = arith.addf %174, %175 : vector<8x128xf32>
    %177 = arith.negf %176 : vector<8x128xf32>
    %178 = math.exp %177 : vector<8x128xf32>
    %cst_45 = arith.constant 1.000000e+00 : f32
    %179 = vector.broadcast %cst_45 : f32 to vector<8x128xf32>
    %180 = arith.addf %179, %178 : vector<8x128xf32>
    %181 = arith.divf %179, %180 : vector<8x128xf32>
    %182 = vector.extract_strided_slice %164 {offsets = [0, 256], sizes = [8, 128], strides = [1, 1]} : vector<8x384xf32> to vector<8x128xf32>
    %183 = vector.extract_strided_slice %165 {offsets = [0, 256], sizes = [8, 128], strides = [1, 1]} : vector<8x384xf32> to vector<8x128xf32>
    %184 = arith.addf %183, %18 : vector<8x128xf32>
    %185 = arith.mulf %173, %184 : vector<8x128xf32>
    %186 = arith.addf %182, %185 : vector<8x128xf32>
    %187 = math.tanh %186 : vector<8x128xf32>
    %188 = arith.subf %133, %187 : vector<8x128xf32>
    %189 = arith.mulf %181, %188 : vector<8x128xf32>
    %190 = arith.addf %187, %189 : vector<8x128xf32>
    %c3_i32 = arith.constant 3 : i32
    %c8_i32_46 = arith.constant 8 : i32
    %191 = arith.muli %c3_i32, %c8_i32_46 : i32
    %192 = arith.index_cast %191 : i32 to index
    %c0_47 = arith.constant 0 : index
    %193 = vector.load %arg11[%192, %c0_47] : memref<64x384xf32, #tpu.memory_space<vmem>>, vector<8x384xf32>
    %cst_48 = arith.constant dense<0.000000e+00> : vector<8x384xf32>
    %194 = tpu.matmul %162, %7, %cst_48 {dimension_numbers = #tpu.dot_dimension_numbers<[1], [0], [0], [1], [0, 0, 1, 1], [], []>} : vector<8x128xf32>, vector<128x384xf32>, vector<8x384xf32> -> vector<8x384xf32>
    %195 = vector.extract_strided_slice %193 {offsets = [0, 0], sizes = [8, 128], strides = [1, 1]} : vector<8x384xf32> to vector<8x128xf32>
    %196 = vector.extract_strided_slice %194 {offsets = [0, 0], sizes = [8, 128], strides = [1, 1]} : vector<8x384xf32> to vector<8x128xf32>
    %197 = arith.addf %195, %196 : vector<8x128xf32>
    %198 = arith.negf %197 : vector<8x128xf32>
    %199 = math.exp %198 : vector<8x128xf32>
    %cst_49 = arith.constant 1.000000e+00 : f32
    %200 = vector.broadcast %cst_49 : f32 to vector<8x128xf32>
    %201 = arith.addf %200, %199 : vector<8x128xf32>
    %202 = arith.divf %200, %201 : vector<8x128xf32>
    %203 = vector.extract_strided_slice %193 {offsets = [0, 128], sizes = [8, 128], strides = [1, 1]} : vector<8x384xf32> to vector<8x128xf32>
    %204 = vector.extract_strided_slice %194 {offsets = [0, 128], sizes = [8, 128], strides = [1, 1]} : vector<8x384xf32> to vector<8x128xf32>
    %205 = arith.addf %203, %204 : vector<8x128xf32>
    %206 = arith.negf %205 : vector<8x128xf32>
    %207 = math.exp %206 : vector<8x128xf32>
    %cst_50 = arith.constant 1.000000e+00 : f32
    %208 = vector.broadcast %cst_50 : f32 to vector<8x128xf32>
    %209 = arith.addf %208, %207 : vector<8x128xf32>
    %210 = arith.divf %208, %209 : vector<8x128xf32>
    %211 = vector.extract_strided_slice %193 {offsets = [0, 256], sizes = [8, 128], strides = [1, 1]} : vector<8x384xf32> to vector<8x128xf32>
    %212 = vector.extract_strided_slice %194 {offsets = [0, 256], sizes = [8, 128], strides = [1, 1]} : vector<8x384xf32> to vector<8x128xf32>
    %213 = arith.addf %212, %15 : vector<8x128xf32>
    %214 = arith.mulf %202, %213 : vector<8x128xf32>
    %215 = arith.addf %211, %214 : vector<8x128xf32>
    %216 = math.tanh %215 : vector<8x128xf32>
    %217 = arith.subf %162, %216 : vector<8x128xf32>
    %218 = arith.mulf %210, %217 : vector<8x128xf32>
    %219 = arith.addf %216, %218 : vector<8x128xf32>
    %cst_51 = arith.constant dense<0.000000e+00> : vector<8x384xf32>
    %220 = tpu.matmul %219, %8, %cst_51 {dimension_numbers = #tpu.dot_dimension_numbers<[1], [0], [0], [1], [0, 0, 1, 1], [], []>} : vector<8x128xf32>, vector<128x384xf32>, vector<8x384xf32> -> vector<8x384xf32>
    %221 = arith.addf %220, %12 : vector<8x384xf32>
    %cst_52 = arith.constant dense<0.000000e+00> : vector<8x384xf32>
    %222 = tpu.matmul %190, %9, %cst_52 {dimension_numbers = #tpu.dot_dimension_numbers<[1], [0], [0], [1], [0, 0, 1, 1], [], []>} : vector<8x128xf32>, vector<128x384xf32>, vector<8x384xf32> -> vector<8x384xf32>
    %223 = vector.extract_strided_slice %221 {offsets = [0, 0], sizes = [8, 128], strides = [1, 1]} : vector<8x384xf32> to vector<8x128xf32>
    %224 = vector.extract_strided_slice %222 {offsets = [0, 0], sizes = [8, 128], strides = [1, 1]} : vector<8x384xf32> to vector<8x128xf32>
    %225 = arith.addf %223, %224 : vector<8x128xf32>
    %226 = arith.negf %225 : vector<8x128xf32>
    %227 = math.exp %226 : vector<8x128xf32>
    %cst_53 = arith.constant 1.000000e+00 : f32
    %228 = vector.broadcast %cst_53 : f32 to vector<8x128xf32>
    %229 = arith.addf %228, %227 : vector<8x128xf32>
    %230 = arith.divf %228, %229 : vector<8x128xf32>
    %231 = vector.extract_strided_slice %221 {offsets = [0, 128], sizes = [8, 128], strides = [1, 1]} : vector<8x384xf32> to vector<8x128xf32>
    %232 = vector.extract_strided_slice %222 {offsets = [0, 128], sizes = [8, 128], strides = [1, 1]} : vector<8x384xf32> to vector<8x128xf32>
    %233 = arith.addf %231, %232 : vector<8x128xf32>
    %234 = arith.negf %233 : vector<8x128xf32>
    %235 = math.exp %234 : vector<8x128xf32>
    %cst_54 = arith.constant 1.000000e+00 : f32
    %236 = vector.broadcast %cst_54 : f32 to vector<8x128xf32>
    %237 = arith.addf %236, %235 : vector<8x128xf32>
    %238 = arith.divf %236, %237 : vector<8x128xf32>
    %239 = vector.extract_strided_slice %221 {offsets = [0, 256], sizes = [8, 128], strides = [1, 1]} : vector<8x384xf32> to vector<8x128xf32>
    %240 = vector.extract_strided_slice %222 {offsets = [0, 256], sizes = [8, 128], strides = [1, 1]} : vector<8x384xf32> to vector<8x128xf32>
    %241 = arith.addf %240, %18 : vector<8x128xf32>
    %242 = arith.mulf %230, %241 : vector<8x128xf32>
    %243 = arith.addf %239, %242 : vector<8x128xf32>
    %244 = math.tanh %243 : vector<8x128xf32>
    %245 = arith.subf %190, %244 : vector<8x128xf32>
    %246 = arith.mulf %238, %245 : vector<8x128xf32>
    %247 = arith.addf %244, %246 : vector<8x128xf32>
    %c4_i32 = arith.constant 4 : i32
    %c8_i32_55 = arith.constant 8 : i32
    %248 = arith.muli %c4_i32, %c8_i32_55 : i32
    %249 = arith.index_cast %248 : i32 to index
    %c0_56 = arith.constant 0 : index
    %250 = vector.load %arg11[%249, %c0_56] : memref<64x384xf32, #tpu.memory_space<vmem>>, vector<8x384xf32>
    %cst_57 = arith.constant dense<0.000000e+00> : vector<8x384xf32>
    %251 = tpu.matmul %219, %7, %cst_57 {dimension_numbers = #tpu.dot_dimension_numbers<[1], [0], [0], [1], [0, 0, 1, 1], [], []>} : vector<8x128xf32>, vector<128x384xf32>, vector<8x384xf32> -> vector<8x384xf32>
    %252 = vector.extract_strided_slice %250 {offsets = [0, 0], sizes = [8, 128], strides = [1, 1]} : vector<8x384xf32> to vector<8x128xf32>
    %253 = vector.extract_strided_slice %251 {offsets = [0, 0], sizes = [8, 128], strides = [1, 1]} : vector<8x384xf32> to vector<8x128xf32>
    %254 = arith.addf %252, %253 : vector<8x128xf32>
    %255 = arith.negf %254 : vector<8x128xf32>
    %256 = math.exp %255 : vector<8x128xf32>
    %cst_58 = arith.constant 1.000000e+00 : f32
    %257 = vector.broadcast %cst_58 : f32 to vector<8x128xf32>
    %258 = arith.addf %257, %256 : vector<8x128xf32>
    %259 = arith.divf %257, %258 : vector<8x128xf32>
    %260 = vector.extract_strided_slice %250 {offsets = [0, 128], sizes = [8, 128], strides = [1, 1]} : vector<8x384xf32> to vector<8x128xf32>
    %261 = vector.extract_strided_slice %251 {offsets = [0, 128], sizes = [8, 128], strides = [1, 1]} : vector<8x384xf32> to vector<8x128xf32>
    %262 = arith.addf %260, %261 : vector<8x128xf32>
    %263 = arith.negf %262 : vector<8x128xf32>
    %264 = math.exp %263 : vector<8x128xf32>
    %cst_59 = arith.constant 1.000000e+00 : f32
    %265 = vector.broadcast %cst_59 : f32 to vector<8x128xf32>
    %266 = arith.addf %265, %264 : vector<8x128xf32>
    %267 = arith.divf %265, %266 : vector<8x128xf32>
    %268 = vector.extract_strided_slice %250 {offsets = [0, 256], sizes = [8, 128], strides = [1, 1]} : vector<8x384xf32> to vector<8x128xf32>
    %269 = vector.extract_strided_slice %251 {offsets = [0, 256], sizes = [8, 128], strides = [1, 1]} : vector<8x384xf32> to vector<8x128xf32>
    %270 = arith.addf %269, %15 : vector<8x128xf32>
    %271 = arith.mulf %259, %270 : vector<8x128xf32>
    %272 = arith.addf %268, %271 : vector<8x128xf32>
    %273 = math.tanh %272 : vector<8x128xf32>
    %274 = arith.subf %219, %273 : vector<8x128xf32>
    %275 = arith.mulf %267, %274 : vector<8x128xf32>
    %276 = arith.addf %273, %275 : vector<8x128xf32>
    %cst_60 = arith.constant dense<0.000000e+00> : vector<8x384xf32>
    %277 = tpu.matmul %276, %8, %cst_60 {dimension_numbers = #tpu.dot_dimension_numbers<[1], [0], [0], [1], [0, 0, 1, 1], [], []>} : vector<8x128xf32>, vector<128x384xf32>, vector<8x384xf32> -> vector<8x384xf32>
    %278 = arith.addf %277, %12 : vector<8x384xf32>
    %cst_61 = arith.constant dense<0.000000e+00> : vector<8x384xf32>
    %279 = tpu.matmul %247, %9, %cst_61 {dimension_numbers = #tpu.dot_dimension_numbers<[1], [0], [0], [1], [0, 0, 1, 1], [], []>} : vector<8x128xf32>, vector<128x384xf32>, vector<8x384xf32> -> vector<8x384xf32>
    %280 = vector.extract_strided_slice %278 {offsets = [0, 0], sizes = [8, 128], strides = [1, 1]} : vector<8x384xf32> to vector<8x128xf32>
    %281 = vector.extract_strided_slice %279 {offsets = [0, 0], sizes = [8, 128], strides = [1, 1]} : vector<8x384xf32> to vector<8x128xf32>
    %282 = arith.addf %280, %281 : vector<8x128xf32>
    %283 = arith.negf %282 : vector<8x128xf32>
    %284 = math.exp %283 : vector<8x128xf32>
    %cst_62 = arith.constant 1.000000e+00 : f32
    %285 = vector.broadcast %cst_62 : f32 to vector<8x128xf32>
    %286 = arith.addf %285, %284 : vector<8x128xf32>
    %287 = arith.divf %285, %286 : vector<8x128xf32>
    %288 = vector.extract_strided_slice %278 {offsets = [0, 128], sizes = [8, 128], strides = [1, 1]} : vector<8x384xf32> to vector<8x128xf32>
    %289 = vector.extract_strided_slice %279 {offsets = [0, 128], sizes = [8, 128], strides = [1, 1]} : vector<8x384xf32> to vector<8x128xf32>
    %290 = arith.addf %288, %289 : vector<8x128xf32>
    %291 = arith.negf %290 : vector<8x128xf32>
    %292 = math.exp %291 : vector<8x128xf32>
    %cst_63 = arith.constant 1.000000e+00 : f32
    %293 = vector.broadcast %cst_63 : f32 to vector<8x128xf32>
    %294 = arith.addf %293, %292 : vector<8x128xf32>
    %295 = arith.divf %293, %294 : vector<8x128xf32>
    %296 = vector.extract_strided_slice %278 {offsets = [0, 256], sizes = [8, 128], strides = [1, 1]} : vector<8x384xf32> to vector<8x128xf32>
    %297 = vector.extract_strided_slice %279 {offsets = [0, 256], sizes = [8, 128], strides = [1, 1]} : vector<8x384xf32> to vector<8x128xf32>
    %298 = arith.addf %297, %18 : vector<8x128xf32>
    %299 = arith.mulf %287, %298 : vector<8x128xf32>
    %300 = arith.addf %296, %299 : vector<8x128xf32>
    %301 = math.tanh %300 : vector<8x128xf32>
    %302 = arith.subf %247, %301 : vector<8x128xf32>
    %303 = arith.mulf %295, %302 : vector<8x128xf32>
    %304 = arith.addf %301, %303 : vector<8x128xf32>
    %c5_i32 = arith.constant 5 : i32
    %c8_i32_64 = arith.constant 8 : i32
    %305 = arith.muli %c5_i32, %c8_i32_64 : i32
    %306 = arith.index_cast %305 : i32 to index
    %c0_65 = arith.constant 0 : index
    %307 = vector.load %arg11[%306, %c0_65] : memref<64x384xf32, #tpu.memory_space<vmem>>, vector<8x384xf32>
    %cst_66 = arith.constant dense<0.000000e+00> : vector<8x384xf32>
    %308 = tpu.matmul %276, %7, %cst_66 {dimension_numbers = #tpu.dot_dimension_numbers<[1], [0], [0], [1], [0, 0, 1, 1], [], []>} : vector<8x128xf32>, vector<128x384xf32>, vector<8x384xf32> -> vector<8x384xf32>
    %309 = vector.extract_strided_slice %307 {offsets = [0, 0], sizes = [8, 128], strides = [1, 1]} : vector<8x384xf32> to vector<8x128xf32>
    %310 = vector.extract_strided_slice %308 {offsets = [0, 0], sizes = [8, 128], strides = [1, 1]} : vector<8x384xf32> to vector<8x128xf32>
    %311 = arith.addf %309, %310 : vector<8x128xf32>
    %312 = arith.negf %311 : vector<8x128xf32>
    %313 = math.exp %312 : vector<8x128xf32>
    %cst_67 = arith.constant 1.000000e+00 : f32
    %314 = vector.broadcast %cst_67 : f32 to vector<8x128xf32>
    %315 = arith.addf %314, %313 : vector<8x128xf32>
    %316 = arith.divf %314, %315 : vector<8x128xf32>
    %317 = vector.extract_strided_slice %307 {offsets = [0, 128], sizes = [8, 128], strides = [1, 1]} : vector<8x384xf32> to vector<8x128xf32>
    %318 = vector.extract_strided_slice %308 {offsets = [0, 128], sizes = [8, 128], strides = [1, 1]} : vector<8x384xf32> to vector<8x128xf32>
    %319 = arith.addf %317, %318 : vector<8x128xf32>
    %320 = arith.negf %319 : vector<8x128xf32>
    %321 = math.exp %320 : vector<8x128xf32>
    %cst_68 = arith.constant 1.000000e+00 : f32
    %322 = vector.broadcast %cst_68 : f32 to vector<8x128xf32>
    %323 = arith.addf %322, %321 : vector<8x128xf32>
    %324 = arith.divf %322, %323 : vector<8x128xf32>
    %325 = vector.extract_strided_slice %307 {offsets = [0, 256], sizes = [8, 128], strides = [1, 1]} : vector<8x384xf32> to vector<8x128xf32>
    %326 = vector.extract_strided_slice %308 {offsets = [0, 256], sizes = [8, 128], strides = [1, 1]} : vector<8x384xf32> to vector<8x128xf32>
    %327 = arith.addf %326, %15 : vector<8x128xf32>
    %328 = arith.mulf %316, %327 : vector<8x128xf32>
    %329 = arith.addf %325, %328 : vector<8x128xf32>
    %330 = math.tanh %329 : vector<8x128xf32>
    %331 = arith.subf %276, %330 : vector<8x128xf32>
    %332 = arith.mulf %324, %331 : vector<8x128xf32>
    %333 = arith.addf %330, %332 : vector<8x128xf32>
    %cst_69 = arith.constant dense<0.000000e+00> : vector<8x384xf32>
    %334 = tpu.matmul %333, %8, %cst_69 {dimension_numbers = #tpu.dot_dimension_numbers<[1], [0], [0], [1], [0, 0, 1, 1], [], []>} : vector<8x128xf32>, vector<128x384xf32>, vector<8x384xf32> -> vector<8x384xf32>
    %335 = arith.addf %334, %12 : vector<8x384xf32>
    %cst_70 = arith.constant dense<0.000000e+00> : vector<8x384xf32>
    %336 = tpu.matmul %304, %9, %cst_70 {dimension_numbers = #tpu.dot_dimension_numbers<[1], [0], [0], [1], [0, 0, 1, 1], [], []>} : vector<8x128xf32>, vector<128x384xf32>, vector<8x384xf32> -> vector<8x384xf32>
    %337 = vector.extract_strided_slice %335 {offsets = [0, 0], sizes = [8, 128], strides = [1, 1]} : vector<8x384xf32> to vector<8x128xf32>
    %338 = vector.extract_strided_slice %336 {offsets = [0, 0], sizes = [8, 128], strides = [1, 1]} : vector<8x384xf32> to vector<8x128xf32>
    %339 = arith.addf %337, %338 : vector<8x128xf32>
    %340 = arith.negf %339 : vector<8x128xf32>
    %341 = math.exp %340 : vector<8x128xf32>
    %cst_71 = arith.constant 1.000000e+00 : f32
    %342 = vector.broadcast %cst_71 : f32 to vector<8x128xf32>
    %343 = arith.addf %342, %341 : vector<8x128xf32>
    %344 = arith.divf %342, %343 : vector<8x128xf32>
    %345 = vector.extract_strided_slice %335 {offsets = [0, 128], sizes = [8, 128], strides = [1, 1]} : vector<8x384xf32> to vector<8x128xf32>
    %346 = vector.extract_strided_slice %336 {offsets = [0, 128], sizes = [8, 128], strides = [1, 1]} : vector<8x384xf32> to vector<8x128xf32>
    %347 = arith.addf %345, %346 : vector<8x128xf32>
    %348 = arith.negf %347 : vector<8x128xf32>
    %349 = math.exp %348 : vector<8x128xf32>
    %cst_72 = arith.constant 1.000000e+00 : f32
    %350 = vector.broadcast %cst_72 : f32 to vector<8x128xf32>
    %351 = arith.addf %350, %349 : vector<8x128xf32>
    %352 = arith.divf %350, %351 : vector<8x128xf32>
    %353 = vector.extract_strided_slice %335 {offsets = [0, 256], sizes = [8, 128], strides = [1, 1]} : vector<8x384xf32> to vector<8x128xf32>
    %354 = vector.extract_strided_slice %336 {offsets = [0, 256], sizes = [8, 128], strides = [1, 1]} : vector<8x384xf32> to vector<8x128xf32>
    %355 = arith.addf %354, %18 : vector<8x128xf32>
    %356 = arith.mulf %344, %355 : vector<8x128xf32>
    %357 = arith.addf %353, %356 : vector<8x128xf32>
    %358 = math.tanh %357 : vector<8x128xf32>
    %359 = arith.subf %304, %358 : vector<8x128xf32>
    %360 = arith.mulf %352, %359 : vector<8x128xf32>
    %361 = arith.addf %358, %360 : vector<8x128xf32>
    %c6_i32 = arith.constant 6 : i32
    %c8_i32_73 = arith.constant 8 : i32
    %362 = arith.muli %c6_i32, %c8_i32_73 : i32
    %363 = arith.index_cast %362 : i32 to index
    %c0_74 = arith.constant 0 : index
    %364 = vector.load %arg11[%363, %c0_74] : memref<64x384xf32, #tpu.memory_space<vmem>>, vector<8x384xf32>
    %cst_75 = arith.constant dense<0.000000e+00> : vector<8x384xf32>
    %365 = tpu.matmul %333, %7, %cst_75 {dimension_numbers = #tpu.dot_dimension_numbers<[1], [0], [0], [1], [0, 0, 1, 1], [], []>} : vector<8x128xf32>, vector<128x384xf32>, vector<8x384xf32> -> vector<8x384xf32>
    %366 = vector.extract_strided_slice %364 {offsets = [0, 0], sizes = [8, 128], strides = [1, 1]} : vector<8x384xf32> to vector<8x128xf32>
    %367 = vector.extract_strided_slice %365 {offsets = [0, 0], sizes = [8, 128], strides = [1, 1]} : vector<8x384xf32> to vector<8x128xf32>
    %368 = arith.addf %366, %367 : vector<8x128xf32>
    %369 = arith.negf %368 : vector<8x128xf32>
    %370 = math.exp %369 : vector<8x128xf32>
    %cst_76 = arith.constant 1.000000e+00 : f32
    %371 = vector.broadcast %cst_76 : f32 to vector<8x128xf32>
    %372 = arith.addf %371, %370 : vector<8x128xf32>
    %373 = arith.divf %371, %372 : vector<8x128xf32>
    %374 = vector.extract_strided_slice %364 {offsets = [0, 128], sizes = [8, 128], strides = [1, 1]} : vector<8x384xf32> to vector<8x128xf32>
    %375 = vector.extract_strided_slice %365 {offsets = [0, 128], sizes = [8, 128], strides = [1, 1]} : vector<8x384xf32> to vector<8x128xf32>
    %376 = arith.addf %374, %375 : vector<8x128xf32>
    %377 = arith.negf %376 : vector<8x128xf32>
    %378 = math.exp %377 : vector<8x128xf32>
    %cst_77 = arith.constant 1.000000e+00 : f32
    %379 = vector.broadcast %cst_77 : f32 to vector<8x128xf32>
    %380 = arith.addf %379, %378 : vector<8x128xf32>
    %381 = arith.divf %379, %380 : vector<8x128xf32>
    %382 = vector.extract_strided_slice %364 {offsets = [0, 256], sizes = [8, 128], strides = [1, 1]} : vector<8x384xf32> to vector<8x128xf32>
    %383 = vector.extract_strided_slice %365 {offsets = [0, 256], sizes = [8, 128], strides = [1, 1]} : vector<8x384xf32> to vector<8x128xf32>
    %384 = arith.addf %383, %15 : vector<8x128xf32>
    %385 = arith.mulf %373, %384 : vector<8x128xf32>
    %386 = arith.addf %382, %385 : vector<8x128xf32>
    %387 = math.tanh %386 : vector<8x128xf32>
    %388 = arith.subf %333, %387 : vector<8x128xf32>
    %389 = arith.mulf %381, %388 : vector<8x128xf32>
    %390 = arith.addf %387, %389 : vector<8x128xf32>
    %cst_78 = arith.constant dense<0.000000e+00> : vector<8x384xf32>
    %391 = tpu.matmul %390, %8, %cst_78 {dimension_numbers = #tpu.dot_dimension_numbers<[1], [0], [0], [1], [0, 0, 1, 1], [], []>} : vector<8x128xf32>, vector<128x384xf32>, vector<8x384xf32> -> vector<8x384xf32>
    %392 = arith.addf %391, %12 : vector<8x384xf32>
    %cst_79 = arith.constant dense<0.000000e+00> : vector<8x384xf32>
    %393 = tpu.matmul %361, %9, %cst_79 {dimension_numbers = #tpu.dot_dimension_numbers<[1], [0], [0], [1], [0, 0, 1, 1], [], []>} : vector<8x128xf32>, vector<128x384xf32>, vector<8x384xf32> -> vector<8x384xf32>
    %394 = vector.extract_strided_slice %392 {offsets = [0, 0], sizes = [8, 128], strides = [1, 1]} : vector<8x384xf32> to vector<8x128xf32>
    %395 = vector.extract_strided_slice %393 {offsets = [0, 0], sizes = [8, 128], strides = [1, 1]} : vector<8x384xf32> to vector<8x128xf32>
    %396 = arith.addf %394, %395 : vector<8x128xf32>
    %397 = arith.negf %396 : vector<8x128xf32>
    %398 = math.exp %397 : vector<8x128xf32>
    %cst_80 = arith.constant 1.000000e+00 : f32
    %399 = vector.broadcast %cst_80 : f32 to vector<8x128xf32>
    %400 = arith.addf %399, %398 : vector<8x128xf32>
    %401 = arith.divf %399, %400 : vector<8x128xf32>
    %402 = vector.extract_strided_slice %392 {offsets = [0, 128], sizes = [8, 128], strides = [1, 1]} : vector<8x384xf32> to vector<8x128xf32>
    %403 = vector.extract_strided_slice %393 {offsets = [0, 128], sizes = [8, 128], strides = [1, 1]} : vector<8x384xf32> to vector<8x128xf32>
    %404 = arith.addf %402, %403 : vector<8x128xf32>
    %405 = arith.negf %404 : vector<8x128xf32>
    %406 = math.exp %405 : vector<8x128xf32>
    %cst_81 = arith.constant 1.000000e+00 : f32
    %407 = vector.broadcast %cst_81 : f32 to vector<8x128xf32>
    %408 = arith.addf %407, %406 : vector<8x128xf32>
    %409 = arith.divf %407, %408 : vector<8x128xf32>
    %410 = vector.extract_strided_slice %392 {offsets = [0, 256], sizes = [8, 128], strides = [1, 1]} : vector<8x384xf32> to vector<8x128xf32>
    %411 = vector.extract_strided_slice %393 {offsets = [0, 256], sizes = [8, 128], strides = [1, 1]} : vector<8x384xf32> to vector<8x128xf32>
    %412 = arith.addf %411, %18 : vector<8x128xf32>
    %413 = arith.mulf %401, %412 : vector<8x128xf32>
    %414 = arith.addf %410, %413 : vector<8x128xf32>
    %415 = math.tanh %414 : vector<8x128xf32>
    %416 = arith.subf %361, %415 : vector<8x128xf32>
    %417 = arith.mulf %409, %416 : vector<8x128xf32>
    %418 = arith.addf %415, %417 : vector<8x128xf32>
    %c7_i32 = arith.constant 7 : i32
    %c8_i32_82 = arith.constant 8 : i32
    %419 = arith.muli %c7_i32, %c8_i32_82 : i32
    %420 = arith.index_cast %419 : i32 to index
    %c0_83 = arith.constant 0 : index
    %421 = vector.load %arg11[%420, %c0_83] : memref<64x384xf32, #tpu.memory_space<vmem>>, vector<8x384xf32>
    %cst_84 = arith.constant dense<0.000000e+00> : vector<8x384xf32>
    %422 = tpu.matmul %390, %7, %cst_84 {dimension_numbers = #tpu.dot_dimension_numbers<[1], [0], [0], [1], [0, 0, 1, 1], [], []>} : vector<8x128xf32>, vector<128x384xf32>, vector<8x384xf32> -> vector<8x384xf32>
    %423 = vector.extract_strided_slice %421 {offsets = [0, 0], sizes = [8, 128], strides = [1, 1]} : vector<8x384xf32> to vector<8x128xf32>
    %424 = vector.extract_strided_slice %422 {offsets = [0, 0], sizes = [8, 128], strides = [1, 1]} : vector<8x384xf32> to vector<8x128xf32>
    %425 = arith.addf %423, %424 : vector<8x128xf32>
    %426 = arith.negf %425 : vector<8x128xf32>
    %427 = math.exp %426 : vector<8x128xf32>
    %cst_85 = arith.constant 1.000000e+00 : f32
    %428 = vector.broadcast %cst_85 : f32 to vector<8x128xf32>
    %429 = arith.addf %428, %427 : vector<8x128xf32>
    %430 = arith.divf %428, %429 : vector<8x128xf32>
    %431 = vector.extract_strided_slice %421 {offsets = [0, 128], sizes = [8, 128], strides = [1, 1]} : vector<8x384xf32> to vector<8x128xf32>
    %432 = vector.extract_strided_slice %422 {offsets = [0, 128], sizes = [8, 128], strides = [1, 1]} : vector<8x384xf32> to vector<8x128xf32>
    %433 = arith.addf %431, %432 : vector<8x128xf32>
    %434 = arith.negf %433 : vector<8x128xf32>
    %435 = math.exp %434 : vector<8x128xf32>
    %cst_86 = arith.constant 1.000000e+00 : f32
    %436 = vector.broadcast %cst_86 : f32 to vector<8x128xf32>
    %437 = arith.addf %436, %435 : vector<8x128xf32>
    %438 = arith.divf %436, %437 : vector<8x128xf32>
    %439 = vector.extract_strided_slice %421 {offsets = [0, 256], sizes = [8, 128], strides = [1, 1]} : vector<8x384xf32> to vector<8x128xf32>
    %440 = vector.extract_strided_slice %422 {offsets = [0, 256], sizes = [8, 128], strides = [1, 1]} : vector<8x384xf32> to vector<8x128xf32>
    %441 = arith.addf %440, %15 : vector<8x128xf32>
    %442 = arith.mulf %430, %441 : vector<8x128xf32>
    %443 = arith.addf %439, %442 : vector<8x128xf32>
    %444 = math.tanh %443 : vector<8x128xf32>
    %445 = arith.subf %390, %444 : vector<8x128xf32>
    %446 = arith.mulf %438, %445 : vector<8x128xf32>
    %447 = arith.addf %444, %446 : vector<8x128xf32>
    %cst_87 = arith.constant dense<0.000000e+00> : vector<8x384xf32>
    %448 = tpu.matmul %447, %8, %cst_87 {dimension_numbers = #tpu.dot_dimension_numbers<[1], [0], [0], [1], [0, 0, 1, 1], [], []>} : vector<8x128xf32>, vector<128x384xf32>, vector<8x384xf32> -> vector<8x384xf32>
    %449 = arith.addf %448, %12 : vector<8x384xf32>
    %cst_88 = arith.constant dense<0.000000e+00> : vector<8x384xf32>
    %450 = tpu.matmul %418, %9, %cst_88 {dimension_numbers = #tpu.dot_dimension_numbers<[1], [0], [0], [1], [0, 0, 1, 1], [], []>} : vector<8x128xf32>, vector<128x384xf32>, vector<8x384xf32> -> vector<8x384xf32>
    %451 = vector.extract_strided_slice %449 {offsets = [0, 0], sizes = [8, 128], strides = [1, 1]} : vector<8x384xf32> to vector<8x128xf32>
    %452 = vector.extract_strided_slice %450 {offsets = [0, 0], sizes = [8, 128], strides = [1, 1]} : vector<8x384xf32> to vector<8x128xf32>
    %453 = arith.addf %451, %452 : vector<8x128xf32>
    %454 = arith.negf %453 : vector<8x128xf32>
    %455 = math.exp %454 : vector<8x128xf32>
    %cst_89 = arith.constant 1.000000e+00 : f32
    %456 = vector.broadcast %cst_89 : f32 to vector<8x128xf32>
    %457 = arith.addf %456, %455 : vector<8x128xf32>
    %458 = arith.divf %456, %457 : vector<8x128xf32>
    %459 = vector.extract_strided_slice %449 {offsets = [0, 128], sizes = [8, 128], strides = [1, 1]} : vector<8x384xf32> to vector<8x128xf32>
    %460 = vector.extract_strided_slice %450 {offsets = [0, 128], sizes = [8, 128], strides = [1, 1]} : vector<8x384xf32> to vector<8x128xf32>
    %461 = arith.addf %459, %460 : vector<8x128xf32>
    %462 = arith.negf %461 : vector<8x128xf32>
    %463 = math.exp %462 : vector<8x128xf32>
    %cst_90 = arith.constant 1.000000e+00 : f32
    %464 = vector.broadcast %cst_90 : f32 to vector<8x128xf32>
    %465 = arith.addf %464, %463 : vector<8x128xf32>
    %466 = arith.divf %464, %465 : vector<8x128xf32>
    %467 = vector.extract_strided_slice %449 {offsets = [0, 256], sizes = [8, 128], strides = [1, 1]} : vector<8x384xf32> to vector<8x128xf32>
    %468 = vector.extract_strided_slice %450 {offsets = [0, 256], sizes = [8, 128], strides = [1, 1]} : vector<8x384xf32> to vector<8x128xf32>
    %469 = arith.addf %468, %18 : vector<8x128xf32>
    %470 = arith.mulf %458, %469 : vector<8x128xf32>
    %471 = arith.addf %467, %470 : vector<8x128xf32>
    %472 = math.tanh %471 : vector<8x128xf32>
    %473 = arith.subf %418, %472 : vector<8x128xf32>
    %474 = arith.mulf %466, %473 : vector<8x128xf32>
    %475 = arith.addf %472, %474 : vector<8x128xf32>
    %c8_i32_91 = arith.constant 8 : i32
    %c0_92 = arith.constant 0 : index
    %c0_93 = arith.constant 0 : index
    %476 = vector.load %arg9[%c0_92, %c0_93] : memref<8x128xf32, #tpu.memory_space<vmem>>, vector<8x128xf32>
    tpu.vector_store %arg9[%c0_92, %c0_93], %447 {strides = array<i32>} : memref<8x128xf32, #tpu.memory_space<vmem>>, vector<8x128xf32>,
    %c0_94 = arith.constant 0 : index
    %c0_95 = arith.constant 0 : index
    %477 = vector.load %arg10[%c0_94, %c0_95] : memref<8x128xf32, #tpu.memory_space<vmem>>, vector<8x128xf32>
    tpu.vector_store %arg10[%c0_94, %c0_95], %475 {strides = array<i32>} : memref<8x128xf32, #tpu.memory_space<vmem>>, vector<8x128xf32>,
    return
  }
}

</mosaic_0001>

<llo_original>
// kernel: tpu_custom_call.1
$region0: #{tpu_custom_call.1}
  #allocation0 [shape = 'u32[]', space=smem, size = 0x4, offset = 0x4, fixed_abs, tag = 'smem constant byte address 0x4 - core index']
  #allocation1 [shape = 'u32[144,128]{1,0:T(1,128)}', space=vmem, size = 0x12000, scoped, tag = 'internal scratch']
  #allocation2 [shape = 'f32[64,384]{1,0:T(8,128)}', space=vmem, size = 0x18000, scoped, tag = 'scratch operand']
  %s0 = inlined_call_operand.hbm [shape: f32[64,128], index: 0, kind: input, shape index: {}]
  %s1 = inlined_call_operand.hbm [shape: f32[128,384], index: 1, kind: input, shape index: {}]
  %s2 = inlined_call_operand.hbm [shape: f32[128,384], index: 2, kind: input, shape index: {}]
  %s3 = inlined_call_operand.vmem [shape: f32[1,384], index: 3, kind: input, shape index: {}]
  %s4 = inlined_call_operand.vmem [shape: f32[1,128], index: 4, kind: input, shape index: {}]
  %s5 = inlined_call_operand.hbm [shape: f32[128,384], index: 5, kind: input, shape index: {}]
  %s6 = inlined_call_operand.hbm [shape: f32[128,384], index: 6, kind: input, shape index: {}]
  %s7 = inlined_call_operand.vmem [shape: f32[1,384], index: 7, kind: input, shape index: {}]
  %s8 = inlined_call_operand.vmem [shape: f32[1,128], index: 8, kind: input, shape index: {}]
  %s9 = inlined_call_operand.hbm [shape: f32[8,128], index: 9, kind: output, shape index: {0}]
  %s10 = inlined_call_operand.hbm [shape: f32[8,128], index: 10, kind: output, shape index: {1}]
  %11 = xla_tuple %s9, %s10
  %s12 = sld [smem:[#allocation0]]
  $region74: #{tpu_custom_call.1} parent=0
    _
  %s14 = ssub.s32 1, %s12
  %s15 = scalar_select 0, %s14, %s12
  $region1: #{tpu_custom_call.1} parent=0
    #allocation3 [shape = 'u8[32768]{0}', space=vmem, size = 0x8000, scoped, tag = 'input window, operand 0, single buffered']
    #allocation4 [shape = 's32[1]{0}', space=sflag, size = 0x4, scoped, tag = 'scoped memory for tpu_custom_call.1']
    #allocation5 [shape = 's32[1]{0}', space=sflag, size = 0x4, scoped, tag = 'scoped memory for tpu_custom_call.1']
    #allocation6 [shape = 'u8[196608]{0}', space=vmem, size = 0x30000, scoped, tag = 'input window, operand 1, single buffered']
    #allocation7 [shape = 's32[1]{0}', space=sflag, size = 0x4, scoped, tag = 'scoped memory for tpu_custom_call.1']
    #allocation8 [shape = 'u8[196608]{0}', space=vmem, size = 0x30000, scoped, tag = 'input window, operand 2, single buffered']
    #allocation9 [shape = 'u8[196608]{0}', space=vmem, size = 0x30000, scoped, tag = 'input window, operand 5, single buffered']
    #allocation10 [shape = 's32[1]{0}', space=sflag, size = 0x4, scoped, tag = 'scoped memory for tpu_custom_call.1']
    #allocation11 [shape = 'u8[196608]{0}', space=vmem, size = 0x30000, scoped, tag = 'input window, operand 6, single buffered']
    #allocation12 [shape = 'u8[4096]{0}', space=vmem, size = 0x1000, scoped, tag = 'output window, operand 0, single buffered']
    #allocation13 [shape = 'u8[4096]{0}', space=vmem, size = 0x1000, scoped, tag = 'output window, operand 1, single buffered']
    #allocation14 [shape = 's32[1]{0}', space=sflag, size = 0x4, scoped, tag = 'scoped memory for tpu_custom_call.1']
    %16 = vsyncpa [#allocation4], 0
    %17 = vsyncpa [#allocation7], 0
    %18 = vsyncpa [#allocation10], 0
    %19 = vsyncpa [#allocation5], 0
    %20 = vsyncpa [#allocation14], 0
    // Predicated region
    $region2: #{tpu_custom_call.1} parent=1 // pred_check
      _
    $region3: #{tpu_custom_call.1} parent=1 // pred_check_branch
      %22 = sbr.rel (0) target = $region5
    $region4: #{tpu_custom_call.1} parent=1 // pred_region
      %s24 = ssub.s32 1024, 1024
      %25 = vsyncadd [#allocation4], %s24
      %s26 = sshll.u32 [#allocation3], 4
      %s27 = int_to_ptr.vmem [resolvable:$true] %s26
      %32 = dma.hbm_to_vmem [thread:$0]  %s0, 1024, %s27, [#allocation4], 128, 128, 8
    $region5: #{tpu_custom_call.1} parent=1 // pred_fallthru
      _
    // Predicated region
    $region6: #{tpu_custom_call.1} parent=1 // pred_check
      _
    $region7: #{tpu_custom_call.1} parent=1 // pred_check_branch
      %34 = sbr.rel (0) target = $region9
    $region8: #{tpu_custom_call.1} parent=1 // pred_region
      %s36 = ssub.s32 6144, 6144
      %37 = vsyncadd [#allocation7], %s36
      %s38 = sshll.u32 [#allocation6], 4
      %s39 = int_to_ptr.vmem [resolvable:$true] %s38
      %44 = dma.hbm_to_vmem [thread:$0]  %s1, 6144, %s39, [#allocation7], 384, 384, 24
    $region9: #{tpu_custom_call.1} parent=1 // pred_fallthru
      _
    // Predicated region
    $region10: #{tpu_custom_call.1} parent=1 // pred_check
      _
    $region11: #{tpu_custom_call.1} parent=1 // pred_check_branch
      %46 = sbr.rel (0) target = $region13
    $region12: #{tpu_custom_call.1} parent=1 // pred_region
      %s48 = ssub.s32 6144, 6144
      %49 = vsyncadd [#allocation7], %s48
      %s50 = sshll.u32 [#allocation8], 4
      %s51 = int_to_ptr.vmem [resolvable:$true] %s50
      %56 = dma.hbm_to_vmem [thread:$0]  %s2, 6144, %s51, [#allocation7], 384, 384, 24
    $region13: #{tpu_custom_call.1} parent=1 // pred_fallthru
      _
    // Predicated region
    $region14: #{tpu_custom_call.1} parent=1 // pred_check
      _
    $region15: #{tpu_custom_call.1} parent=1 // pred_check_branch
      %58 = sbr.rel (0) target = $region17
    $region16: #{tpu_custom_call.1} parent=1 // pred_region
      _
    $region17: #{tpu_custom_call.1} parent=1 // pred_fallthru
      _
    // Predicated region
    $region18: #{tpu_custom_call.1} parent=1 // pred_check
      _
    $region19: #{tpu_custom_call.1} parent=1 // pred_check_branch
      %60 = sbr.rel (0) target = $region21
    $region20: #{tpu_custom_call.1} parent=1 // pred_region
      _
    $region21: #{tpu_custom_call.1} parent=1 // pred_fallthru
      _
    // Predicated region
    $region22: #{tpu_custom_call.1} parent=1 // pred_check
      _
    $region23: #{tpu_custom_call.1} parent=1 // pred_check_branch
      %62 = sbr.rel (0) target = $region25
    $region24: #{tpu_custom_call.1} parent=1 // pred_region
      %s64 = ssub.s32 6144, 6144
      %65 = vsyncadd [#allocation10], %s64
      %s66 = sshll.u32 [#allocation9], 4
      %s67 = int_to_ptr.vmem [resolvable:$true] %s66
      %72 = dma.hbm_to_vmem [thread:$0]  %s5, 6144, %s67, [#allocation10], 384, 384, 24
    $region25: #{tpu_custom_call.1} parent=1 // pred_fallthru
      _
    // Predicated region
    $region26: #{tpu_custom_call.1} parent=1 // pred_check
      _
    $region27: #{tpu_custom_call.1} parent=1 // pred_check_branch
      %74 = sbr.rel (0) target = $region29
    $region28: #{tpu_custom_call.1} parent=1 // pred_region
      %s76 = ssub.s32 6144, 6144
      %77 = vsyncadd [#allocation10], %s76
      %s78 = sshll.u32 [#allocation11], 4
      %s79 = int_to_ptr.vmem [resolvable:$true] %s78
      %84 = dma.hbm_to_vmem [thread:$0]  %s6, 6144, %s79, [#allocation10], 384, 384, 24
    $region29: #{tpu_custom_call.1} parent=1 // pred_fallthru
      _
    // Predicated region
    $region30: #{tpu_custom_call.1} parent=1 // pred_check
      _
    $region31: #{tpu_custom_call.1} parent=1 // pred_check_branch
      %86 = sbr.rel (0) target = $region33
    $region32: #{tpu_custom_call.1} parent=1 // pred_region
      _
    $region33: #{tpu_custom_call.1} parent=1 // pred_fallthru
      _
    // Predicated region
    $region34: #{tpu_custom_call.1} parent=1 // pred_check
      _
    $region35: #{tpu_custom_call.1} parent=1 // pred_check_branch
      %88 = sbr.rel (0) target = $region37
    $region36: #{tpu_custom_call.1} parent=1 // pred_region
      _
    $region37: #{tpu_custom_call.1} parent=1 // pred_fallthru
      _
    // Predicated region
    $region38: #{tpu_custom_call.1} parent=1 // pred_check
      _
    $region39: #{tpu_custom_call.1} parent=1 // pred_check_branch
      %90 = sbr.rel (0) target = $region41
    $region40: #{tpu_custom_call.1} parent=1 // pred_region
      %91 = dma.done [#allocation4], 1024
    $region41: #{tpu_custom_call.1} parent=1 // pred_fallthru
      _
    // Predicated region
    $region42: #{tpu_custom_call.1} parent=1 // pred_check
      _
    $region43: #{tpu_custom_call.1} parent=1 // pred_check_branch
      %93 = sbr.rel (0) target = $region45
    $region44: #{tpu_custom_call.1} parent=1 // pred_region
      %94 = dma.done [#allocation7], 6144
    $region45: #{tpu_custom_call.1} parent=1 // pred_fallthru
      _
    // Predicated region
    $region46: #{tpu_custom_call.1} parent=1 // pred_check
      _
    $region47: #{tpu_custom_call.1} parent=1 // pred_check_branch
      %96 = sbr.rel (0) target = $region49
    $region48: #{tpu_custom_call.1} parent=1 // pred_region
      %97 = dma.done [#allocation7], 6144
    $region49: #{tpu_custom_call.1} parent=1 // pred_fallthru
      _
    // Predicated region
    $region50: #{tpu_custom_call.1} parent=1 // pred_check
      _
    $region51: #{tpu_custom_call.1} parent=1 // pred_check_branch
      %99 = sbr.rel (0) target = $region53
    $region52: #{tpu_custom_call.1} parent=1 // pred_region
      %100 = dma.done [#allocation10], 6144
    $region53: #{tpu_custom_call.1} parent=1 // pred_fallthru
      _
    // Predicated region
    $region54: #{tpu_custom_call.1} parent=1 // pred_check
      _
    $region55: #{tpu_custom_call.1} parent=1 // pred_check_branch
      %102 = sbr.rel (0) target = $region57
    $region56: #{tpu_custom_call.1} parent=1 // pred_region
      %103 = dma.done [#allocation10], 6144
    $region57: #{tpu_custom_call.1} parent=1 // pred_fallthru
      _
    %v104 = vld [vmem:[#allocation3] sm:$0xff]
    %v105 = vld [vmem:[#allocation3 + $0x8] sm:$0xff]
    %v106 = vld [vmem:[#allocation3 + $0x10] sm:$0xff]
    %v107 = vld [vmem:[#allocation3 + $0x18] sm:$0xff]
    %v108 = vld [vmem:[#allocation3 + $0x20] sm:$0xff]
    %v109 = vld [vmem:[#allocation3 + $0x28] sm:$0xff]
    %v110 = vld [vmem:[#allocation3 + $0x30] sm:$0xff]
    %v111 = vld [vmem:[#allocation3 + $0x38] sm:$0xff]
    %v112 = vld [vmem:[#allocation6] sm:$0xff]
    %v113 = vld [vmem:[#allocation6 + $0x8] sm:$0xff]
    %v114 = vld [vmem:[#allocation6 + $0x10] sm:$0xff]
    %v115 = vld [vmem:[#allocation6 + $0x18] sm:$0xff]
    %v116 = vld [vmem:[#allocation6 + $0x20] sm:$0xff]
    %v117 = vld [vmem:[#allocation6 + $0x28] sm:$0xff]
    %v118 = vld [vmem:[#allocation6 + $0x30] sm:$0xff]
    %v119 = vld [vmem:[#allocation6 + $0x38] sm:$0xff]
    %v120 = vld [vmem:[#allocation6 + $0x40] sm:$0xff]
    %v121 = vld [vmem:[#allocation6 + $0x48] sm:$0xff]
    %v122 = vld [vmem:[#allocation6 + $0x50] sm:$0xff]
    %v123 = vld [vmem:[#allocation6 + $0x58] sm:$0xff]
    %v124 = vld [vmem:[#allocation6 + $0x60] sm:$0xff]
    %v125 = vld [vmem:[#allocation6 + $0x68] sm:$0xff]
    %v126 = vld [vmem:[#allocation6 + $0x70] sm:$0xff]
    %v127 = vld [vmem:[#allocation6 + $0x78] sm:$0xff]
    %v128 = vld [vmem:[#allocation6 + $0x80] sm:$0xff]
    %v129 = vld [vmem:[#allocation6 + $0x88] sm:$0xff]
    %v130 = vld [vmem:[#allocation6 + $0x90] sm:$0xff]
    %v131 = vld [vmem:[#allocation6 + $0x98] sm:$0xff]
    %v132 = vld [vmem:[#allocation6 + $0xa0] sm:$0xff]
    %v133 = vld [vmem:[#allocation6 + $0xa8] sm:$0xff]
    %v134 = vld [vmem:[#allocation6 + $0xb0] sm:$0xff]
    %v135 = vld [vmem:[#allocation6 + $0xb8] sm:$0xff]
    %v136 = vld [vmem:[#allocation6 + $0xc0] sm:$0xff]
    %v137 = vld [vmem:[#allocation6 + $0xc8] sm:$0xff]
    %v138 = vld [vmem:[#allocation6 + $0xd0] sm:$0xff]
    %v139 = vld [vmem:[#allocation6 + $0xd8] sm:$0xff]
    %v140 = vld [vmem:[#allocation6 + $0xe0] sm:$0xff]
    %v141 = vld [vmem:[#allocation6 + $0xe8] sm:$0xff]
    %v142 = vld [vmem:[#allocation6 + $0xf0] sm:$0xff]
    %v143 = vld [vmem:[#allocation6 + $0xf8] sm:$0xff]
    %v144 = vld [vmem:[#allocation6 + $0x100] sm:$0xff]
    %v145 = vld [vmem:[#allocation6 + $0x108] sm:$0xff]
    %v146 = vld [vmem:[#allocation6 + $0x110] sm:$0xff]
    %v147 = vld [vmem:[#allocation6 + $0x118] sm:$0xff]
    %v148 = vld [vmem:[#allocation6 + $0x120] sm:$0xff]
    %v149 = vld [vmem:[#allocation6 + $0x128] sm:$0xff]
    %v150 = vld [vmem:[#allocation6 + $0x130] sm:$0xff]
    %v151 = vld [vmem:[#allocation6 + $0x138] sm:$0xff]
    %v152 = vld [vmem:[#allocation6 + $0x140] sm:$0xff]
    %v153 = vld [vmem:[#allocation6 + $0x148] sm:$0xff]
    %v154 = vld [vmem:[#allocation6 + $0x150] sm:$0xff]
    %v155 = vld [vmem:[#allocation6 + $0x158] sm:$0xff]
    %v156 = vld [vmem:[#allocation6 + $0x160] sm:$0xff]
    %v157 = vld [vmem:[#allocation6 + $0x168] sm:$0xff]
    %v158 = vld [vmem:[#allocation6 + $0x170] sm:$0xff]
    %v159 = vld [vmem:[#allocation6 + $0x178] sm:$0xff]
    %v160 = vld [vmem:[%s3] sm:$0x7]
    %v162 = vlaneseq
    %v163 = vshrl.u32 %v162, 7
    %v164 = vsub.s32 0, %v163
    %v165 = vrot.slane %v160, %v164
    %v166 = vlaneseq
    %v167 = vshrl.u32 %v166, 7
    %v168 = vsub.s32 1, %v167
    %v169 = vrot.slane %v160, %v168
    %v170 = vlaneseq
    %v171 = vshrl.u32 %v170, 7
    %v172 = vsub.s32 2, %v171
    %v173 = vrot.slane %v160, %v172
    %177 = vmatprep.subr.mxu0 %v113
    %178 = vmatpush1.msra.mxu0 %v112
    %179 = vmatprep.subr.mxu0 %v116
    %180 = vmatpush1.msra.mxu0 %v115
    %181 = vmatprep.subr.mxu0 %v119
    %182 = vmatpush1.msra.mxu0 %v118
    %183 = vmatprep.subr.mxu0 %v122
    %184 = vmatpush1.msra.mxu0 %v121
    %185 = vmatprep.subr.mxu0 %v125
    %186 = vmatpush1.msra.mxu0 %v124
    %187 = vmatprep.subr.mxu0 %v128
    %188 = vmatpush1.msra.mxu0 %v127
    %189 = vmatprep.subr.mxu0 %v131
    %190 = vmatpush1.msra.mxu0 %v130
    %191 = vmatprep.subr.mxu0 %v134
    %192 = vmatpush1.msra.mxu0 %v133
    %193 = vmatprep.subr.mxu0 %v137
    %194 = vmatpush1.msra.mxu0 %v136
    %195 = vmatprep.subr.mxu0 %v140
    %196 = vmatpush1.msra.mxu0 %v139
    %197 = vmatprep.subr.mxu0 %v143
    %198 = vmatpush1.msra.mxu0 %v142
    %199 = vmatprep.subr.mxu0 %v146
    %200 = vmatpush1.msra.mxu0 %v145
    %201 = vmatprep.subr.mxu0 %v149
    %202 = vmatpush1.msra.mxu0 %v148
    %203 = vmatprep.subr.mxu0 %v152
    %204 = vmatpush1.msra.mxu0 %v151
    %205 = vmatprep.subr.mxu0 %v155
    %206 = vmatpush1.msra.mxu0 %v154
    %207 = vmatprep.subr.mxu0 %v158
    %208 = vmatpush1.msra.mxu0 %v157
    %209 = vmatprep.subr.mxu0 0.0
    %210 = vmatpush1.msra.mxu0 0.0
    %211 = vmatprep.subr.mxu0 0.0
    %212 = vmatpush1.msra.mxu0 0.0
    %213 = vmatprep.subr.mxu0 0.0
    %214 = vmatpush1.msra.mxu0 0.0
    %215 = vmatprep.subr.mxu0 0.0
    %216 = vmatpush1.msra.mxu0 0.0
    %217 = vmatprep.subr.mxu0 0.0
    %218 = vmatpush1.msra.mxu0 0.0
    %219 = vmatprep.subr.mxu0 0.0
    %220 = vmatpush1.msra.mxu0 0.0
    %221 = vmatprep.subr.mxu0 0.0
    %222 = vmatpush1.msra.mxu0 0.0
    %223 = vmatprep.subr.mxu0 0.0
    %224 = vmatpush1.msra.mxu0 0.0
    %225 = vmatprep.subr.mxu0 0.0
    %226 = vmatpush1.msra.mxu0 0.0
    %227 = vmatprep.subr.mxu0 0.0
    %228 = vmatpush1.msra.mxu0 0.0
    %229 = vmatprep.subr.mxu0 0.0
    %230 = vmatpush1.msra.mxu0 0.0
    %231 = vmatprep.subr.mxu0 0.0
    %232 = vmatpush1.msra.mxu0 0.0
    %233 = vmatprep.subr.mxu0 0.0
    %234 = vmatpush1.msra.mxu0 0.0
    %235 = vmatprep.subr.mxu0 0.0
    %236 = vmatpush1.msra.mxu0 0.0
    %237 = vmatprep.subr.mxu0 0.0
    %238 = vmatpush1.msra.mxu0 0.0
    %239 = vmatprep.subr.mxu0 0.0
    %240 = vmatpush1.msra.mxu0 0.0
    %241 = vmatprep.mubr.f32.mxu0 0.0
    %242 = vmatmul.mubr.f32.gmra.mrb[0].mxu0 %v104
    %v243 = vpop.f32.mrb[0].mxu0
    %v244 = vadd.f32 %v165, %v243
    %v245 = vpop.f32.mrb[0].mxu0
    %v246 = vadd.f32 %v169, %v245
    %247 = vmatprep.mubr.f32.mxu0 0.0
    %248 = vmatmul.mubr.f32.gmra.mrb[0].mxu0 %v105
    %v249 = vpop.f32.mrb[0].mxu0
    %v250 = vadd.f32 %v165, %v249
    %v251 = vpop.f32.mrb[0].mxu0
    %v252 = vadd.f32 %v169, %v251
    %253 = vmatprep.mubr.f32.mxu0 0.0
    %254 = vmatmul.mubr.f32.gmra.mrb[0].mxu0 %v106
    %v255 = vpop.f32.mrb[0].mxu0
    %v256 = vadd.f32 %v165, %v255
    %v257 = vpop.f32.mrb[0].mxu0
    %v258 = vadd.f32 %v169, %v257
    %259 = vmatprep.mubr.f32.mxu0 0.0
    %260 = vmatmul.mubr.f32.gmra.mrb[0].mxu0 %v107
    %v261 = vpop.f32.mrb[0].mxu0
    %v262 = vadd.f32 %v165, %v261
    %v263 = vpop.f32.mrb[0].mxu0
    %v264 = vadd.f32 %v169, %v263
    %265 = vmatprep.mubr.f32.mxu0 0.0
    %266 = vmatmul.mubr.f32.gmra.mrb[0].mxu0 %v108
    %v267 = vpop.f32.mrb[0].mxu0
    %v268 = vadd.f32 %v165, %v267
    %v269 = vpop.f32.mrb[0].mxu0
    %v270 = vadd.f32 %v169, %v269
    %271 = vmatprep.mubr.f32.mxu0 0.0
    %272 = vmatmul.mubr.f32.gmra.mrb[0].mxu0 %v109
    %v273 = vpop.f32.mrb[0].mxu0
    %v274 = vadd.f32 %v165, %v273
    %v275 = vpop.f32.mrb[0].mxu0
    %v276 = vadd.f32 %v169, %v275
    %277 = vmatprep.mubr.f32.mxu0 0.0
    %278 = vmatmul.mubr.f32.gmra.mrb[0].mxu0 %v110
    %v279 = vpop.f32.mrb[0].mxu0
    %v280 = vadd.f32 %v165, %v279
    %v281 = vpop.f32.mrb[0].mxu0
    %v282 = vadd.f32 %v169, %v281
    %283 = vmatprep.mubr.f32.mxu0 0.0
    %284 = vmatmul.mubr.f32.gmra.mrb[0].mxu0 %v111
    %v285 = vpop.f32.mrb[0].mxu0
    %v286 = vadd.f32 %v165, %v285
    %v287 = vpop.f32.mrb[0].mxu0
    %v288 = vadd.f32 %v169, %v287
    %289 = vdwg.mxu0
    %290 = vmatprep.subr.mxu0 0.0
    %291 = vmatpush1.msra.mxu0 %v114
    %292 = vmatprep.subr.mxu0 0.0
    %293 = vmatpush1.msra.mxu0 %v117
    %294 = vmatprep.subr.mxu0 0.0
    %295 = vmatpush1.msra.mxu0 %v120
    %296 = vmatprep.subr.mxu0 0.0
    %297 = vmatpush1.msra.mxu0 %v123
    %298 = vmatprep.subr.mxu0 0.0
    %299 = vmatpush1.msra.mxu0 %v126
    %300 = vmatprep.subr.mxu0 0.0
    %301 = vmatpush1.msra.mxu0 %v129
    %302 = vmatprep.subr.mxu0 0.0
    %303 = vmatpush1.msra.mxu0 %v132
    %304 = vmatprep.subr.mxu0 0.0
    %305 = vmatpush1.msra.mxu0 %v135
    %306 = vmatprep.subr.mxu0 0.0
    %307 = vmatpush1.msra.mxu0 %v138
    %308 = vmatprep.subr.mxu0 0.0
    %309 = vmatpush1.msra.mxu0 %v141
    %310 = vmatprep.subr.mxu0 0.0
    %311 = vmatpush1.msra.mxu0 %v144
    %312 = vmatprep.subr.mxu0 0.0
    %313 = vmatpush1.msra.mxu0 %v147
    %314 = vmatprep.subr.mxu0 0.0
    %315 = vmatpush1.msra.mxu0 %v150
    %316 = vmatprep.subr.mxu0 0.0
    %317 = vmatpush1.msra.mxu0 %v153
    %318 = vmatprep.subr.mxu0 0.0
    %319 = vmatpush1.msra.mxu0 %v156
    %320 = vmatprep.subr.mxu0 0.0
    %321 = vmatpush1.msra.mxu0 %v159
    %322 = vmatprep.subr.mxu0 0.0
    %323 = vmatpush1.msra.mxu0 0.0
    %324 = vmatprep.subr.mxu0 0.0
    %325 = vmatpush1.msra.mxu0 0.0
    %326 = vmatprep.subr.mxu0 0.0
    %327 = vmatpush1.msra.mxu0 0.0
    %328 = vmatprep.subr.mxu0 0.0
    %329 = vmatpush1.msra.mxu0 0.0
    %330 = vmatprep.subr.mxu0 0.0
    %331 = vmatpush1.msra.mxu0 0.0
    %332 = vmatprep.subr.mxu0 0.0
    %333 = vmatpush1.msra.mxu0 0.0
    %334 = vmatprep.subr.mxu0 0.0
    %335 = vmatpush1.msra.mxu0 0.0
    %336 = vmatprep.subr.mxu0 0.0
    %337 = vmatpush1.msra.mxu0 0.0
    %338 = vmatprep.subr.mxu0 0.0
    %339 = vmatpush1.msra.mxu0 0.0
    %340 = vmatprep.subr.mxu0 0.0
    %341 = vmatpush1.msra.mxu0 0.0
    %342 = vmatprep.subr.mxu0 0.0
    %343 = vmatpush1.msra.mxu0 0.0
    %344 = vmatprep.subr.mxu0 0.0
    %345 = vmatpush1.msra.mxu0 0.0
    %346 = vmatprep.subr.mxu0 0.0
    %347 = vmatpush1.msra.mxu0 0.0
    %348 = vmatprep.subr.mxu0 0.0
    %349 = vmatpush1.msra.mxu0 0.0
    %350 = vmatprep.subr.mxu0 0.0
    %351 = vmatpush1.msra.mxu0 0.0
    %352 = vmatprep.subr.mxu0 0.0
    %353 = vmatpush1.msra.mxu0 0.0
    %354 = vmatprep.mubr.f32.mxu0 0.0
    %355 = vmatmul.mubr.f32.gmra.mrb[0].mxu0 %v104
    %v356 = vpop.f32.mrb[0].mxu0
    %v357 = vadd.f32 %v173, %v356
    %v358 = vpop.f32.mrb[0].mxu0
    %359 = vmatprep.mubr.f32.mxu0 0.0
    %360 = vmatmul.mubr.f32.gmra.mrb[0].mxu0 %v105
    %v361 = vpop.f32.mrb[0].mxu0
    %v362 = vadd.f32 %v173, %v361
    %v363 = vpop.f32.mrb[0].mxu0
    %364 = vmatprep.mubr.f32.mxu0 0.0
    %365 = vmatmul.mubr.f32.gmra.mrb[0].mxu0 %v106
    %v366 = vpop.f32.mrb[0].mxu0
    %v367 = vadd.f32 %v173, %v366
    %v368 = vpop.f32.mrb[0].mxu0
    %369 = vmatprep.mubr.f32.mxu0 0.0
    %370 = vmatmul.mubr.f32.gmra.mrb[0].mxu0 %v107
    %v371 = vpop.f32.mrb[0].mxu0
    %v372 = vadd.f32 %v173, %v371
    %v373 = vpop.f32.mrb[0].mxu0
    %374 = vmatprep.mubr.f32.mxu0 0.0
    %375 = vmatmul.mubr.f32.gmra.mrb[0].mxu0 %v108
    %v376 = vpop.f32.mrb[0].mxu0
    %v377 = vadd.f32 %v173, %v376
    %v378 = vpop.f32.mrb[0].mxu0
    %379 = vmatprep.mubr.f32.mxu0 0.0
    %380 = vmatmul.mubr.f32.gmra.mrb[0].mxu0 %v109
    %v381 = vpop.f32.mrb[0].mxu0
    %v382 = vadd.f32 %v173, %v381
    %v383 = vpop.f32.mrb[0].mxu0
    %384 = vmatprep.mubr.f32.mxu0 0.0
    %385 = vmatmul.mubr.f32.gmra.mrb[0].mxu0 %v110
    %v386 = vpop.f32.mrb[0].mxu0
    %v387 = vadd.f32 %v173, %v386
    %v388 = vpop.f32.mrb[0].mxu0
    %389 = vmatprep.mubr.f32.mxu0 0.0
    %390 = vmatmul.mubr.f32.gmra.mrb[0].mxu0 %v111
    %v391 = vpop.f32.mrb[0].mxu0
    %v392 = vadd.f32 %v173, %v391
    %v393 = vpop.f32.mrb[0].mxu0
    %394 = vdwg.mxu0
    %395 = vst [vmem:[#allocation2] sm:$0xff] %v244
    %396 = vst [vmem:[#allocation2 + $0x8] sm:$0xff] %v246
    %397 = vst [vmem:[#allocation2 + $0x10] sm:$0xff] %v357
    %398 = vst [vmem:[#allocation2 + $0x18] sm:$0xff] %v250
    %399 = vst [vmem:[#allocation2 + $0x20] sm:$0xff] %v252
    %400 = vst [vmem:[#allocation2 + $0x28] sm:$0xff] %v362
    %401 = vst [vmem:[#allocation2 + $0x30] sm:$0xff] %v256
    %402 = vst [vmem:[#allocation2 + $0x38] sm:$0xff] %v258
    %403 = vst [vmem:[#allocation2 + $0x40] sm:$0xff] %v367
    %404 = vst [vmem:[#allocation2 + $0x48] sm:$0xff] %v262
    %405 = vst [vmem:[#allocation2 + $0x50] sm:$0xff] %v264
    %406 = vst [vmem:[#allocation2 + $0x58] sm:$0xff] %v372
    %407 = vst [vmem:[#allocation2 + $0x60] sm:$0xff] %v268
    %408 = vst [vmem:[#allocation2 + $0x68] sm:$0xff] %v270
    %409 = vst [vmem:[#allocation2 + $0x70] sm:$0xff] %v377
    %410 = vst [vmem:[#allocation2 + $0x78] sm:$0xff] %v274
    %411 = vst [vmem:[#allocation2 + $0x80] sm:$0xff] %v276
    %412 = vst [vmem:[#allocation2 + $0x88] sm:$0xff] %v382
    %413 = vst [vmem:[#allocation2 + $0x90] sm:$0xff] %v280
    %414 = vst [vmem:[#allocation2 + $0x98] sm:$0xff] %v282
    %415 = vst [vmem:[#allocation2 + $0xa0] sm:$0xff] %v387
    %416 = vst [vmem:[#allocation2 + $0xa8] sm:$0xff] %v286
    %417 = vst [vmem:[#allocation2 + $0xb0] sm:$0xff] %v288
    %418 = vst [vmem:[#allocation2 + $0xb8] sm:$0xff] %v392
    %v419 = vld [vmem:[#allocation8] sm:$0xff]
    %v420 = vld [vmem:[#allocation8 + $0x8] sm:$0xff]
    %v421 = vld [vmem:[#allocation8 + $0x10] sm:$0xff]
    %v422 = vld [vmem:[#allocation8 + $0x18] sm:$0xff]
    %v423 = vld [vmem:[#allocation8 + $0x20] sm:$0xff]
    %v424 = vld [vmem:[#allocation8 + $0x28] sm:$0xff]
    %v425 = vld [vmem:[#allocation8 + $0x30] sm:$0xff]
    %v426 = vld [vmem:[#allocation8 + $0x38] sm:$0xff]
    %v427 = vld [vmem:[#allocation8 + $0x40] sm:$0xff]
    %v428 = vld [vmem:[#allocation8 + $0x48] sm:$0xff]
    %v429 = vld [vmem:[#allocation8 + $0x50] sm:$0xff]
    %v430 = vld [vmem:[#allocation8 + $0x58] sm:$0xff]
    %v431 = vld [vmem:[#allocation8 + $0x60] sm:$0xff]
    %v432 = vld [vmem:[#allocation8 + $0x68] sm:$0xff]
    %v433 = vld [vmem:[#allocation8 + $0x70] sm:$0xff]
    %v434 = vld [vmem:[#allocation8 + $0x78] sm:$0xff]
    %v435 = vld [vmem:[#allocation8 + $0x80] sm:$0xff]
    %v436 = vld [vmem:[#allocation8 + $0x88] sm:$0xff]
    %v437 = vld [vmem:[#allocation8 + $0x90] sm:$0xff]
    %v438 = vld [vmem:[#allocation8 + $0x98] sm:$0xff]
    %v439 = vld [vmem:[#allocation8 + $0xa0] sm:$0xff]
    %v440 = vld [vmem:[#allocation8 + $0xa8] sm:$0xff]
    %v441 = vld [vmem:[#allocation8 + $0xb0] sm:$0xff]
    %v442 = vld [vmem:[#allocation8 + $0xb8] sm:$0xff]
    %v443 = vld [vmem:[#allocation8 + $0xc0] sm:$0xff]
    %v444 = vld [vmem:[#allocation8 + $0xc8] sm:$0xff]
    %v445 = vld [vmem:[#allocation8 + $0xd0] sm:$0xff]
    %v446 = vld [vmem:[#allocation8 + $0xd8] sm:$0xff]
    %v447 = vld [vmem:[#allocation8 + $0xe0] sm:$0xff]
    %v448 = vld [vmem:[#allocation8 + $0xe8] sm:$0xff]
    %v449 = vld [vmem:[#allocation8 + $0xf0] sm:$0xff]
    %v450 = vld [vmem:[#allocation8 + $0xf8] sm:$0xff]
    %v451 = vld [vmem:[#allocation8 + $0x100] sm:$0xff]
    %v452 = vld [vmem:[#allocation8 + $0x108] sm:$0xff]
    %v453 = vld [vmem:[#allocation8 + $0x110] sm:$0xff]
    %v454 = vld [vmem:[#allocation8 + $0x118] sm:$0xff]
    %v455 = vld [vmem:[#allocation8 + $0x120] sm:$0xff]
    %v456 = vld [vmem:[#allocation8 + $0x128] sm:$0xff]
    %v457 = vld [vmem:[#allocation8 + $0x130] sm:$0xff]
    %v458 = vld [vmem:[#allocation8 + $0x138] sm:$0xff]
    %v459 = vld [vmem:[#allocation8 + $0x140] sm:$0xff]
    %v460 = vld [vmem:[#allocation8 + $0x148] sm:$0xff]
    %v461 = vld [vmem:[#allocation8 + $0x150] sm:$0xff]
    %v462 = vld [vmem:[#allocation8 + $0x158] sm:$0xff]
    %v463 = vld [vmem:[#allocation8 + $0x160] sm:$0xff]
    %v464 = vld [vmem:[#allocation8 + $0x168] sm:$0xff]
    %v465 = vld [vmem:[#allocation8 + $0x170] sm:$0xff]
    %v466 = vld [vmem:[#allocation8 + $0x178] sm:$0xff]
    %v467 = vld [vmem:[#allocation9] sm:$0xff]
    %v468 = vld [vmem:[#allocation9 + $0x8] sm:$0xff]
    %v469 = vld [vmem:[#allocation9 + $0x10] sm:$0xff]
    %v470 = vld [vmem:[#allocation9 + $0x18] sm:$0xff]
    %v471 = vld [vmem:[#allocation9 + $0x20] sm:$0xff]
    %v472 = vld [vmem:[#allocation9 + $0x28] sm:$0xff]
    %v473 = vld [vmem:[#allocation9 + $0x30] sm:$0xff]
    %v474 = vld [vmem:[#allocation9 + $0x38] sm:$0xff]
    %v475 = vld [vmem:[#allocation9 + $0x40] sm:$0xff]
    %v476 = vld [vmem:[#allocation9 + $0x48] sm:$0xff]
    %v477 = vld [vmem:[#allocation9 + $0x50] sm:$0xff]
    %v478 = vld [vmem:[#allocation9 + $0x58] sm:$0xff]
    %v479 = vld [vmem:[#allocation9 + $0x60] sm:$0xff]
    %v480 = vld [vmem:[#allocation9 + $0x68] sm:$0xff]
    %v481 = vld [vmem:[#allocation9 + $0x70] sm:$0xff]
    %v482 = vld [vmem:[#allocation9 + $0x78] sm:$0xff]
    %v483 = vld [vmem:[#allocation9 + $0x80] sm:$0xff]
    %v484 = vld [vmem:[#allocation9 + $0x88] sm:$0xff]
    %v485 = vld [vmem:[#allocation9 + $0x90] sm:$0xff]
    %v486 = vld [vmem:[#allocation9 + $0x98] sm:$0xff]
    %v487 = vld [vmem:[#allocation9 + $0xa0] sm:$0xff]
    %v488 = vld [vmem:[#allocation9 + $0xa8] sm:$0xff]
    %v489 = vld [vmem:[#allocation9 + $0xb0] sm:$0xff]
    %v490 = vld [vmem:[#allocation9 + $0xb8] sm:$0xff]
    %v491 = vld [vmem:[#allocation9 + $0xc0] sm:$0xff]
    %v492 = vld [vmem:[#allocation9 + $0xc8] sm:$0xff]
    %v493 = vld [vmem:[#allocation9 + $0xd0] sm:$0xff]
    %v494 = vld [vmem:[#allocation9 + $0xd8] sm:$0xff]
    %v495 = vld [vmem:[#allocation9 + $0xe0] sm:$0xff]
    %v496 = vld [vmem:[#allocation9 + $0xe8] sm:$0xff]
    %v497 = vld [vmem:[#allocation9 + $0xf0] sm:$0xff]
    %v498 = vld [vmem:[#allocation9 + $0xf8] sm:$0xff]
    %v499 = vld [vmem:[#allocation9 + $0x100] sm:$0xff]
    %v500 = vld [vmem:[#allocation9 + $0x108] sm:$0xff]
    %v501 = vld [vmem:[#allocation9 + $0x110] sm:$0xff]
    %v502 = vld [vmem:[#allocation9 + $0x118] sm:$0xff]
    %v503 = vld [vmem:[#allocation9 + $0x120] sm:$0xff]
    %v504 = vld [vmem:[#allocation9 + $0x128] sm:$0xff]
    %v505 = vld [vmem:[#allocation9 + $0x130] sm:$0xff]
    %v506 = vld [vmem:[#allocation9 + $0x138] sm:$0xff]
    %v507 = vld [vmem:[#allocation9 + $0x140] sm:$0xff]
    %v508 = vld [vmem:[#allocation9 + $0x148] sm:$0xff]
    %v509 = vld [vmem:[#allocation9 + $0x150] sm:$0xff]
    %v510 = vld [vmem:[#allocation9 + $0x158] sm:$0xff]
    %v511 = vld [vmem:[#allocation9 + $0x160] sm:$0xff]
    %v512 = vld [vmem:[#allocation9 + $0x168] sm:$0xff]
    %v513 = vld [vmem:[#allocation9 + $0x170] sm:$0xff]
    %v514 = vld [vmem:[#allocation9 + $0x178] sm:$0xff]
    %v515 = vld [vmem:[#allocation11] sm:$0xff]
    %v516 = vld [vmem:[#allocation11 + $0x8] sm:$0xff]
    %v517 = vld [vmem:[#allocation11 + $0x10] sm:$0xff]
    %v518 = vld [vmem:[#allocation11 + $0x18] sm:$0xff]
    %v519 = vld [vmem:[#allocation11 + $0x20] sm:$0xff]
    %v520 = vld [vmem:[#allocation11 + $0x28] sm:$0xff]
    %v521 = vld [vmem:[#allocation11 + $0x30] sm:$0xff]
    %v522 = vld [vmem:[#allocation11 + $0x38] sm:$0xff]
    %v523 = vld [vmem:[#allocation11 + $0x40] sm:$0xff]
    %v524 = vld [vmem:[#allocation11 + $0x48] sm:$0xff]
    %v525 = vld [vmem:[#allocation11 + $0x50] sm:$0xff]
    %v526 = vld [vmem:[#allocation11 + $0x58] sm:$0xff]
    %v527 = vld [vmem:[#allocation11 + $0x60] sm:$0xff]
    %v528 = vld [vmem:[#allocation11 + $0x68] sm:$0xff]
    %v529 = vld [vmem:[#allocation11 + $0x70] sm:$0xff]
    %v530 = vld [vmem:[#allocation11 + $0x78] sm:$0xff]
    %v531 = vld [vmem:[#allocation11 + $0x80] sm:$0xff]
    %v532 = vld [vmem:[#allocation11 + $0x88] sm:$0xff]
    %v533 = vld [vmem:[#allocation11 + $0x90] sm:$0xff]
    %v534 = vld [vmem:[#allocation11 + $0x98] sm:$0xff]
    %v535 = vld [vmem:[#allocation11 + $0xa0] sm:$0xff]
    %v536 = vld [vmem:[#allocation11 + $0xa8] sm:$0xff]
    %v537 = vld [vmem:[#allocation11 + $0xb0] sm:$0xff]
    %v538 = vld [vmem:[#allocation11 + $0xb8] sm:$0xff]
    %v539 = vld [vmem:[#allocation11 + $0xc0] sm:$0xff]
    %v540 = vld [vmem:[#allocation11 + $0xc8] sm:$0xff]
    %v541 = vld [vmem:[#allocation11 + $0xd0] sm:$0xff]
    %v542 = vld [vmem:[#allocation11 + $0xd8] sm:$0xff]
    %v543 = vld [vmem:[#allocation11 + $0xe0] sm:$0xff]
    %v544 = vld [vmem:[#allocation11 + $0xe8] sm:$0xff]
    %v545 = vld [vmem:[#allocation11 + $0xf0] sm:$0xff]
    %v546 = vld [vmem:[#allocation11 + $0xf8] sm:$0xff]
    %v547 = vld [vmem:[#allocation11 + $0x100] sm:$0xff]
    %v548 = vld [vmem:[#allocation11 + $0x108] sm:$0xff]
    %v549 = vld [vmem:[#allocation11 + $0x110] sm:$0xff]
    %v550 = vld [vmem:[#allocation11 + $0x118] sm:$0xff]
    %v551 = vld [vmem:[#allocation11 + $0x120] sm:$0xff]
    %v552 = vld [vmem:[#allocation11 + $0x128] sm:$0xff]
    %v553 = vld [vmem:[#allocation11 + $0x130] sm:$0xff]
    %v554 = vld [vmem:[#allocation11 + $0x138] sm:$0xff]
    %v555 = vld [vmem:[#allocation11 + $0x140] sm:$0xff]
    %v556 = vld [vmem:[#allocation11 + $0x148] sm:$0xff]
    %v557 = vld [vmem:[#allocation11 + $0x150] sm:$0xff]
    %v558 = vld [vmem:[#allocation11 + $0x158] sm:$0xff]
    %v559 = vld [vmem:[#allocation11 + $0x160] sm:$0xff]
    %v560 = vld [vmem:[#allocation11 + $0x168] sm:$0xff]
    %v561 = vld [vmem:[#allocation11 + $0x170] sm:$0xff]
    %v562 = vld [vmem:[#allocation11 + $0x178] sm:$0xff]
    %v563 = vld [vmem:[%s7] sm:$0x7]
    %v565 = vlaneseq
    %v566 = vshrl.u32 %v565, 7
    %v567 = vsub.s32 0, %v566
    %v568 = vrot.slane %v563, %v567
    %v569 = vlaneseq
    %v570 = vshrl.u32 %v569, 7
    %v571 = vsub.s32 1, %v570
    %v572 = vrot.slane %v563, %v571
    %v573 = vlaneseq
    %v574 = vshrl.u32 %v573, 7
    %v575 = vsub.s32 2, %v574
    %v576 = vrot.slane %v563, %v575
    %v580 = vld [vmem:[%s4] sm:$0x1]
    %v582 = vlaneseq
    %v583 = vshrl.u32 %v582, 7
    %v584 = vsub.s32 0, %v583
    %v585 = vrot.slane %v580, %v584
    %v587 = vld [vmem:[%s8] sm:$0x1]
    %v589 = vlaneseq
    %v590 = vshrl.u32 %v589, 7
    %v591 = vsub.s32 0, %v590
    %v592 = vrot.slane %v587, %v591
    %v594 = vld [vmem:[#allocation2] sm:$0xff]
    %v595 = vld [vmem:[#allocation2 + $0x8] sm:$0xff]
    %v596 = vld [vmem:[#allocation2 + $0x10] sm:$0xff]
    %597 = vmatprep.subr.mxu0 %v420
    %598 = vmatpush1.msra.mxu0 %v419
    %599 = vmatprep.subr.mxu0 %v423
    %600 = vmatpush1.msra.mxu0 %v422
    %601 = vmatprep.subr.mxu0 %v426
    %602 = vmatpush1.msra.mxu0 %v425
    %603 = vmatprep.subr.mxu0 %v429
    %604 = vmatpush1.msra.mxu0 %v428
    %605 = vmatprep.subr.mxu0 %v432
    %606 = vmatpush1.msra.mxu0 %v431
    %607 = vmatprep.subr.mxu0 %v435
    %608 = vmatpush1.msra.mxu0 %v434
    %609 = vmatprep.subr.mxu0 %v438
    %610 = vmatpush1.msra.mxu0 %v437
    %611 = vmatprep.subr.mxu0 %v441
    %612 = vmatpush1.msra.mxu0 %v440
    %613 = vmatprep.subr.mxu0 %v444
    %614 = vmatpush1.msra.mxu0 %v443
    %615 = vmatprep.subr.mxu0 %v447
    %616 = vmatpush1.msra.mxu0 %v446
    %617 = vmatprep.subr.mxu0 %v450
    %618 = vmatpush1.msra.mxu0 %v449
    %619 = vmatprep.subr.mxu0 %v453
    %620 = vmatpush1.msra.mxu0 %v452
    %621 = vmatprep.subr.mxu0 %v456
    %622 = vmatpush1.msra.mxu0 %v455
    %623 = vmatprep.subr.mxu0 %v459
    %624 = vmatpush1.msra.mxu0 %v458
    %625 = vmatprep.subr.mxu0 %v462
    %626 = vmatpush1.msra.mxu0 %v461
    %627 = vmatprep.subr.mxu0 %v465
    %628 = vmatpush1.msra.mxu0 %v464
    %629 = vmatprep.subr.mxu0 0.0
    %630 = vmatpush1.msra.mxu0 0.0
    %631 = vmatprep.subr.mxu0 0.0
    %632 = vmatpush1.msra.mxu0 0.0
    %633 = vmatprep.subr.mxu0 0.0
    %634 = vmatpush1.msra.mxu0 0.0
    %635 = vmatprep.subr.mxu0 0.0
    %636 = vmatpush1.msra.mxu0 0.0
    %637 = vmatprep.subr.mxu0 0.0
    %638 = vmatpush1.msra.mxu0 0.0
    %639 = vmatprep.subr.mxu0 0.0
    %640 = vmatpush1.msra.mxu0 0.0
    %641 = vmatprep.subr.mxu0 0.0
    %642 = vmatpush1.msra.mxu0 0.0
    %643 = vmatprep.subr.mxu0 0.0
    %644 = vmatpush1.msra.mxu0 0.0
    %645 = vmatprep.subr.mxu0 0.0
    %646 = vmatpush1.msra.mxu0 0.0
    %647 = vmatprep.subr.mxu0 0.0
    %648 = vmatpush1.msra.mxu0 0.0
    %649 = vmatprep.subr.mxu0 0.0
    %650 = vmatpush1.msra.mxu0 0.0
    %651 = vmatprep.subr.mxu0 0.0
    %652 = vmatpush1.msra.mxu0 0.0
    %653 = vmatprep.subr.mxu0 0.0
    %654 = vmatpush1.msra.mxu0 0.0
    %655 = vmatprep.subr.mxu0 0.0
    %656 = vmatpush1.msra.mxu0 0.0
    %657 = vmatprep.subr.mxu0 0.0
    %658 = vmatpush1.msra.mxu0 0.0
    %659 = vmatprep.subr.mxu0 0.0
    %660 = vmatpush1.msra.mxu0 0.0
    %661 = vmatprep.mubr.f32.mxu0 0.0
    %662 = vmatmul.mubr.f32.gmra.mrb[0].mxu0 0.0
    %v663 = vpop.f32.mrb[0].mxu0
    %v664 = vadd.f32 0.0, %v663
    %v665 = vpop.f32.mrb[0].mxu0
    %v666 = vadd.f32 0.0, %v665
    %667 = vdwg.mxu0
    %668 = vmatprep.subr.mxu0 0.0
    %669 = vmatpush1.msra.mxu0 %v421
    %670 = vmatprep.subr.mxu0 0.0
    %671 = vmatpush1.msra.mxu0 %v424
    %672 = vmatprep.subr.mxu0 0.0
    %673 = vmatpush1.msra.mxu0 %v427
    %674 = vmatprep.subr.mxu0 0.0
    %675 = vmatpush1.msra.mxu0 %v430
    %676 = vmatprep.subr.mxu0 0.0
    %677 = vmatpush1.msra.mxu0 %v433
    %678 = vmatprep.subr.mxu0 0.0
    %679 = vmatpush1.msra.mxu0 %v436
    %680 = vmatprep.subr.mxu0 0.0
    %681 = vmatpush1.msra.mxu0 %v439
    %682 = vmatprep.subr.mxu0 0.0
    %683 = vmatpush1.msra.mxu0 %v442
    %684 = vmatprep.subr.mxu0 0.0
    %685 = vmatpush1.msra.mxu0 %v445
    %686 = vmatprep.subr.mxu0 0.0
    %687 = vmatpush1.msra.mxu0 %v448
    %688 = vmatprep.subr.mxu0 0.0
    %689 = vmatpush1.msra.mxu0 %v451
    %690 = vmatprep.subr.mxu0 0.0
    %691 = vmatpush1.msra.mxu0 %v454
    %692 = vmatprep.subr.mxu0 0.0
    %693 = vmatpush1.msra.mxu0 %v457
    %694 = vmatprep.subr.mxu0 0.0
    %695 = vmatpush1.msra.mxu0 %v460
    %696 = vmatprep.subr.mxu0 0.0
    %697 = vmatpush1.msra.mxu0 %v463
    %698 = vmatprep.subr.mxu0 0.0
    %699 = vmatpush1.msra.mxu0 %v466
    %700 = vmatprep.subr.mxu0 0.0
    %701 = vmatpush1.msra.mxu0 0.0
    %702 = vmatprep.subr.mxu0 0.0
    %703 = vmatpush1.msra.mxu0 0.0
    %704 = vmatprep.subr.mxu0 0.0
    %705 = vmatpush1.msra.mxu0 0.0
    %706 = vmatprep.subr.mxu0 0.0
    %707 = vmatpush1.msra.mxu0 0.0
    %708 = vmatprep.subr.mxu0 0.0
    %709 = vmatpush1.msra.mxu0 0.0
    %710 = vmatprep.subr.mxu0 0.0
    %711 = vmatpush1.msra.mxu0 0.0
    %712 = vmatprep.subr.mxu0 0.0
    %713 = vmatpush1.msra.mxu0 0.0
    %714 = vmatprep.subr.mxu0 0.0
    %715 = vmatpush1.msra.mxu0 0.0
    %716 = vmatprep.subr.mxu0 0.0
    %717 = vmatpush1.msra.mxu0 0.0
    %718 = vmatprep.subr.mxu0 0.0
    %719 = vmatpush1.msra.mxu0 0.0
    %720 = vmatprep.subr.mxu0 0.0
    %721 = vmatpush1.msra.mxu0 0.0
    %722 = vmatprep.subr.mxu0 0.0
    %723 = vmatpush1.msra.mxu0 0.0
    %724 = vmatprep.subr.mxu0 0.0
    %725 = vmatpush1.msra.mxu0 0.0
    %726 = vmatprep.subr.mxu0 0.0
    %727 = vmatpush1.msra.mxu0 0.0
    %728 = vmatprep.subr.mxu0 0.0
    %729 = vmatpush1.msra.mxu0 0.0
    %730 = vmatprep.subr.mxu0 0.0
    %731 = vmatpush1.msra.mxu0 0.0
    %732 = vmatprep.mubr.f32.mxu0 0.0
    %733 = vmatmul.mubr.f32.gmra.mrb[0].mxu0 0.0
    %v734 = vpop.f32.mrb[0].mxu0
    %v735 = vadd.f32 0.0, %v734
    %v736 = vpop.f32.mrb[0].mxu0
    %737 = vdwg.mxu0
    %v738 = vadd.f32 %v594, %v664
    %v739 = vxor.u32 %v738, 2147483648
    %v740 = vmul.f32 %v739, 1.442695
    %v741 = vpow.pop %v740
    %v742 = vadd.f32 %v741, 1.0
    %v743 = vrcp.pop %v742
    %v744 = vmul.f32 1.0, %v743
    %v745 = vadd.f32 %v595, %v666
    %v746 = vxor.u32 %v745, 2147483648
    %v747 = vmul.f32 %v746, 1.442695
    %v748 = vpow.pop %v747
    %v749 = vadd.f32 %v748, 1.0
    %v750 = vrcp.pop %v749
    %v751 = vmul.f32 1.0, %v750
    %v752 = vadd.f32 %v735, %v585
    %v753 = vmul.f32 %v744, %v752
    %v754 = vadd.f32 %v596, %v753
    %v755 = vtanh.pop %v754
    %v756 = vsub.f32 0.0, %v755
    %v757 = vmul.f32 %v751, %v756
    %v758 = vadd.f32 %v755, %v757
    %759 = vmatprep.subr.mxu0 %v468
    %760 = vmatpush1.msra.mxu0 %v467
    %761 = vmatprep.subr.mxu0 %v471
    %762 = vmatpush1.msra.mxu0 %v470
    %763 = vmatprep.subr.mxu0 %v474
    %764 = vmatpush1.msra.mxu0 %v473
    %765 = vmatprep.subr.mxu0 %v477
    %766 = vmatpush1.msra.mxu0 %v476
    %767 = vmatprep.subr.mxu0 %v480
    %768 = vmatpush1.msra.mxu0 %v479
    %769 = vmatprep.subr.mxu0 %v483
    %770 = vmatpush1.msra.mxu0 %v482
    %771 = vmatprep.subr.mxu0 %v486
    %772 = vmatpush1.msra.mxu0 %v485
    %773 = vmatprep.subr.mxu0 %v489
    %774 = vmatpush1.msra.mxu0 %v488
    %775 = vmatprep.subr.mxu0 %v492
    %776 = vmatpush1.msra.mxu0 %v491
    %777 = vmatprep.subr.mxu0 %v495
    %778 = vmatpush1.msra.mxu0 %v494
    %779 = vmatprep.subr.mxu0 %v498
    %780 = vmatpush1.msra.mxu0 %v497
    %781 = vmatprep.subr.mxu0 %v501
    %782 = vmatpush1.msra.mxu0 %v500
    %783 = vmatprep.subr.mxu0 %v504
    %784 = vmatpush1.msra.mxu0 %v503
    %785 = vmatprep.subr.mxu0 %v507
    %786 = vmatpush1.msra.mxu0 %v506
    %787 = vmatprep.subr.mxu0 %v510
    %788 = vmatpush1.msra.mxu0 %v509
    %789 = vmatprep.subr.mxu0 %v513
    %790 = vmatpush1.msra.mxu0 %v512
    %791 = vmatprep.subr.mxu0 0.0
    %792 = vmatpush1.msra.mxu0 0.0
    %793 = vmatprep.subr.mxu0 0.0
    %794 = vmatpush1.msra.mxu0 0.0
    %795 = vmatprep.subr.mxu0 0.0
    %796 = vmatpush1.msra.mxu0 0.0
    %797 = vmatprep.subr.mxu0 0.0
    %798 = vmatpush1.msra.mxu0 0.0
    %799 = vmatprep.subr.mxu0 0.0
    %800 = vmatpush1.msra.mxu0 0.0
    %801 = vmatprep.subr.mxu0 0.0
    %802 = vmatpush1.msra.mxu0 0.0
    %803 = vmatprep.subr.mxu0 0.0
    %804 = vmatpush1.msra.mxu0 0.0
    %805 = vmatprep.subr.mxu0 0.0
    %806 = vmatpush1.msra.mxu0 0.0
    %807 = vmatprep.subr.mxu0 0.0
    %808 = vmatpush1.msra.mxu0 0.0
    %809 = vmatprep.subr.mxu0 0.0
    %810 = vmatpush1.msra.mxu0 0.0
    %811 = vmatprep.subr.mxu0 0.0
    %812 = vmatpush1.msra.mxu0 0.0
    %813 = vmatprep.subr.mxu0 0.0
    %814 = vmatpush1.msra.mxu0 0.0
    %815 = vmatprep.subr.mxu0 0.0
    %816 = vmatpush1.msra.mxu0 0.0
    %817 = vmatprep.subr.mxu0 0.0
    %818 = vmatpush1.msra.mxu0 0.0
    %819 = vmatprep.subr.mxu0 0.0
    %820 = vmatpush1.msra.mxu0 0.0
    %821 = vmatprep.subr.mxu0 0.0
    %822 = vmatpush1.msra.mxu0 0.0
    %823 = vmatprep.mubr.f32.mxu0 0.0
    %824 = vmatmul.mubr.f32.gmra.mrb[0].mxu0 %v758
    %v825 = vpop.f32.mrb[0].mxu0
    %v826 = vadd.f32 %v568, %v825
    %v827 = vpop.f32.mrb[0].mxu0
    %v828 = vadd.f32 %v572, %v827
    %829 = vdwg.mxu0
    %830 = vmatprep.subr.mxu0 0.0
    %831 = vmatpush1.msra.mxu0 %v469
    %832 = vmatprep.subr.mxu0 0.0
    %833 = vmatpush1.msra.mxu0 %v472
    %834 = vmatprep.subr.mxu0 0.0
    %835 = vmatpush1.msra.mxu0 %v475
    %836 = vmatprep.subr.mxu0 0.0
    %837 = vmatpush1.msra.mxu0 %v478
    %838 = vmatprep.subr.mxu0 0.0
    %839 = vmatpush1.msra.mxu0 %v481
    %840 = vmatprep.subr.mxu0 0.0
    %841 = vmatpush1.msra.mxu0 %v484
    %842 = vmatprep.subr.mxu0 0.0
    %843 = vmatpush1.msra.mxu0 %v487
    %844 = vmatprep.subr.mxu0 0.0
    %845 = vmatpush1.msra.mxu0 %v490
    %846 = vmatprep.subr.mxu0 0.0
    %847 = vmatpush1.msra.mxu0 %v493
    %848 = vmatprep.subr.mxu0 0.0
    %849 = vmatpush1.msra.mxu0 %v496
    %850 = vmatprep.subr.mxu0 0.0
    %851 = vmatpush1.msra.mxu0 %v499
    %852 = vmatprep.subr.mxu0 0.0
    %853 = vmatpush1.msra.mxu0 %v502
    %854 = vmatprep.subr.mxu0 0.0
    %855 = vmatpush1.msra.mxu0 %v505
    %856 = vmatprep.subr.mxu0 0.0
    %857 = vmatpush1.msra.mxu0 %v508
    %858 = vmatprep.subr.mxu0 0.0
    %859 = vmatpush1.msra.mxu0 %v511
    %860 = vmatprep.subr.mxu0 0.0
    %861 = vmatpush1.msra.mxu0 %v514
    %862 = vmatprep.subr.mxu0 0.0
    %863 = vmatpush1.msra.mxu0 0.0
    %864 = vmatprep.subr.mxu0 0.0
    %865 = vmatpush1.msra.mxu0 0.0
    %866 = vmatprep.subr.mxu0 0.0
    %867 = vmatpush1.msra.mxu0 0.0
    %868 = vmatprep.subr.mxu0 0.0
    %869 = vmatpush1.msra.mxu0 0.0
    %870 = vmatprep.subr.mxu0 0.0
    %871 = vmatpush1.msra.mxu0 0.0
    %872 = vmatprep.subr.mxu0 0.0
    %873 = vmatpush1.msra.mxu0 0.0
    %874 = vmatprep.subr.mxu0 0.0
    %875 = vmatpush1.msra.mxu0 0.0
    %876 = vmatprep.subr.mxu0 0.0
    %877 = vmatpush1.msra.mxu0 0.0
    %878 = vmatprep.subr.mxu0 0.0
    %879 = vmatpush1.msra.mxu0 0.0
    %880 = vmatprep.subr.mxu0 0.0
    %881 = vmatpush1.msra.mxu0 0.0
    %882 = vmatprep.subr.mxu0 0.0
    %883 = vmatpush1.msra.mxu0 0.0
    %884 = vmatprep.subr.mxu0 0.0
    %885 = vmatpush1.msra.mxu0 0.0
    %886 = vmatprep.subr.mxu0 0.0
    %887 = vmatpush1.msra.mxu0 0.0
    %888 = vmatprep.subr.mxu0 0.0
    %889 = vmatpush1.msra.mxu0 0.0
    %890 = vmatprep.subr.mxu0 0.0
    %891 = vmatpush1.msra.mxu0 0.0
    %892 = vmatprep.subr.mxu0 0.0
    %893 = vmatpush1.msra.mxu0 0.0
    %894 = vmatprep.mubr.f32.mxu0 0.0
    %895 = vmatmul.mubr.f32.gmra.mrb[0].mxu0 %v758
    %v896 = vpop.f32.mrb[0].mxu0
    %v897 = vadd.f32 %v576, %v896
    %v898 = vpop.f32.mrb[0].mxu0
    %899 = vdwg.mxu0
    %900 = vmatprep.subr.mxu0 %v516
    %901 = vmatpush1.msra.mxu0 %v515
    %902 = vmatprep.subr.mxu0 %v519
    %903 = vmatpush1.msra.mxu0 %v518
    %904 = vmatprep.subr.mxu0 %v522
    %905 = vmatpush1.msra.mxu0 %v521
    %906 = vmatprep.subr.mxu0 %v525
    %907 = vmatpush1.msra.mxu0 %v524
    %908 = vmatprep.subr.mxu0 %v528
    %909 = vmatpush1.msra.mxu0 %v527
    %910 = vmatprep.subr.mxu0 %v531
    %911 = vmatpush1.msra.mxu0 %v530
    %912 = vmatprep.subr.mxu0 %v534
    %913 = vmatpush1.msra.mxu0 %v533
    %914 = vmatprep.subr.mxu0 %v537
    %915 = vmatpush1.msra.mxu0 %v536
    %916 = vmatprep.subr.mxu0 %v540
    %917 = vmatpush1.msra.mxu0 %v539
    %918 = vmatprep.subr.mxu0 %v543
    %919 = vmatpush1.msra.mxu0 %v542
    %920 = vmatprep.subr.mxu0 %v546
    %921 = vmatpush1.msra.mxu0 %v545
    %922 = vmatprep.subr.mxu0 %v549
    %923 = vmatpush1.msra.mxu0 %v548
    %924 = vmatprep.subr.mxu0 %v552
    %925 = vmatpush1.msra.mxu0 %v551
    %926 = vmatprep.subr.mxu0 %v555
    %927 = vmatpush1.msra.mxu0 %v554
    %928 = vmatprep.subr.mxu0 %v558
    %929 = vmatpush1.msra.mxu0 %v557
    %930 = vmatprep.subr.mxu0 %v561
    %931 = vmatpush1.msra.mxu0 %v560
    %932 = vmatprep.subr.mxu0 0.0
    %933 = vmatpush1.msra.mxu0 0.0
    %934 = vmatprep.subr.mxu0 0.0
    %935 = vmatpush1.msra.mxu0 0.0
    %936 = vmatprep.subr.mxu0 0.0
    %937 = vmatpush1.msra.mxu0 0.0
    %938 = vmatprep.subr.mxu0 0.0
    %939 = vmatpush1.msra.mxu0 0.0
    %940 = vmatprep.subr.mxu0 0.0
    %941 = vmatpush1.msra.mxu0 0.0
    %942 = vmatprep.subr.mxu0 0.0
    %943 = vmatpush1.msra.mxu0 0.0
    %944 = vmatprep.subr.mxu0 0.0
    %945 = vmatpush1.msra.mxu0 0.0
    %946 = vmatprep.subr.mxu0 0.0
    %947 = vmatpush1.msra.mxu0 0.0
    %948 = vmatprep.subr.mxu0 0.0
    %949 = vmatpush1.msra.mxu0 0.0
    %950 = vmatprep.subr.mxu0 0.0
    %951 = vmatpush1.msra.mxu0 0.0
    %952 = vmatprep.subr.mxu0 0.0
    %953 = vmatpush1.msra.mxu0 0.0
    %954 = vmatprep.subr.mxu0 0.0
    %955 = vmatpush1.msra.mxu0 0.0
    %956 = vmatprep.subr.mxu0 0.0
    %957 = vmatpush1.msra.mxu0 0.0
    %958 = vmatprep.subr.mxu0 0.0
    %959 = vmatpush1.msra.mxu0 0.0
    %960 = vmatprep.subr.mxu0 0.0
    %961 = vmatpush1.msra.mxu0 0.0
    %962 = vmatprep.subr.mxu0 0.0
    %963 = vmatpush1.msra.mxu0 0.0
    %964 = vmatprep.mubr.f32.mxu0 0.0
    %965 = vmatmul.mubr.f32.gmra.mrb[0].mxu0 0.0
    %v966 = vpop.f32.mrb[0].mxu0
    %v967 = vadd.f32 0.0, %v966
    %v968 = vpop.f32.mrb[0].mxu0
    %v969 = vadd.f32 0.0, %v968
    %970 = vdwg.mxu0
    %971 = vmatprep.subr.mxu0 0.0
    %972 = vmatpush1.msra.mxu0 %v517
    %973 = vmatprep.subr.mxu0 0.0
    %974 = vmatpush1.msra.mxu0 %v520
    %975 = vmatprep.subr.mxu0 0.0
    %976 = vmatpush1.msra.mxu0 %v523
    %977 = vmatprep.subr.mxu0 0.0
    %978 = vmatpush1.msra.mxu0 %v526
    %979 = vmatprep.subr.mxu0 0.0
    %980 = vmatpush1.msra.mxu0 %v529
    %981 = vmatprep.subr.mxu0 0.0
    %982 = vmatpush1.msra.mxu0 %v532
    %983 = vmatprep.subr.mxu0 0.0
    %984 = vmatpush1.msra.mxu0 %v535
    %985 = vmatprep.subr.mxu0 0.0
    %986 = vmatpush1.msra.mxu0 %v538
    %987 = vmatprep.subr.mxu0 0.0
    %988 = vmatpush1.msra.mxu0 %v541
    %989 = vmatprep.subr.mxu0 0.0
    %990 = vmatpush1.msra.mxu0 %v544
    %991 = vmatprep.subr.mxu0 0.0
    %992 = vmatpush1.msra.mxu0 %v547
    %993 = vmatprep.subr.mxu0 0.0
    %994 = vmatpush1.msra.mxu0 %v550
    %995 = vmatprep.subr.mxu0 0.0
    %996 = vmatpush1.msra.mxu0 %v553
    %997 = vmatprep.subr.mxu0 0.0
    %998 = vmatpush1.msra.mxu0 %v556
    %999 = vmatprep.subr.mxu0 0.0
    %1000 = vmatpush1.msra.mxu0 %v559
    %1001 = vmatprep.subr.mxu0 0.0
    %1002 = vmatpush1.msra.mxu0 %v562
    %1003 = vmatprep.subr.mxu0 0.0
    %1004 = vmatpush1.msra.mxu0 0.0
    %1005 = vmatprep.subr.mxu0 0.0
    %1006 = vmatpush1.msra.mxu0 0.0
    %1007 = vmatprep.subr.mxu0 0.0
    %1008 = vmatpush1.msra.mxu0 0.0
    %1009 = vmatprep.subr.mxu0 0.0
    %1010 = vmatpush1.msra.mxu0 0.0
    %1011 = vmatprep.subr.mxu0 0.0
    %1012 = vmatpush1.msra.mxu0 0.0
    %1013 = vmatprep.subr.mxu0 0.0
    %1014 = vmatpush1.msra.mxu0 0.0
    %1015 = vmatprep.subr.mxu0 0.0
    %1016 = vmatpush1.msra.mxu0 0.0
    %1017 = vmatprep.subr.mxu0 0.0
    %1018 = vmatpush1.msra.mxu0 0.0
    %1019 = vmatprep.subr.mxu0 0.0
    %1020 = vmatpush1.msra.mxu0 0.0
    %1021 = vmatprep.subr.mxu0 0.0
    %1022 = vmatpush1.msra.mxu0 0.0
    %1023 = vmatprep.subr.mxu0 0.0
    %1024 = vmatpush1.msra.mxu0 0.0
    %1025 = vmatprep.subr.mxu0 0.0
    %1026 = vmatpush1.msra.mxu0 0.0
    %1027 = vmatprep.subr.mxu0 0.0
    %1028 = vmatpush1.msra.mxu0 0.0
    %1029 = vmatprep.subr.mxu0 0.0
    %1030 = vmatpush1.msra.mxu0 0.0
    %1031 = vmatprep.subr.mxu0 0.0
    %1032 = vmatpush1.msra.mxu0 0.0
    %1033 = vmatprep.subr.mxu0 0.0
    %1034 = vmatpush1.msra.mxu0 0.0
    %1035 = vmatprep.mubr.f32.mxu0 0.0
    %1036 = vmatmul.mubr.f32.gmra.mrb[0].mxu0 0.0
    %v1037 = vpop.f32.mrb[0].mxu0
    %v1038 = vadd.f32 0.0, %v1037
    %v1039 = vpop.f32.mrb[0].mxu0
    %1040 = vdwg.mxu0
    %v1041 = vadd.f32 %v826, %v967
    %v1042 = vxor.u32 %v1041, 2147483648
    %v1043 = vmul.f32 %v1042, 1.442695
    %v1044 = vpow.pop %v1043
    %v1045 = vadd.f32 %v1044, 1.0
    %v1046 = vrcp.pop %v1045
    %v1047 = vmul.f32 1.0, %v1046
    %v1048 = vadd.f32 %v828, %v969
    %v1049 = vxor.u32 %v1048, 2147483648
    %v1050 = vmul.f32 %v1049, 1.442695
    %v1051 = vpow.pop %v1050
    %v1052 = vadd.f32 %v1051, 1.0
    %v1053 = vrcp.pop %v1052
    %v1054 = vmul.f32 1.0, %v1053
    %v1055 = vadd.f32 %v1038, %v592
    %v1056 = vmul.f32 %v1047, %v1055
    %v1057 = vadd.f32 %v897, %v1056
    %v1058 = vtanh.pop %v1057
    %v1059 = vsub.f32 0.0, %v1058
    %v1060 = vmul.f32 %v1054, %v1059
    %v1061 = vadd.f32 %v1058, %v1060
    %v1062 = vld [vmem:[#allocation2 + $0x18] sm:$0xff]
    %v1063 = vld [vmem:[#allocation2 + $0x20] sm:$0xff]
    %v1064 = vld [vmem:[#allocation2 + $0x28] sm:$0xff]
    %1065 = vmatprep.subr.mxu0 %v420
    %1066 = vmatpush1.msra.mxu0 %v419
    %1067 = vmatprep.subr.mxu0 %v423
    %1068 = vmatpush1.msra.mxu0 %v422
    %1069 = vmatprep.subr.mxu0 %v426
    %1070 = vmatpush1.msra.mxu0 %v425
    %1071 = vmatprep.subr.mxu0 %v429
    %1072 = vmatpush1.msra.mxu0 %v428
    %1073 = vmatprep.subr.mxu0 %v432
    %1074 = vmatpush1.msra.mxu0 %v431
    %1075 = vmatprep.subr.mxu0 %v435
    %1076 = vmatpush1.msra.mxu0 %v434
    %1077 = vmatprep.subr.mxu0 %v438
    %1078 = vmatpush1.msra.mxu0 %v437
    %1079 = vmatprep.subr.mxu0 %v441
    %1080 = vmatpush1.msra.mxu0 %v440
    %1081 = vmatprep.subr.mxu0 %v444
    %1082 = vmatpush1.msra.mxu0 %v443
    %1083 = vmatprep.subr.mxu0 %v447
    %1084 = vmatpush1.msra.mxu0 %v446
    %1085 = vmatprep.subr.mxu0 %v450
    %1086 = vmatpush1.msra.mxu0 %v449
    %1087 = vmatprep.subr.mxu0 %v453
    %1088 = vmatpush1.msra.mxu0 %v452
    %1089 = vmatprep.subr.mxu0 %v456
    %1090 = vmatpush1.msra.mxu0 %v455
    %1091 = vmatprep.subr.mxu0 %v459
    %1092 = vmatpush1.msra.mxu0 %v458
    %1093 = vmatprep.subr.mxu0 %v462
    %1094 = vmatpush1.msra.mxu0 %v461
    %1095 = vmatprep.subr.mxu0 %v465
    %1096 = vmatpush1.msra.mxu0 %v464
    %1097 = vmatprep.subr.mxu0 0.0
    %1098 = vmatpush1.msra.mxu0 0.0
    %1099 = vmatprep.subr.mxu0 0.0
    %1100 = vmatpush1.msra.mxu0 0.0
    %1101 = vmatprep.subr.mxu0 0.0
    %1102 = vmatpush1.msra.mxu0 0.0
    %1103 = vmatprep.subr.mxu0 0.0
    %1104 = vmatpush1.msra.mxu0 0.0
    %1105 = vmatprep.subr.mxu0 0.0
    %1106 = vmatpush1.msra.mxu0 0.0
    %1107 = vmatprep.subr.mxu0 0.0
    %1108 = vmatpush1.msra.mxu0 0.0
    %1109 = vmatprep.subr.mxu0 0.0
    %1110 = vmatpush1.msra.mxu0 0.0
    %1111 = vmatprep.subr.mxu0 0.0
    %1112 = vmatpush1.msra.mxu0 0.0
    %1113 = vmatprep.subr.mxu0 0.0
    %1114 = vmatpush1.msra.mxu0 0.0
    %1115 = vmatprep.subr.mxu0 0.0
    %1116 = vmatpush1.msra.mxu0 0.0
    %1117 = vmatprep.subr.mxu0 0.0
    %1118 = vmatpush1.msra.mxu0 0.0
    %1119 = vmatprep.subr.mxu0 0.0
    %1120 = vmatpush1.msra.mxu0 0.0
    %1121 = vmatprep.subr.mxu0 0.0
    %1122 = vmatpush1.msra.mxu0 0.0
    %1123 = vmatprep.subr.mxu0 0.0
    %1124 = vmatpush1.msra.mxu0 0.0
    %1125 = vmatprep.subr.mxu0 0.0
    %1126 = vmatpush1.msra.mxu0 0.0
    %1127 = vmatprep.subr.mxu0 0.0
    %1128 = vmatpush1.msra.mxu0 0.0
    %1129 = vmatprep.mubr.f32.mxu0 0.0
    %1130 = vmatmul.mubr.f32.gmra.mrb[0].mxu0 %v758
    %v1131 = vpop.f32.mrb[0].mxu0
    %v1132 = vadd.f32 0.0, %v1131
    %v1133 = vpop.f32.mrb[0].mxu0
    %v1134 = vadd.f32 0.0, %v1133
    %1135 = vdwg.mxu0
    %1136 = vmatprep.subr.mxu0 0.0
    %1137 = vmatpush1.msra.mxu0 %v421
    %1138 = vmatprep.subr.mxu0 0.0
    %1139 = vmatpush1.msra.mxu0 %v424
    %1140 = vmatprep.subr.mxu0 0.0
    %1141 = vmatpush1.msra.mxu0 %v427
    %1142 = vmatprep.subr.mxu0 0.0
    %1143 = vmatpush1.msra.mxu0 %v430
    %1144 = vmatprep.subr.mxu0 0.0
    %1145 = vmatpush1.msra.mxu0 %v433
    %1146 = vmatprep.subr.mxu0 0.0
    %1147 = vmatpush1.msra.mxu0 %v436
    %1148 = vmatprep.subr.mxu0 0.0
    %1149 = vmatpush1.msra.mxu0 %v439
    %1150 = vmatprep.subr.mxu0 0.0
    %1151 = vmatpush1.msra.mxu0 %v442
    %1152 = vmatprep.subr.mxu0 0.0
    %1153 = vmatpush1.msra.mxu0 %v445
    %1154 = vmatprep.subr.mxu0 0.0
    %1155 = vmatpush1.msra.mxu0 %v448
    %1156 = vmatprep.subr.mxu0 0.0
    %1157 = vmatpush1.msra.mxu0 %v451
    %1158 = vmatprep.subr.mxu0 0.0
    %1159 = vmatpush1.msra.mxu0 %v454
    %1160 = vmatprep.subr.mxu0 0.0
    %1161 = vmatpush1.msra.mxu0 %v457
    %1162 = vmatprep.subr.mxu0 0.0
    %1163 = vmatpush1.msra.mxu0 %v460
    %1164 = vmatprep.subr.mxu0 0.0
    %1165 = vmatpush1.msra.mxu0 %v463
    %1166 = vmatprep.subr.mxu0 0.0
    %1167 = vmatpush1.msra.mxu0 %v466
    %1168 = vmatprep.subr.mxu0 0.0
    %1169 = vmatpush1.msra.mxu0 0.0
    %1170 = vmatprep.subr.mxu0 0.0
    %1171 = vmatpush1.msra.mxu0 0.0
    %1172 = vmatprep.subr.mxu0 0.0
    %1173 = vmatpush1.msra.mxu0 0.0
    %1174 = vmatprep.subr.mxu0 0.0
    %1175 = vmatpush1.msra.mxu0 0.0
    %1176 = vmatprep.subr.mxu0 0.0
    %1177 = vmatpush1.msra.mxu0 0.0
    %1178 = vmatprep.subr.mxu0 0.0
    %1179 = vmatpush1.msra.mxu0 0.0
    %1180 = vmatprep.subr.mxu0 0.0
    %1181 = vmatpush1.msra.mxu0 0.0
    %1182 = vmatprep.subr.mxu0 0.0
    %1183 = vmatpush1.msra.mxu0 0.0
    %1184 = vmatprep.subr.mxu0 0.0
    %1185 = vmatpush1.msra.mxu0 0.0
    %1186 = vmatprep.subr.mxu0 0.0
    %1187 = vmatpush1.msra.mxu0 0.0
    %1188 = vmatprep.subr.mxu0 0.0
    %1189 = vmatpush1.msra.mxu0 0.0
    %1190 = vmatprep.subr.mxu0 0.0
    %1191 = vmatpush1.msra.mxu0 0.0
    %1192 = vmatprep.subr.mxu0 0.0
    %1193 = vmatpush1.msra.mxu0 0.0
    %1194 = vmatprep.subr.mxu0 0.0
    %1195 = vmatpush1.msra.mxu0 0.0
    %1196 = vmatprep.subr.mxu0 0.0
    %1197 = vmatpush1.msra.mxu0 0.0
    %1198 = vmatprep.subr.mxu0 0.0
    %1199 = vmatpush1.msra.mxu0 0.0
    %1200 = vmatprep.mubr.f32.mxu0 0.0
    %1201 = vmatmul.mubr.f32.gmra.mrb[0].mxu0 %v758
    %v1202 = vpop.f32.mrb[0].mxu0
    %v1203 = vadd.f32 0.0, %v1202
    %v1204 = vpop.f32.mrb[0].mxu0
    %1205 = vdwg.mxu0
    %v1206 = vadd.f32 %v1062, %v1132
    %v1207 = vxor.u32 %v1206, 2147483648
    %v1208 = vmul.f32 %v1207, 1.442695
    %v1209 = vpow.pop %v1208
    %v1210 = vadd.f32 %v1209, 1.0
    %v1211 = vrcp.pop %v1210
    %v1212 = vmul.f32 1.0, %v1211
    %v1213 = vadd.f32 %v1063, %v1134
    %v1214 = vxor.u32 %v1213, 2147483648
    %v1215 = vmul.f32 %v1214, 1.442695
    %v1216 = vpow.pop %v1215
    %v1217 = vadd.f32 %v1216, 1.0
    %v1218 = vrcp.pop %v1217
    %v1219 = vmul.f32 1.0, %v1218
    %v1220 = vadd.f32 %v1203, %v585
    %v1221 = vmul.f32 %v1212, %v1220
    %v1222 = vadd.f32 %v1064, %v1221
    %v1223 = vtanh.pop %v1222
    %v1224 = vsub.f32 %v758, %v1223
    %v1225 = vmul.f32 %v1219, %v1224
    %v1226 = vadd.f32 %v1223, %v1225
    %1227 = vmatprep.subr.mxu0 %v468
    %1228 = vmatpush1.msra.mxu0 %v467
    %1229 = vmatprep.subr.mxu0 %v471
    %1230 = vmatpush1.msra.mxu0 %v470
    %1231 = vmatprep.subr.mxu0 %v474
    %1232 = vmatpush1.msra.mxu0 %v473
    %1233 = vmatprep.subr.mxu0 %v477
    %1234 = vmatpush1.msra.mxu0 %v476
    %1235 = vmatprep.subr.mxu0 %v480
    %1236 = vmatpush1.msra.mxu0 %v479
    %1237 = vmatprep.subr.mxu0 %v483
    %1238 = vmatpush1.msra.mxu0 %v482
    %1239 = vmatprep.subr.mxu0 %v486
    %1240 = vmatpush1.msra.mxu0 %v485
    %1241 = vmatprep.subr.mxu0 %v489
    %1242 = vmatpush1.msra.mxu0 %v488
    %1243 = vmatprep.subr.mxu0 %v492
    %1244 = vmatpush1.msra.mxu0 %v491
    %1245 = vmatprep.subr.mxu0 %v495
    %1246 = vmatpush1.msra.mxu0 %v494
    %1247 = vmatprep.subr.mxu0 %v498
    %1248 = vmatpush1.msra.mxu0 %v497
    %1249 = vmatprep.subr.mxu0 %v501
    %1250 = vmatpush1.msra.mxu0 %v500
    %1251 = vmatprep.subr.mxu0 %v504
    %1252 = vmatpush1.msra.mxu0 %v503
    %1253 = vmatprep.subr.mxu0 %v507
    %1254 = vmatpush1.msra.mxu0 %v506
    %1255 = vmatprep.subr.mxu0 %v510
    %1256 = vmatpush1.msra.mxu0 %v509
    %1257 = vmatprep.subr.mxu0 %v513
    %1258 = vmatpush1.msra.mxu0 %v512
    %1259 = vmatprep.subr.mxu0 0.0
    %1260 = vmatpush1.msra.mxu0 0.0
    %1261 = vmatprep.subr.mxu0 0.0
    %1262 = vmatpush1.msra.mxu0 0.0
    %1263 = vmatprep.subr.mxu0 0.0
    %1264 = vmatpush1.msra.mxu0 0.0
    %1265 = vmatprep.subr.mxu0 0.0
    %1266 = vmatpush1.msra.mxu0 0.0
    %1267 = vmatprep.subr.mxu0 0.0
    %1268 = vmatpush1.msra.mxu0 0.0
    %1269 = vmatprep.subr.mxu0 0.0
    %1270 = vmatpush1.msra.mxu0 0.0
    %1271 = vmatprep.subr.mxu0 0.0
    %1272 = vmatpush1.msra.mxu0 0.0
    %1273 = vmatprep.subr.mxu0 0.0
    %1274 = vmatpush1.msra.mxu0 0.0
    %1275 = vmatprep.subr.mxu0 0.0
    %1276 = vmatpush1.msra.mxu0 0.0
    %1277 = vmatprep.subr.mxu0 0.0
    %1278 = vmatpush1.msra.mxu0 0.0
    %1279 = vmatprep.subr.mxu0 0.0
    %1280 = vmatpush1.msra.mxu0 0.0
    %1281 = vmatprep.subr.mxu0 0.0
    %1282 = vmatpush1.msra.mxu0 0.0
    %1283 = vmatprep.subr.mxu0 0.0
    %1284 = vmatpush1.msra.mxu0 0.0
    %1285 = vmatprep.subr.mxu0 0.0
    %1286 = vmatpush1.msra.mxu0 0.0
    %1287 = vmatprep.subr.mxu0 0.0
    %1288 = vmatpush1.msra.mxu0 0.0
    %1289 = vmatprep.subr.mxu0 0.0
    %1290 = vmatpush1.msra.mxu0 0.0
    %1291 = vmatprep.mubr.f32.mxu0 0.0
    %1292 = vmatmul.mubr.f32.gmra.mrb[0].mxu0 %v1226
    %v1293 = vpop.f32.mrb[0].mxu0
    %v1294 = vadd.f32 %v568, %v1293
    %v1295 = vpop.f32.mrb[0].mxu0
    %v1296 = vadd.f32 %v572, %v1295
    %1297 = vdwg.mxu0
    %1298 = vmatprep.subr.mxu0 0.0
    %1299 = vmatpush1.msra.mxu0 %v469
    %1300 = vmatprep.subr.mxu0 0.0
    %1301 = vmatpush1.msra.mxu0 %v472
    %1302 = vmatprep.subr.mxu0 0.0
    %1303 = vmatpush1.msra.mxu0 %v475
    %1304 = vmatprep.subr.mxu0 0.0
    %1305 = vmatpush1.msra.mxu0 %v478
    %1306 = vmatprep.subr.mxu0 0.0
    %1307 = vmatpush1.msra.mxu0 %v481
    %1308 = vmatprep.subr.mxu0 0.0
    %1309 = vmatpush1.msra.mxu0 %v484
    %1310 = vmatprep.subr.mxu0 0.0
    %1311 = vmatpush1.msra.mxu0 %v487
    %1312 = vmatprep.subr.mxu0 0.0
    %1313 = vmatpush1.msra.mxu0 %v490
    %1314 = vmatprep.subr.mxu0 0.0
    %1315 = vmatpush1.msra.mxu0 %v493
    %1316 = vmatprep.subr.mxu0 0.0
    %1317 = vmatpush1.msra.mxu0 %v496
    %1318 = vmatprep.subr.mxu0 0.0
    %1319 = vmatpush1.msra.mxu0 %v499
    %1320 = vmatprep.subr.mxu0 0.0
    %1321 = vmatpush1.msra.mxu0 %v502
    %1322 = vmatprep.subr.mxu0 0.0
    %1323 = vmatpush1.msra.mxu0 %v505
    %1324 = vmatprep.subr.mxu0 0.0
    %1325 = vmatpush1.msra.mxu0 %v508
    %1326 = vmatprep.subr.mxu0 0.0
    %1327 = vmatpush1.msra.mxu0 %v511
    %1328 = vmatprep.subr.mxu0 0.0
    %1329 = vmatpush1.msra.mxu0 %v514
    %1330 = vmatprep.subr.mxu0 0.0
    %1331 = vmatpush1.msra.mxu0 0.0
    %1332 = vmatprep.subr.mxu0 0.0
    %1333 = vmatpush1.msra.mxu0 0.0
    %1334 = vmatprep.subr.mxu0 0.0
    %1335 = vmatpush1.msra.mxu0 0.0
    %1336 = vmatprep.subr.mxu0 0.0
    %1337 = vmatpush1.msra.mxu0 0.0
    %1338 = vmatprep.subr.mxu0 0.0
    %1339 = vmatpush1.msra.mxu0 0.0
    %1340 = vmatprep.subr.mxu0 0.0
    %1341 = vmatpush1.msra.mxu0 0.0
    %1342 = vmatprep.subr.mxu0 0.0
    %1343 = vmatpush1.msra.mxu0 0.0
    %1344 = vmatprep.subr.mxu0 0.0
    %1345 = vmatpush1.msra.mxu0 0.0
    %1346 = vmatprep.subr.mxu0 0.0
    %1347 = vmatpush1.msra.mxu0 0.0
    %1348 = vmatprep.subr.mxu0 0.0
    %1349 = vmatpush1.msra.mxu0 0.0
    %1350 = vmatprep.subr.mxu0 0.0
    %1351 = vmatpush1.msra.mxu0 0.0
    %1352 = vmatprep.subr.mxu0 0.0
    %1353 = vmatpush1.msra.mxu0 0.0
    %1354 = vmatprep.subr.mxu0 0.0
    %1355 = vmatpush1.msra.mxu0 0.0
    %1356 = vmatprep.subr.mxu0 0.0
    %1357 = vmatpush1.msra.mxu0 0.0
    %1358 = vmatprep.subr.mxu0 0.0
    %1359 = vmatpush1.msra.mxu0 0.0
    %1360 = vmatprep.subr.mxu0 0.0
    %1361 = vmatpush1.msra.mxu0 0.0
    %1362 = vmatprep.mubr.f32.mxu0 0.0
    %1363 = vmatmul.mubr.f32.gmra.mrb[0].mxu0 %v1226
    %v1364 = vpop.f32.mrb[0].mxu0
    %v1365 = vadd.f32 %v576, %v1364
    %v1366 = vpop.f32.mrb[0].mxu0
    %1367 = vdwg.mxu0
    %1368 = vmatprep.subr.mxu0 %v516
    %1369 = vmatpush1.msra.mxu0 %v515
    %1370 = vmatprep.subr.mxu0 %v519
    %1371 = vmatpush1.msra.mxu0 %v518
    %1372 = vmatprep.subr.mxu0 %v522
    %1373 = vmatpush1.msra.mxu0 %v521
    %1374 = vmatprep.subr.mxu0 %v525
    %1375 = vmatpush1.msra.mxu0 %v524
    %1376 = vmatprep.subr.mxu0 %v528
    %1377 = vmatpush1.msra.mxu0 %v527
    %1378 = vmatprep.subr.mxu0 %v531
    %1379 = vmatpush1.msra.mxu0 %v530
    %1380 = vmatprep.subr.mxu0 %v534
    %1381 = vmatpush1.msra.mxu0 %v533
    %1382 = vmatprep.subr.mxu0 %v537
    %1383 = vmatpush1.msra.mxu0 %v536
    %1384 = vmatprep.subr.mxu0 %v540
    %1385 = vmatpush1.msra.mxu0 %v539
    %1386 = vmatprep.subr.mxu0 %v543
    %1387 = vmatpush1.msra.mxu0 %v542
    %1388 = vmatprep.subr.mxu0 %v546
    %1389 = vmatpush1.msra.mxu0 %v545
    %1390 = vmatprep.subr.mxu0 %v549
    %1391 = vmatpush1.msra.mxu0 %v548
    %1392 = vmatprep.subr.mxu0 %v552
    %1393 = vmatpush1.msra.mxu0 %v551
    %1394 = vmatprep.subr.mxu0 %v555
    %1395 = vmatpush1.msra.mxu0 %v554
    %1396 = vmatprep.subr.mxu0 %v558
    %1397 = vmatpush1.msra.mxu0 %v557
    %1398 = vmatprep.subr.mxu0 %v561
    %1399 = vmatpush1.msra.mxu0 %v560
    %1400 = vmatprep.subr.mxu0 0.0
    %1401 = vmatpush1.msra.mxu0 0.0
    %1402 = vmatprep.subr.mxu0 0.0
    %1403 = vmatpush1.msra.mxu0 0.0
    %1404 = vmatprep.subr.mxu0 0.0
    %1405 = vmatpush1.msra.mxu0 0.0
    %1406 = vmatprep.subr.mxu0 0.0
    %1407 = vmatpush1.msra.mxu0 0.0
    %1408 = vmatprep.subr.mxu0 0.0
    %1409 = vmatpush1.msra.mxu0 0.0
    %1410 = vmatprep.subr.mxu0 0.0
    %1411 = vmatpush1.msra.mxu0 0.0
    %1412 = vmatprep.subr.mxu0 0.0
    %1413 = vmatpush1.msra.mxu0 0.0
    %1414 = vmatprep.subr.mxu0 0.0
    %1415 = vmatpush1.msra.mxu0 0.0
    %1416 = vmatprep.subr.mxu0 0.0
    %1417 = vmatpush1.msra.mxu0 0.0
    %1418 = vmatprep.subr.mxu0 0.0
    %1419 = vmatpush1.msra.mxu0 0.0
    %1420 = vmatprep.subr.mxu0 0.0
    %1421 = vmatpush1.msra.mxu0 0.0
    %1422 = vmatprep.subr.mxu0 0.0
    %1423 = vmatpush1.msra.mxu0 0.0
    %1424 = vmatprep.subr.mxu0 0.0
    %1425 = vmatpush1.msra.mxu0 0.0
    %1426 = vmatprep.subr.mxu0 0.0
    %1427 = vmatpush1.msra.mxu0 0.0
    %1428 = vmatprep.subr.mxu0 0.0
    %1429 = vmatpush1.msra.mxu0 0.0
    %1430 = vmatprep.subr.mxu0 0.0
    %1431 = vmatpush1.msra.mxu0 0.0
    %1432 = vmatprep.mubr.f32.mxu0 0.0
    %1433 = vmatmul.mubr.f32.gmra.mrb[0].mxu0 %v1061
    %v1434 = vpop.f32.mrb[0].mxu0
    %v1435 = vadd.f32 0.0, %v1434
    %v1436 = vpop.f32.mrb[0].mxu0
    %v1437 = vadd.f32 0.0, %v1436
    %1438 = vdwg.mxu0
    %1439 = vmatprep.subr.mxu0 0.0
    %1440 = vmatpush1.msra.mxu0 %v517
    %1441 = vmatprep.subr.mxu0 0.0
    %1442 = vmatpush1.msra.mxu0 %v520
    %1443 = vmatprep.subr.mxu0 0.0
    %1444 = vmatpush1.msra.mxu0 %v523
    %1445 = vmatprep.subr.mxu0 0.0
    %1446 = vmatpush1.msra.mxu0 %v526
    %1447 = vmatprep.subr.mxu0 0.0
    %1448 = vmatpush1.msra.mxu0 %v529
    %1449 = vmatprep.subr.mxu0 0.0
    %1450 = vmatpush1.msra.mxu0 %v532
    %1451 = vmatprep.subr.mxu0 0.0
    %1452 = vmatpush1.msra.mxu0 %v535
    %1453 = vmatprep.subr.mxu0 0.0
    %1454 = vmatpush1.msra.mxu0 %v538
    %1455 = vmatprep.subr.mxu0 0.0
    %1456 = vmatpush1.msra.mxu0 %v541
    %1457 = vmatprep.subr.mxu0 0.0
    %1458 = vmatpush1.msra.mxu0 %v544
    %1459 = vmatprep.subr.mxu0 0.0
    %1460 = vmatpush1.msra.mxu0 %v547
    %1461 = vmatprep.subr.mxu0 0.0
    %1462 = vmatpush1.msra.mxu0 %v550
    %1463 = vmatprep.subr.mxu0 0.0
    %1464 = vmatpush1.msra.mxu0 %v553
    %1465 = vmatprep.subr.mxu0 0.0
    %1466 = vmatpush1.msra.mxu0 %v556
    %1467 = vmatprep.subr.mxu0 0.0
    %1468 = vmatpush1.msra.mxu0 %v559
    %1469 = vmatprep.subr.mxu0 0.0
    %1470 = vmatpush1.msra.mxu0 %v562
    %1471 = vmatprep.subr.mxu0 0.0
    %1472 = vmatpush1.msra.mxu0 0.0
    %1473 = vmatprep.subr.mxu0 0.0
    %1474 = vmatpush1.msra.mxu0 0.0
    %1475 = vmatprep.subr.mxu0 0.0
    %1476 = vmatpush1.msra.mxu0 0.0
    %1477 = vmatprep.subr.mxu0 0.0
    %1478 = vmatpush1.msra.mxu0 0.0
    %1479 = vmatprep.subr.mxu0 0.0
    %1480 = vmatpush1.msra.mxu0 0.0
    %1481 = vmatprep.subr.mxu0 0.0
    %1482 = vmatpush1.msra.mxu0 0.0
    %1483 = vmatprep.subr.mxu0 0.0
    %1484 = vmatpush1.msra.mxu0 0.0
    %1485 = vmatprep.subr.mxu0 0.0
    %1486 = vmatpush1.msra.mxu0 0.0
    %1487 = vmatprep.subr.mxu0 0.0
    %1488 = vmatpush1.msra.mxu0 0.0
    %1489 = vmatprep.subr.mxu0 0.0
    %1490 = vmatpush1.msra.mxu0 0.0
    %1491 = vmatprep.subr.mxu0 0.0
    %1492 = vmatpush1.msra.mxu0 0.0
    %1493 = vmatprep.subr.mxu0 0.0
    %1494 = vmatpush1.msra.mxu0 0.0
    %1495 = vmatprep.subr.mxu0 0.0
    %1496 = vmatpush1.msra.mxu0 0.0
    %1497 = vmatprep.subr.mxu0 0.0
    %1498 = vmatpush1.msra.mxu0 0.0
    %1499 = vmatprep.subr.mxu0 0.0
    %1500 = vmatpush1.msra.mxu0 0.0
    %1501 = vmatprep.subr.mxu0 0.0
    %1502 = vmatpush1.msra.mxu0 0.0
    %1503 = vmatprep.mubr.f32.mxu0 0.0
    %1504 = vmatmul.mubr.f32.gmra.mrb[0].mxu0 %v1061
    %v1505 = vpop.f32.mrb[0].mxu0
    %v1506 = vadd.f32 0.0, %v1505
    %v1507 = vpop.f32.mrb[0].mxu0
    %1508 = vdwg.mxu0
    %v1509 = vadd.f32 %v1294, %v1435
    %v1510 = vxor.u32 %v1509, 2147483648
    %v1511 = vmul.f32 %v1510, 1.442695
    %v1512 = vpow.pop %v1511
    %v1513 = vadd.f32 %v1512, 1.0
    %v1514 = vrcp.pop %v1513
    %v1515 = vmul.f32 1.0, %v1514
    %v1516 = vadd.f32 %v1296, %v1437
    %v1517 = vxor.u32 %v1516, 2147483648
    %v1518 = vmul.f32 %v1517, 1.442695
    %v1519 = vpow.pop %v1518
    %v1520 = vadd.f32 %v1519, 1.0
    %v1521 = vrcp.pop %v1520
    %v1522 = vmul.f32 1.0, %v1521
    %v1523 = vadd.f32 %v1506, %v592
    %v1524 = vmul.f32 %v1515, %v1523
    %v1525 = vadd.f32 %v1365, %v1524
    %v1526 = vtanh.pop %v1525
    %v1527 = vsub.f32 %v1061, %v1526
    %v1528 = vmul.f32 %v1522, %v1527
    %v1529 = vadd.f32 %v1526, %v1528
    %v1530 = vld [vmem:[#allocation2 + $0x30] sm:$0xff]
    %v1531 = vld [vmem:[#allocation2 + $0x38] sm:$0xff]
    %v1532 = vld [vmem:[#allocation2 + $0x40] sm:$0xff]
    %1533 = vmatprep.subr.mxu0 %v420
    %1534 = vmatpush1.msra.mxu0 %v419
    %1535 = vmatprep.subr.mxu0 %v423
    %1536 = vmatpush1.msra.mxu0 %v422
    %1537 = vmatprep.subr.mxu0 %v426
    %1538 = vmatpush1.msra.mxu0 %v425
    %1539 = vmatprep.subr.mxu0 %v429
    %1540 = vmatpush1.msra.mxu0 %v428
    %1541 = vmatprep.subr.mxu0 %v432
    %1542 = vmatpush1.msra.mxu0 %v431
    %1543 = vmatprep.subr.mxu0 %v435
    %1544 = vmatpush1.msra.mxu0 %v434
    %1545 = vmatprep.subr.mxu0 %v438
    %1546 = vmatpush1.msra.mxu0 %v437
    %1547 = vmatprep.subr.mxu0 %v441
    %1548 = vmatpush1.msra.mxu0 %v440
    %1549 = vmatprep.subr.mxu0 %v444
    %1550 = vmatpush1.msra.mxu0 %v443
    %1551 = vmatprep.subr.mxu0 %v447
    %1552 = vmatpush1.msra.mxu0 %v446
    %1553 = vmatprep.subr.mxu0 %v450
    %1554 = vmatpush1.msra.mxu0 %v449
    %1555 = vmatprep.subr.mxu0 %v453
    %1556 = vmatpush1.msra.mxu0 %v452
    %1557 = vmatprep.subr.mxu0 %v456
    %1558 = vmatpush1.msra.mxu0 %v455
    %1559 = vmatprep.subr.mxu0 %v459
    %1560 = vmatpush1.msra.mxu0 %v458
    %1561 = vmatprep.subr.mxu0 %v462
    %1562 = vmatpush1.msra.mxu0 %v461
    %1563 = vmatprep.subr.mxu0 %v465
    %1564 = vmatpush1.msra.mxu0 %v464
    %1565 = vmatprep.subr.mxu0 0.0
    %1566 = vmatpush1.msra.mxu0 0.0
    %1567 = vmatprep.subr.mxu0 0.0
    %1568 = vmatpush1.msra.mxu0 0.0
    %1569 = vmatprep.subr.mxu0 0.0
    %1570 = vmatpush1.msra.mxu0 0.0
    %1571 = vmatprep.subr.mxu0 0.0
    %1572 = vmatpush1.msra.mxu0 0.0
    %1573 = vmatprep.subr.mxu0 0.0
    %1574 = vmatpush1.msra.mxu0 0.0
    %1575 = vmatprep.subr.mxu0 0.0
    %1576 = vmatpush1.msra.mxu0 0.0
    %1577 = vmatprep.subr.mxu0 0.0
    %1578 = vmatpush1.msra.mxu0 0.0
    %1579 = vmatprep.subr.mxu0 0.0
    %1580 = vmatpush1.msra.mxu0 0.0
    %1581 = vmatprep.subr.mxu0 0.0
    %1582 = vmatpush1.msra.mxu0 0.0
    %1583 = vmatprep.subr.mxu0 0.0
    %1584 = vmatpush1.msra.mxu0 0.0
    %1585 = vmatprep.subr.mxu0 0.0
    %1586 = vmatpush1.msra.mxu0 0.0
    %1587 = vmatprep.subr.mxu0 0.0
    %1588 = vmatpush1.msra.mxu0 0.0
    %1589 = vmatprep.subr.mxu0 0.0
    %1590 = vmatpush1.msra.mxu0 0.0
    %1591 = vmatprep.subr.mxu0 0.0
    %1592 = vmatpush1.msra.mxu0 0.0
    %1593 = vmatprep.subr.mxu0 0.0
    %1594 = vmatpush1.msra.mxu0 0.0
    %1595 = vmatprep.subr.mxu0 0.0
    %1596 = vmatpush1.msra.mxu0 0.0
    %1597 = vmatprep.mubr.f32.mxu0 0.0
    %1598 = vmatmul.mubr.f32.gmra.mrb[0].mxu0 %v1226
    %v1599 = vpop.f32.mrb[0].mxu0
    %v1600 = vadd.f32 0.0, %v1599
    %v1601 = vpop.f32.mrb[0].mxu0
    %v1602 = vadd.f32 0.0, %v1601
    %1603 = vdwg.mxu0
    %1604 = vmatprep.subr.mxu0 0.0
    %1605 = vmatpush1.msra.mxu0 %v421
    %1606 = vmatprep.subr.mxu0 0.0
    %1607 = vmatpush1.msra.mxu0 %v424
    %1608 = vmatprep.subr.mxu0 0.0
    %1609 = vmatpush1.msra.mxu0 %v427
    %1610 = vmatprep.subr.mxu0 0.0
    %1611 = vmatpush1.msra.mxu0 %v430
    %1612 = vmatprep.subr.mxu0 0.0
    %1613 = vmatpush1.msra.mxu0 %v433
    %1614 = vmatprep.subr.mxu0 0.0
    %1615 = vmatpush1.msra.mxu0 %v436
    %1616 = vmatprep.subr.mxu0 0.0
    %1617 = vmatpush1.msra.mxu0 %v439
    %1618 = vmatprep.subr.mxu0 0.0
    %1619 = vmatpush1.msra.mxu0 %v442
    %1620 = vmatprep.subr.mxu0 0.0
    %1621 = vmatpush1.msra.mxu0 %v445
    %1622 = vmatprep.subr.mxu0 0.0
    %1623 = vmatpush1.msra.mxu0 %v448
    %1624 = vmatprep.subr.mxu0 0.0
    %1625 = vmatpush1.msra.mxu0 %v451
    %1626 = vmatprep.subr.mxu0 0.0
    %1627 = vmatpush1.msra.mxu0 %v454
    %1628 = vmatprep.subr.mxu0 0.0
    %1629 = vmatpush1.msra.mxu0 %v457
    %1630 = vmatprep.subr.mxu0 0.0
    %1631 = vmatpush1.msra.mxu0 %v460
    %1632 = vmatprep.subr.mxu0 0.0
    %1633 = vmatpush1.msra.mxu0 %v463
    %1634 = vmatprep.subr.mxu0 0.0
    %1635 = vmatpush1.msra.mxu0 %v466
    %1636 = vmatprep.subr.mxu0 0.0
    %1637 = vmatpush1.msra.mxu0 0.0
    %1638 = vmatprep.subr.mxu0 0.0
    %1639 = vmatpush1.msra.mxu0 0.0
    %1640 = vmatprep.subr.mxu0 0.0
    %1641 = vmatpush1.msra.mxu0 0.0
    %1642 = vmatprep.subr.mxu0 0.0
    %1643 = vmatpush1.msra.mxu0 0.0
    %1644 = vmatprep.subr.mxu0 0.0
    %1645 = vmatpush1.msra.mxu0 0.0
    %1646 = vmatprep.subr.mxu0 0.0
    %1647 = vmatpush1.msra.mxu0 0.0
    %1648 = vmatprep.subr.mxu0 0.0
    %1649 = vmatpush1.msra.mxu0 0.0
    %1650 = vmatprep.subr.mxu0 0.0
    %1651 = vmatpush1.msra.mxu0 0.0
    %1652 = vmatprep.subr.mxu0 0.0
    %1653 = vmatpush1.msra.mxu0 0.0
    %1654 = vmatprep.subr.mxu0 0.0
    %1655 = vmatpush1.msra.mxu0 0.0
    %1656 = vmatprep.subr.mxu0 0.0
    %1657 = vmatpush1.msra.mxu0 0.0
    %1658 = vmatprep.subr.mxu0 0.0
    %1659 = vmatpush1.msra.mxu0 0.0
    %1660 = vmatprep.subr.mxu0 0.0
    %1661 = vmatpush1.msra.mxu0 0.0
    %1662 = vmatprep.subr.mxu0 0.0
    %1663 = vmatpush1.msra.mxu0 0.0
    %1664 = vmatprep.subr.mxu0 0.0
    %1665 = vmatpush1.msra.mxu0 0.0
    %1666 = vmatprep.subr.mxu0 0.0
    %1667 = vmatpush1.msra.mxu0 0.0
    %1668 = vmatprep.mubr.f32.mxu0 0.0
    %1669 = vmatmul.mubr.f32.gmra.mrb[0].mxu0 %v1226
    %v1670 = vpop.f32.mrb[0].mxu0
    %v1671 = vadd.f32 0.0, %v1670
    %v1672 = vpop.f32.mrb[0].mxu0
    %1673 = vdwg.mxu0
    %v1674 = vadd.f32 %v1530, %v1600
    %v1675 = vxor.u32 %v1674, 2147483648
    %v1676 = vmul.f32 %v1675, 1.442695
    %v1677 = vpow.pop %v1676
    %v1678 = vadd.f32 %v1677, 1.0
    %v1679 = vrcp.pop %v1678
    %v1680 = vmul.f32 1.0, %v1679
    %v1681 = vadd.f32 %v1531, %v1602
    %v1682 = vxor.u32 %v1681, 2147483648
    %v1683 = vmul.f32 %v1682, 1.442695
    %v1684 = vpow.pop %v1683
    %v1685 = vadd.f32 %v1684, 1.0
    %v1686 = vrcp.pop %v1685
    %v1687 = vmul.f32 1.0, %v1686
    %v1688 = vadd.f32 %v1671, %v585
    %v1689 = vmul.f32 %v1680, %v1688
    %v1690 = vadd.f32 %v1532, %v1689
    %v1691 = vtanh.pop %v1690
    %v1692 = vsub.f32 %v1226, %v1691
    %v1693 = vmul.f32 %v1687, %v1692
    %v1694 = vadd.f32 %v1691, %v1693
    %1695 = vmatprep.subr.mxu0 %v468
    %1696 = vmatpush1.msra.mxu0 %v467
    %1697 = vmatprep.subr.mxu0 %v471
    %1698 = vmatpush1.msra.mxu0 %v470
    %1699 = vmatprep.subr.mxu0 %v474
    %1700 = vmatpush1.msra.mxu0 %v473
    %1701 = vmatprep.subr.mxu0 %v477
    %1702 = vmatpush1.msra.mxu0 %v476
    %1703 = vmatprep.subr.mxu0 %v480
    %1704 = vmatpush1.msra.mxu0 %v479
    %1705 = vmatprep.subr.mxu0 %v483
    %1706 = vmatpush1.msra.mxu0 %v482
    %1707 = vmatprep.subr.mxu0 %v486
    %1708 = vmatpush1.msra.mxu0 %v485
    %1709 = vmatprep.subr.mxu0 %v489
    %1710 = vmatpush1.msra.mxu0 %v488
    %1711 = vmatprep.subr.mxu0 %v492
    %1712 = vmatpush1.msra.mxu0 %v491
    %1713 = vmatprep.subr.mxu0 %v495
    %1714 = vmatpush1.msra.mxu0 %v494
    %1715 = vmatprep.subr.mxu0 %v498
    %1716 = vmatpush1.msra.mxu0 %v497
    %1717 = vmatprep.subr.mxu0 %v501
    %1718 = vmatpush1.msra.mxu0 %v500
    %1719 = vmatprep.subr.mxu0 %v504
    %1720 = vmatpush1.msra.mxu0 %v503
    %1721 = vmatprep.subr.mxu0 %v507
    %1722 = vmatpush1.msra.mxu0 %v506
    %1723 = vmatprep.subr.mxu0 %v510
    %1724 = vmatpush1.msra.mxu0 %v509
    %1725 = vmatprep.subr.mxu0 %v513
    %1726 = vmatpush1.msra.mxu0 %v512
    %1727 = vmatprep.subr.mxu0 0.0
    %1728 = vmatpush1.msra.mxu0 0.0
    %1729 = vmatprep.subr.mxu0 0.0
    %1730 = vmatpush1.msra.mxu0 0.0
    %1731 = vmatprep.subr.mxu0 0.0
    %1732 = vmatpush1.msra.mxu0 0.0
    %1733 = vmatprep.subr.mxu0 0.0
    %1734 = vmatpush1.msra.mxu0 0.0
    %1735 = vmatprep.subr.mxu0 0.0
    %1736 = vmatpush1.msra.mxu0 0.0
    %1737 = vmatprep.subr.mxu0 0.0
    %1738 = vmatpush1.msra.mxu0 0.0
    %1739 = vmatprep.subr.mxu0 0.0
    %1740 = vmatpush1.msra.mxu0 0.0
    %1741 = vmatprep.subr.mxu0 0.0
    %1742 = vmatpush1.msra.mxu0 0.0
    %1743 = vmatprep.subr.mxu0 0.0
    %1744 = vmatpush1.msra.mxu0 0.0
    %1745 = vmatprep.subr.mxu0 0.0
    %1746 = vmatpush1.msra.mxu0 0.0
    %1747 = vmatprep.subr.mxu0 0.0
    %1748 = vmatpush1.msra.mxu0 0.0
    %1749 = vmatprep.subr.mxu0 0.0
    %1750 = vmatpush1.msra.mxu0 0.0
    %1751 = vmatprep.subr.mxu0 0.0
    %1752 = vmatpush1.msra.mxu0 0.0
    %1753 = vmatprep.subr.mxu0 0.0
    %1754 = vmatpush1.msra.mxu0 0.0
    %1755 = vmatprep.subr.mxu0 0.0
    %1756 = vmatpush1.msra.mxu0 0.0
    %1757 = vmatprep.subr.mxu0 0.0
    %1758 = vmatpush1.msra.mxu0 0.0
    %1759 = vmatprep.mubr.f32.mxu0 0.0
    %1760 = vmatmul.mubr.f32.gmra.mrb[0].mxu0 %v1694
    %v1761 = vpop.f32.mrb[0].mxu0
    %v1762 = vadd.f32 %v568, %v1761
    %v1763 = vpop.f32.mrb[0].mxu0
    %v1764 = vadd.f32 %v572, %v1763
    %1765 = vdwg.mxu0
    %1766 = vmatprep.subr.mxu0 0.0
    %1767 = vmatpush1.msra.mxu0 %v469
    %1768 = vmatprep.subr.mxu0 0.0
    %1769 = vmatpush1.msra.mxu0 %v472
    %1770 = vmatprep.subr.mxu0 0.0
    %1771 = vmatpush1.msra.mxu0 %v475
    %1772 = vmatprep.subr.mxu0 0.0
    %1773 = vmatpush1.msra.mxu0 %v478
    %1774 = vmatprep.subr.mxu0 0.0
    %1775 = vmatpush1.msra.mxu0 %v481
    %1776 = vmatprep.subr.mxu0 0.0
    %1777 = vmatpush1.msra.mxu0 %v484
    %1778 = vmatprep.subr.mxu0 0.0
    %1779 = vmatpush1.msra.mxu0 %v487
    %1780 = vmatprep.subr.mxu0 0.0
    %1781 = vmatpush1.msra.mxu0 %v490
    %1782 = vmatprep.subr.mxu0 0.0
    %1783 = vmatpush1.msra.mxu0 %v493
    %1784 = vmatprep.subr.mxu0 0.0
    %1785 = vmatpush1.msra.mxu0 %v496
    %1786 = vmatprep.subr.mxu0 0.0
    %1787 = vmatpush1.msra.mxu0 %v499
    %1788 = vmatprep.subr.mxu0 0.0
    %1789 = vmatpush1.msra.mxu0 %v502
    %1790 = vmatprep.subr.mxu0 0.0
    %1791 = vmatpush1.msra.mxu0 %v505
    %1792 = vmatprep.subr.mxu0 0.0
    %1793 = vmatpush1.msra.mxu0 %v508
    %1794 = vmatprep.subr.mxu0 0.0
    %1795 = vmatpush1.msra.mxu0 %v511
    %1796 = vmatprep.subr.mxu0 0.0
    %1797 = vmatpush1.msra.mxu0 %v514
    %1798 = vmatprep.subr.mxu0 0.0
    %1799 = vmatpush1.msra.mxu0 0.0
    %1800 = vmatprep.subr.mxu0 0.0
    %1801 = vmatpush1.msra.mxu0 0.0
    %1802 = vmatprep.subr.mxu0 0.0
    %1803 = vmatpush1.msra.mxu0 0.0
    %1804 = vmatprep.subr.mxu0 0.0
    %1805 = vmatpush1.msra.mxu0 0.0
    %1806 = vmatprep.subr.mxu0 0.0
    %1807 = vmatpush1.msra.mxu0 0.0
    %1808 = vmatprep.subr.mxu0 0.0
    %1809 = vmatpush1.msra.mxu0 0.0
    %1810 = vmatprep.subr.mxu0 0.0
    %1811 = vmatpush1.msra.mxu0 0.0
    %1812 = vmatprep.subr.mxu0 0.0
    %1813 = vmatpush1.msra.mxu0 0.0
    %1814 = vmatprep.subr.mxu0 0.0
    %1815 = vmatpush1.msra.mxu0 0.0
    %1816 = vmatprep.subr.mxu0 0.0
    %1817 = vmatpush1.msra.mxu0 0.0
    %1818 = vmatprep.subr.mxu0 0.0
    %1819 = vmatpush1.msra.mxu0 0.0
    %1820 = vmatprep.subr.mxu0 0.0
    %1821 = vmatpush1.msra.mxu0 0.0
    %1822 = vmatprep.subr.mxu0 0.0
    %1823 = vmatpush1.msra.mxu0 0.0
    %1824 = vmatprep.subr.mxu0 0.0
    %1825 = vmatpush1.msra.mxu0 0.0
    %1826 = vmatprep.subr.mxu0 0.0
    %1827 = vmatpush1.msra.mxu0 0.0
    %1828 = vmatprep.subr.mxu0 0.0
    %1829 = vmatpush1.msra.mxu0 0.0
    %1830 = vmatprep.mubr.f32.mxu0 0.0
    %1831 = vmatmul.mubr.f32.gmra.mrb[0].mxu0 %v1694
    %v1832 = vpop.f32.mrb[0].mxu0
    %v1833 = vadd.f32 %v576, %v1832
    %v1834 = vpop.f32.mrb[0].mxu0
    %1835 = vdwg.mxu0
    %1836 = vmatprep.subr.mxu0 %v516
    %1837 = vmatpush1.msra.mxu0 %v515
    %1838 = vmatprep.subr.mxu0 %v519
    %1839 = vmatpush1.msra.mxu0 %v518
    %1840 = vmatprep.subr.mxu0 %v522
    %1841 = vmatpush1.msra.mxu0 %v521
    %1842 = vmatprep.subr.mxu0 %v525
    %1843 = vmatpush1.msra.mxu0 %v524
    %1844 = vmatprep.subr.mxu0 %v528
    %1845 = vmatpush1.msra.mxu0 %v527
    %1846 = vmatprep.subr.mxu0 %v531
    %1847 = vmatpush1.msra.mxu0 %v530
    %1848 = vmatprep.subr.mxu0 %v534
    %1849 = vmatpush1.msra.mxu0 %v533
    %1850 = vmatprep.subr.mxu0 %v537
    %1851 = vmatpush1.msra.mxu0 %v536
    %1852 = vmatprep.subr.mxu0 %v540
    %1853 = vmatpush1.msra.mxu0 %v539
    %1854 = vmatprep.subr.mxu0 %v543
    %1855 = vmatpush1.msra.mxu0 %v542
    %1856 = vmatprep.subr.mxu0 %v546
    %1857 = vmatpush1.msra.mxu0 %v545
    %1858 = vmatprep.subr.mxu0 %v549
    %1859 = vmatpush1.msra.mxu0 %v548
    %1860 = vmatprep.subr.mxu0 %v552
    %1861 = vmatpush1.msra.mxu0 %v551
    %1862 = vmatprep.subr.mxu0 %v555
    %1863 = vmatpush1.msra.mxu0 %v554
    %1864 = vmatprep.subr.mxu0 %v558
    %1865 = vmatpush1.msra.mxu0 %v557
    %1866 = vmatprep.subr.mxu0 %v561
    %1867 = vmatpush1.msra.mxu0 %v560
    %1868 = vmatprep.subr.mxu0 0.0
    %1869 = vmatpush1.msra.mxu0 0.0
    %1870 = vmatprep.subr.mxu0 0.0
    %1871 = vmatpush1.msra.mxu0 0.0
    %1872 = vmatprep.subr.mxu0 0.0
    %1873 = vmatpush1.msra.mxu0 0.0
    %1874 = vmatprep.subr.mxu0 0.0
    %1875 = vmatpush1.msra.mxu0 0.0
    %1876 = vmatprep.subr.mxu0 0.0
    %1877 = vmatpush1.msra.mxu0 0.0
    %1878 = vmatprep.subr.mxu0 0.0
    %1879 = vmatpush1.msra.mxu0 0.0
    %1880 = vmatprep.subr.mxu0 0.0
    %1881 = vmatpush1.msra.mxu0 0.0
    %1882 = vmatprep.subr.mxu0 0.0
    %1883 = vmatpush1.msra.mxu0 0.0
    %1884 = vmatprep.subr.mxu0 0.0
    %1885 = vmatpush1.msra.mxu0 0.0
    %1886 = vmatprep.subr.mxu0 0.0
    %1887 = vmatpush1.msra.mxu0 0.0
    %1888 = vmatprep.subr.mxu0 0.0
    %1889 = vmatpush1.msra.mxu0 0.0
    %1890 = vmatprep.subr.mxu0 0.0
    %1891 = vmatpush1.msra.mxu0 0.0
    %1892 = vmatprep.subr.mxu0 0.0
    %1893 = vmatpush1.msra.mxu0 0.0
    %1894 = vmatprep.subr.mxu0 0.0
    %1895 = vmatpush1.msra.mxu0 0.0
    %1896 = vmatprep.subr.mxu0 0.0
    %1897 = vmatpush1.msra.mxu0 0.0
    %1898 = vmatprep.subr.mxu0 0.0
    %1899 = vmatpush1.msra.mxu0 0.0
    %1900 = vmatprep.mubr.f32.mxu0 0.0
    %1901 = vmatmul.mubr.f32.gmra.mrb[0].mxu0 %v1529
    %v1902 = vpop.f32.mrb[0].mxu0
    %v1903 = vadd.f32 0.0, %v1902
    %v1904 = vpop.f32.mrb[0].mxu0
    %v1905 = vadd.f32 0.0, %v1904
    %1906 = vdwg.mxu0
    %1907 = vmatprep.subr.mxu0 0.0
    %1908 = vmatpush1.msra.mxu0 %v517
    %1909 = vmatprep.subr.mxu0 0.0
    %1910 = vmatpush1.msra.mxu0 %v520
    %1911 = vmatprep.subr.mxu0 0.0
    %1912 = vmatpush1.msra.mxu0 %v523
    %1913 = vmatprep.subr.mxu0 0.0
    %1914 = vmatpush1.msra.mxu0 %v526
    %1915 = vmatprep.subr.mxu0 0.0
    %1916 = vmatpush1.msra.mxu0 %v529
    %1917 = vmatprep.subr.mxu0 0.0
    %1918 = vmatpush1.msra.mxu0 %v532
    %1919 = vmatprep.subr.mxu0 0.0
    %1920 = vmatpush1.msra.mxu0 %v535
    %1921 = vmatprep.subr.mxu0 0.0
    %1922 = vmatpush1.msra.mxu0 %v538
    %1923 = vmatprep.subr.mxu0 0.0
    %1924 = vmatpush1.msra.mxu0 %v541
    %1925 = vmatprep.subr.mxu0 0.0
    %1926 = vmatpush1.msra.mxu0 %v544
    %1927 = vmatprep.subr.mxu0 0.0
    %1928 = vmatpush1.msra.mxu0 %v547
    %1929 = vmatprep.subr.mxu0 0.0
    %1930 = vmatpush1.msra.mxu0 %v550
    %1931 = vmatprep.subr.mxu0 0.0
    %1932 = vmatpush1.msra.mxu0 %v553
    %1933 = vmatprep.subr.mxu0 0.0
    %1934 = vmatpush1.msra.mxu0 %v556
    %1935 = vmatprep.subr.mxu0 0.0
    %1936 = vmatpush1.msra.mxu0 %v559
    %1937 = vmatprep.subr.mxu0 0.0
    %1938 = vmatpush1.msra.mxu0 %v562
    %1939 = vmatprep.subr.mxu0 0.0
    %1940 = vmatpush1.msra.mxu0 0.0
    %1941 = vmatprep.subr.mxu0 0.0
    %1942 = vmatpush1.msra.mxu0 0.0
    %1943 = vmatprep.subr.mxu0 0.0
    %1944 = vmatpush1.msra.mxu0 0.0
    %1945 = vmatprep.subr.mxu0 0.0
    %1946 = vmatpush1.msra.mxu0 0.0
    %1947 = vmatprep.subr.mxu0 0.0
    %1948 = vmatpush1.msra.mxu0 0.0
    %1949 = vmatprep.subr.mxu0 0.0
    %1950 = vmatpush1.msra.mxu0 0.0
    %1951 = vmatprep.subr.mxu0 0.0
    %1952 = vmatpush1.msra.mxu0 0.0
    %1953 = vmatprep.subr.mxu0 0.0
    %1954 = vmatpush1.msra.mxu0 0.0
    %1955 = vmatprep.subr.mxu0 0.0
    %1956 = vmatpush1.msra.mxu0 0.0
    %1957 = vmatprep.subr.mxu0 0.0
    %1958 = vmatpush1.msra.mxu0 0.0
    %1959 = vmatprep.subr.mxu0 0.0
    %1960 = vmatpush1.msra.mxu0 0.0
    %1961 = vmatprep.subr.mxu0 0.0
    %1962 = vmatpush1.msra.mxu0 0.0
    %1963 = vmatprep.subr.mxu0 0.0
    %1964 = vmatpush1.msra.mxu0 0.0
    %1965 = vmatprep.subr.mxu0 0.0
    %1966 = vmatpush1.msra.mxu0 0.0
    %1967 = vmatprep.subr.mxu0 0.0
    %1968 = vmatpush1.msra.mxu0 0.0
    %1969 = vmatprep.subr.mxu0 0.0
    %1970 = vmatpush1.msra.mxu0 0.0
    %1971 = vmatprep.mubr.f32.mxu0 0.0
    %1972 = vmatmul.mubr.f32.gmra.mrb[0].mxu0 %v1529
    %v1973 = vpop.f32.mrb[0].mxu0
    %v1974 = vadd.f32 0.0, %v1973
    %v1975 = vpop.f32.mrb[0].mxu0
    %1976 = vdwg.mxu0
    %v1977 = vadd.f32 %v1762, %v1903
    %v1978 = vxor.u32 %v1977, 2147483648
    %v1979 = vmul.f32 %v1978, 1.442695
    %v1980 = vpow.pop %v1979
    %v1981 = vadd.f32 %v1980, 1.0
    %v1982 = vrcp.pop %v1981
    %v1983 = vmul.f32 1.0, %v1982
    %v1984 = vadd.f32 %v1764, %v1905
    %v1985 = vxor.u32 %v1984, 2147483648
    %v1986 = vmul.f32 %v1985, 1.442695
    %v1987 = vpow.pop %v1986
    %v1988 = vadd.f32 %v1987, 1.0
    %v1989 = vrcp.pop %v1988
    %v1990 = vmul.f32 1.0, %v1989
    %v1991 = vadd.f32 %v1974, %v592
    %v1992 = vmul.f32 %v1983, %v1991
    %v1993 = vadd.f32 %v1833, %v1992
    %v1994 = vtanh.pop %v1993
    %v1995 = vsub.f32 %v1529, %v1994
    %v1996 = vmul.f32 %v1990, %v1995
    %v1997 = vadd.f32 %v1994, %v1996
    %v1998 = vld [vmem:[#allocation2 + $0x48] sm:$0xff]
    %v1999 = vld [vmem:[#allocation2 + $0x50] sm:$0xff]
    %v2000 = vld [vmem:[#allocation2 + $0x58] sm:$0xff]
    %2001 = vmatprep.subr.mxu0 %v420
    %2002 = vmatpush1.msra.mxu0 %v419
    %2003 = vmatprep.subr.mxu0 %v423
    %2004 = vmatpush1.msra.mxu0 %v422
    %2005 = vmatprep.subr.mxu0 %v426
    %2006 = vmatpush1.msra.mxu0 %v425
    %2007 = vmatprep.subr.mxu0 %v429
    %2008 = vmatpush1.msra.mxu0 %v428
    %2009 = vmatprep.subr.mxu0 %v432
    %2010 = vmatpush1.msra.mxu0 %v431
    %2011 = vmatprep.subr.mxu0 %v435
    %2012 = vmatpush1.msra.mxu0 %v434
    %2013 = vmatprep.subr.mxu0 %v438
    %2014 = vmatpush1.msra.mxu0 %v437
    %2015 = vmatprep.subr.mxu0 %v441
    %2016 = vmatpush1.msra.mxu0 %v440
    %2017 = vmatprep.subr.mxu0 %v444
    %2018 = vmatpush1.msra.mxu0 %v443
    %2019 = vmatprep.subr.mxu0 %v447
    %2020 = vmatpush1.msra.mxu0 %v446
    %2021 = vmatprep.subr.mxu0 %v450
    %2022 = vmatpush1.msra.mxu0 %v449
    %2023 = vmatprep.subr.mxu0 %v453
    %2024 = vmatpush1.msra.mxu0 %v452
    %2025 = vmatprep.subr.mxu0 %v456
    %2026 = vmatpush1.msra.mxu0 %v455
    %2027 = vmatprep.subr.mxu0 %v459
    %2028 = vmatpush1.msra.mxu0 %v458
    %2029 = vmatprep.subr.mxu0 %v462
    %2030 = vmatpush1.msra.mxu0 %v461
    %2031 = vmatprep.subr.mxu0 %v465
    %2032 = vmatpush1.msra.mxu0 %v464
    %2033 = vmatprep.subr.mxu0 0.0
    %2034 = vmatpush1.msra.mxu0 0.0
    %2035 = vmatprep.subr.mxu0 0.0
    %2036 = vmatpush1.msra.mxu0 0.0
    %2037 = vmatprep.subr.mxu0 0.0
    %2038 = vmatpush1.msra.mxu0 0.0
    %2039 = vmatprep.subr.mxu0 0.0
    %2040 = vmatpush1.msra.mxu0 0.0
    %2041 = vmatprep.subr.mxu0 0.0
    %2042 = vmatpush1.msra.mxu0 0.0
    %2043 = vmatprep.subr.mxu0 0.0
    %2044 = vmatpush1.msra.mxu0 0.0
    %2045 = vmatprep.subr.mxu0 0.0
    %2046 = vmatpush1.msra.mxu0 0.0
    %2047 = vmatprep.subr.mxu0 0.0
    %2048 = vmatpush1.msra.mxu0 0.0
    %2049 = vmatprep.subr.mxu0 0.0
    %2050 = vmatpush1.msra.mxu0 0.0
    %2051 = vmatprep.subr.mxu0 0.0
    %2052 = vmatpush1.msra.mxu0 0.0
    %2053 = vmatprep.subr.mxu0 0.0
    %2054 = vmatpush1.msra.mxu0 0.0
    %2055 = vmatprep.subr.mxu0 0.0
    %2056 = vmatpush1.msra.mxu0 0.0
    %2057 = vmatprep.subr.mxu0 0.0
    %2058 = vmatpush1.msra.mxu0 0.0
    %2059 = vmatprep.subr.mxu0 0.0
    %2060 = vmatpush1.msra.mxu0 0.0
    %2061 = vmatprep.subr.mxu0 0.0
    %2062 = vmatpush1.msra.mxu0 0.0
    %2063 = vmatprep.subr.mxu0 0.0
    %2064 = vmatpush1.msra.mxu0 0.0
    %2065 = vmatprep.mubr.f32.mxu0 0.0
    %2066 = vmatmul.mubr.f32.gmra.mrb[0].mxu0 %v1694
    %v2067 = vpop.f32.mrb[0].mxu0
    %v2068 = vadd.f32 0.0, %v2067
    %v2069 = vpop.f32.mrb[0].mxu0
    %v2070 = vadd.f32 0.0, %v2069
    %2071 = vdwg.mxu0
    %2072 = vmatprep.subr.mxu0 0.0
    %2073 = vmatpush1.msra.mxu0 %v421
    %2074 = vmatprep.subr.mxu0 0.0
    %2075 = vmatpush1.msra.mxu0 %v424
    %2076 = vmatprep.subr.mxu0 0.0
    %2077 = vmatpush1.msra.mxu0 %v427
    %2078 = vmatprep.subr.mxu0 0.0
    %2079 = vmatpush1.msra.mxu0 %v430
    %2080 = vmatprep.subr.mxu0 0.0
    %2081 = vmatpush1.msra.mxu0 %v433
    %2082 = vmatprep.subr.mxu0 0.0
    %2083 = vmatpush1.msra.mxu0 %v436
    %2084 = vmatprep.subr.mxu0 0.0
    %2085 = vmatpush1.msra.mxu0 %v439
    %2086 = vmatprep.subr.mxu0 0.0
    %2087 = vmatpush1.msra.mxu0 %v442
    %2088 = vmatprep.subr.mxu0 0.0
    %2089 = vmatpush1.msra.mxu0 %v445
    %2090 = vmatprep.subr.mxu0 0.0
    %2091 = vmatpush1.msra.mxu0 %v448
    %2092 = vmatprep.subr.mxu0 0.0
    %2093 = vmatpush1.msra.mxu0 %v451
    %2094 = vmatprep.subr.mxu0 0.0
    %2095 = vmatpush1.msra.mxu0 %v454
    %2096 = vmatprep.subr.mxu0 0.0
    %2097 = vmatpush1.msra.mxu0 %v457
    %2098 = vmatprep.subr.mxu0 0.0
    %2099 = vmatpush1.msra.mxu0 %v460
    %2100 = vmatprep.subr.mxu0 0.0
    %2101 = vmatpush1.msra.mxu0 %v463
    %2102 = vmatprep.subr.mxu0 0.0
    %2103 = vmatpush1.msra.mxu0 %v466
    %2104 = vmatprep.subr.mxu0 0.0
    %2105 = vmatpush1.msra.mxu0 0.0
    %2106 = vmatprep.subr.mxu0 0.0
    %2107 = vmatpush1.msra.mxu0 0.0
    %2108 = vmatprep.subr.mxu0 0.0
    %2109 = vmatpush1.msra.mxu0 0.0
    %2110 = vmatprep.subr.mxu0 0.0
    %2111 = vmatpush1.msra.mxu0 0.0
    %2112 = vmatprep.subr.mxu0 0.0
    %2113 = vmatpush1.msra.mxu0 0.0
    %2114 = vmatprep.subr.mxu0 0.0
    %2115 = vmatpush1.msra.mxu0 0.0
    %2116 = vmatprep.subr.mxu0 0.0
    %2117 = vmatpush1.msra.mxu0 0.0
    %2118 = vmatprep.subr.mxu0 0.0
    %2119 = vmatpush1.msra.mxu0 0.0
    %2120 = vmatprep.subr.mxu0 0.0
    %2121 = vmatpush1.msra.mxu0 0.0
    %2122 = vmatprep.subr.mxu0 0.0
    %2123 = vmatpush1.msra.mxu0 0.0
    %2124 = vmatprep.subr.mxu0 0.0
    %2125 = vmatpush1.msra.mxu0 0.0
    %2126 = vmatprep.subr.mxu0 0.0
    %2127 = vmatpush1.msra.mxu0 0.0
    %2128 = vmatprep.subr.mxu0 0.0
    %2129 = vmatpush1.msra.mxu0 0.0
    %2130 = vmatprep.subr.mxu0 0.0
    %2131 = vmatpush1.msra.mxu0 0.0
    %2132 = vmatprep.subr.mxu0 0.0
    %2133 = vmatpush1.msra.mxu0 0.0
    %2134 = vmatprep.subr.mxu0 0.0
    %2135 = vmatpush1.msra.mxu0 0.0
    %2136 = vmatprep.mubr.f32.mxu0 0.0
    %2137 = vmatmul.mubr.f32.gmra.mrb[0].mxu0 %v1694
    %v2138 = vpop.f32.mrb[0].mxu0
    %v2139 = vadd.f32 0.0, %v2138
    %v2140 = vpop.f32.mrb[0].mxu0
    %2141 = vdwg.mxu0
    %v2142 = vadd.f32 %v1998, %v2068
    %v2143 = vxor.u32 %v2142, 2147483648
    %v2144 = vmul.f32 %v2143, 1.442695
    %v2145 = vpow.pop %v2144
    %v2146 = vadd.f32 %v2145, 1.0
    %v2147 = vrcp.pop %v2146
    %v2148 = vmul.f32 1.0, %v2147
    %v2149 = vadd.f32 %v1999, %v2070
    %v2150 = vxor.u32 %v2149, 2147483648
    %v2151 = vmul.f32 %v2150, 1.442695
    %v2152 = vpow.pop %v2151
    %v2153 = vadd.f32 %v2152, 1.0
    %v2154 = vrcp.pop %v2153
    %v2155 = vmul.f32 1.0, %v2154
    %v2156 = vadd.f32 %v2139, %v585
    %v2157 = vmul.f32 %v2148, %v2156
    %v2158 = vadd.f32 %v2000, %v2157
    %v2159 = vtanh.pop %v2158
    %v2160 = vsub.f32 %v1694, %v2159
    %v2161 = vmul.f32 %v2155, %v2160
    %v2162 = vadd.f32 %v2159, %v2161
    %2163 = vmatprep.subr.mxu0 %v468
    %2164 = vmatpush1.msra.mxu0 %v467
    %2165 = vmatprep.subr.mxu0 %v471
    %2166 = vmatpush1.msra.mxu0 %v470
    %2167 = vmatprep.subr.mxu0 %v474
    %2168 = vmatpush1.msra.mxu0 %v473
    %2169 = vmatprep.subr.mxu0 %v477
    %2170 = vmatpush1.msra.mxu0 %v476
    %2171 = vmatprep.subr.mxu0 %v480
    %2172 = vmatpush1.msra.mxu0 %v479
    %2173 = vmatprep.subr.mxu0 %v483
    %2174 = vmatpush1.msra.mxu0 %v482
    %2175 = vmatprep.subr.mxu0 %v486
    %2176 = vmatpush1.msra.mxu0 %v485
    %2177 = vmatprep.subr.mxu0 %v489
    %2178 = vmatpush1.msra.mxu0 %v488
    %2179 = vmatprep.subr.mxu0 %v492
    %2180 = vmatpush1.msra.mxu0 %v491
    %2181 = vmatprep.subr.mxu0 %v495
    %2182 = vmatpush1.msra.mxu0 %v494
    %2183 = vmatprep.subr.mxu0 %v498
    %2184 = vmatpush1.msra.mxu0 %v497
    %2185 = vmatprep.subr.mxu0 %v501
    %2186 = vmatpush1.msra.mxu0 %v500
    %2187 = vmatprep.subr.mxu0 %v504
    %2188 = vmatpush1.msra.mxu0 %v503
    %2189 = vmatprep.subr.mxu0 %v507
    %2190 = vmatpush1.msra.mxu0 %v506
    %2191 = vmatprep.subr.mxu0 %v510
    %2192 = vmatpush1.msra.mxu0 %v509
    %2193 = vmatprep.subr.mxu0 %v513
    %2194 = vmatpush1.msra.mxu0 %v512
    %2195 = vmatprep.subr.mxu0 0.0
    %2196 = vmatpush1.msra.mxu0 0.0
    %2197 = vmatprep.subr.mxu0 0.0
    %2198 = vmatpush1.msra.mxu0 0.0
    %2199 = vmatprep.subr.mxu0 0.0
    %2200 = vmatpush1.msra.mxu0 0.0
    %2201 = vmatprep.subr.mxu0 0.0
    %2202 = vmatpush1.msra.mxu0 0.0
    %2203 = vmatprep.subr.mxu0 0.0
    %2204 = vmatpush1.msra.mxu0 0.0
    %2205 = vmatprep.subr.mxu0 0.0
    %2206 = vmatpush1.msra.mxu0 0.0
    %2207 = vmatprep.subr.mxu0 0.0
    %2208 = vmatpush1.msra.mxu0 0.0
    %2209 = vmatprep.subr.mxu0 0.0
    %2210 = vmatpush1.msra.mxu0 0.0
    %2211 = vmatprep.subr.mxu0 0.0
    %2212 = vmatpush1.msra.mxu0 0.0
    %2213 = vmatprep.subr.mxu0 0.0
    %2214 = vmatpush1.msra.mxu0 0.0
    %2215 = vmatprep.subr.mxu0 0.0
    %2216 = vmatpush1.msra.mxu0 0.0
    %2217 = vmatprep.subr.mxu0 0.0
    %2218 = vmatpush1.msra.mxu0 0.0
    %2219 = vmatprep.subr.mxu0 0.0
    %2220 = vmatpush1.msra.mxu0 0.0
    %2221 = vmatprep.subr.mxu0 0.0
    %2222 = vmatpush1.msra.mxu0 0.0
    %2223 = vmatprep.subr.mxu0 0.0
    %2224 = vmatpush1.msra.mxu0 0.0
    %2225 = vmatprep.subr.mxu0 0.0
    %2226 = vmatpush1.msra.mxu0 0.0
    %2227 = vmatprep.mubr.f32.mxu0 0.0
    %2228 = vmatmul.mubr.f32.gmra.mrb[0].mxu0 %v2162
    %v2229 = vpop.f32.mrb[0].mxu0
    %v2230 = vadd.f32 %v568, %v2229
    %v2231 = vpop.f32.mrb[0].mxu0
    %v2232 = vadd.f32 %v572, %v2231
    %2233 = vdwg.mxu0
    %2234 = vmatprep.subr.mxu0 0.0
    %2235 = vmatpush1.msra.mxu0 %v469
    %2236 = vmatprep.subr.mxu0 0.0
    %2237 = vmatpush1.msra.mxu0 %v472
    %2238 = vmatprep.subr.mxu0 0.0
    %2239 = vmatpush1.msra.mxu0 %v475
    %2240 = vmatprep.subr.mxu0 0.0
    %2241 = vmatpush1.msra.mxu0 %v478
    %2242 = vmatprep.subr.mxu0 0.0
    %2243 = vmatpush1.msra.mxu0 %v481
    %2244 = vmatprep.subr.mxu0 0.0
    %2245 = vmatpush1.msra.mxu0 %v484
    %2246 = vmatprep.subr.mxu0 0.0
    %2247 = vmatpush1.msra.mxu0 %v487
    %2248 = vmatprep.subr.mxu0 0.0
    %2249 = vmatpush1.msra.mxu0 %v490
    %2250 = vmatprep.subr.mxu0 0.0
    %2251 = vmatpush1.msra.mxu0 %v493
    %2252 = vmatprep.subr.mxu0 0.0
    %2253 = vmatpush1.msra.mxu0 %v496
    %2254 = vmatprep.subr.mxu0 0.0
    %2255 = vmatpush1.msra.mxu0 %v499
    %2256 = vmatprep.subr.mxu0 0.0
    %2257 = vmatpush1.msra.mxu0 %v502
    %2258 = vmatprep.subr.mxu0 0.0
    %2259 = vmatpush1.msra.mxu0 %v505
    %2260 = vmatprep.subr.mxu0 0.0
    %2261 = vmatpush1.msra.mxu0 %v508
    %2262 = vmatprep.subr.mxu0 0.0
    %2263 = vmatpush1.msra.mxu0 %v511
    %2264 = vmatprep.subr.mxu0 0.0
    %2265 = vmatpush1.msra.mxu0 %v514
    %2266 = vmatprep.subr.mxu0 0.0
    %2267 = vmatpush1.msra.mxu0 0.0
    %2268 = vmatprep.subr.mxu0 0.0
    %2269 = vmatpush1.msra.mxu0 0.0
    %2270 = vmatprep.subr.mxu0 0.0
    %2271 = vmatpush1.msra.mxu0 0.0
    %2272 = vmatprep.subr.mxu0 0.0
    %2273 = vmatpush1.msra.mxu0 0.0
    %2274 = vmatprep.subr.mxu0 0.0
    %2275 = vmatpush1.msra.mxu0 0.0
    %2276 = vmatprep.subr.mxu0 0.0
    %2277 = vmatpush1.msra.mxu0 0.0
    %2278 = vmatprep.subr.mxu0 0.0
    %2279 = vmatpush1.msra.mxu0 0.0
    %2280 = vmatprep.subr.mxu0 0.0
    %2281 = vmatpush1.msra.mxu0 0.0
    %2282 = vmatprep.subr.mxu0 0.0
    %2283 = vmatpush1.msra.mxu0 0.0
    %2284 = vmatprep.subr.mxu0 0.0
    %2285 = vmatpush1.msra.mxu0 0.0
    %2286 = vmatprep.subr.mxu0 0.0
    %2287 = vmatpush1.msra.mxu0 0.0
    %2288 = vmatprep.subr.mxu0 0.0
    %2289 = vmatpush1.msra.mxu0 0.0
    %2290 = vmatprep.subr.mxu0 0.0
    %2291 = vmatpush1.msra.mxu0 0.0
    %2292 = vmatprep.subr.mxu0 0.0
    %2293 = vmatpush1.msra.mxu0 0.0
    %2294 = vmatprep.subr.mxu0 0.0
    %2295 = vmatpush1.msra.mxu0 0.0
    %2296 = vmatprep.subr.mxu0 0.0
    %2297 = vmatpush1.msra.mxu0 0.0
    %2298 = vmatprep.mubr.f32.mxu0 0.0
    %2299 = vmatmul.mubr.f32.gmra.mrb[0].mxu0 %v2162
    %v2300 = vpop.f32.mrb[0].mxu0
    %v2301 = vadd.f32 %v576, %v2300
    %v2302 = vpop.f32.mrb[0].mxu0
    %2303 = vdwg.mxu0
    %2304 = vmatprep.subr.mxu0 %v516
    %2305 = vmatpush1.msra.mxu0 %v515
    %2306 = vmatprep.subr.mxu0 %v519
    %2307 = vmatpush1.msra.mxu0 %v518
    %2308 = vmatprep.subr.mxu0 %v522
    %2309 = vmatpush1.msra.mxu0 %v521
    %2310 = vmatprep.subr.mxu0 %v525
    %2311 = vmatpush1.msra.mxu0 %v524
    %2312 = vmatprep.subr.mxu0 %v528
    %2313 = vmatpush1.msra.mxu0 %v527
    %2314 = vmatprep.subr.mxu0 %v531
    %2315 = vmatpush1.msra.mxu0 %v530
    %2316 = vmatprep.subr.mxu0 %v534
    %2317 = vmatpush1.msra.mxu0 %v533
    %2318 = vmatprep.subr.mxu0 %v537
    %2319 = vmatpush1.msra.mxu0 %v536
    %2320 = vmatprep.subr.mxu0 %v540
    %2321 = vmatpush1.msra.mxu0 %v539
    %2322 = vmatprep.subr.mxu0 %v543
    %2323 = vmatpush1.msra.mxu0 %v542
    %2324 = vmatprep.subr.mxu0 %v546
    %2325 = vmatpush1.msra.mxu0 %v545
    %2326 = vmatprep.subr.mxu0 %v549
    %2327 = vmatpush1.msra.mxu0 %v548
    %2328 = vmatprep.subr.mxu0 %v552
    %2329 = vmatpush1.msra.mxu0 %v551
    %2330 = vmatprep.subr.mxu0 %v555
    %2331 = vmatpush1.msra.mxu0 %v554
    %2332 = vmatprep.subr.mxu0 %v558
    %2333 = vmatpush1.msra.mxu0 %v557
    %2334 = vmatprep.subr.mxu0 %v561
    %2335 = vmatpush1.msra.mxu0 %v560
    %2336 = vmatprep.subr.mxu0 0.0
    %2337 = vmatpush1.msra.mxu0 0.0
    %2338 = vmatprep.subr.mxu0 0.0
    %2339 = vmatpush1.msra.mxu0 0.0
    %2340 = vmatprep.subr.mxu0 0.0
    %2341 = vmatpush1.msra.mxu0 0.0
    %2342 = vmatprep.subr.mxu0 0.0
    %2343 = vmatpush1.msra.mxu0 0.0
    %2344 = vmatprep.subr.mxu0 0.0
    %2345 = vmatpush1.msra.mxu0 0.0
    %2346 = vmatprep.subr.mxu0 0.0
    %2347 = vmatpush1.msra.mxu0 0.0
    %2348 = vmatprep.subr.mxu0 0.0
    %2349 = vmatpush1.msra.mxu0 0.0
    %2350 = vmatprep.subr.mxu0 0.0
    %2351 = vmatpush1.msra.mxu0 0.0
    %2352 = vmatprep.subr.mxu0 0.0
    %2353 = vmatpush1.msra.mxu0 0.0
    %2354 = vmatprep.subr.mxu0 0.0
    %2355 = vmatpush1.msra.mxu0 0.0
    %2356 = vmatprep.subr.mxu0 0.0
    %2357 = vmatpush1.msra.mxu0 0.0
    %2358 = vmatprep.subr.mxu0 0.0
    %2359 = vmatpush1.msra.mxu0 0.0
    %2360 = vmatprep.subr.mxu0 0.0
    %2361 = vmatpush1.msra.mxu0 0.0
    %2362 = vmatprep.subr.mxu0 0.0
    %2363 = vmatpush1.msra.mxu0 0.0
    %2364 = vmatprep.subr.mxu0 0.0
    %2365 = vmatpush1.msra.mxu0 0.0
    %2366 = vmatprep.subr.mxu0 0.0
    %2367 = vmatpush1.msra.mxu0 0.0
    %2368 = vmatprep.mubr.f32.mxu0 0.0
    %2369 = vmatmul.mubr.f32.gmra.mrb[0].mxu0 %v1997
    %v2370 = vpop.f32.mrb[0].mxu0
    %v2371 = vadd.f32 0.0, %v2370
    %v2372 = vpop.f32.mrb[0].mxu0
    %v2373 = vadd.f32 0.0, %v2372
    %2374 = vdwg.mxu0
    %2375 = vmatprep.subr.mxu0 0.0
    %2376 = vmatpush1.msra.mxu0 %v517
    %2377 = vmatprep.subr.mxu0 0.0
    %2378 = vmatpush1.msra.mxu0 %v520
    %2379 = vmatprep.subr.mxu0 0.0
    %2380 = vmatpush1.msra.mxu0 %v523
    %2381 = vmatprep.subr.mxu0 0.0
    %2382 = vmatpush1.msra.mxu0 %v526
    %2383 = vmatprep.subr.mxu0 0.0
    %2384 = vmatpush1.msra.mxu0 %v529
    %2385 = vmatprep.subr.mxu0 0.0
    %2386 = vmatpush1.msra.mxu0 %v532
    %2387 = vmatprep.subr.mxu0 0.0
    %2388 = vmatpush1.msra.mxu0 %v535
    %2389 = vmatprep.subr.mxu0 0.0
    %2390 = vmatpush1.msra.mxu0 %v538
    %2391 = vmatprep.subr.mxu0 0.0
    %2392 = vmatpush1.msra.mxu0 %v541
    %2393 = vmatprep.subr.mxu0 0.0
    %2394 = vmatpush1.msra.mxu0 %v544
    %2395 = vmatprep.subr.mxu0 0.0
    %2396 = vmatpush1.msra.mxu0 %v547
    %2397 = vmatprep.subr.mxu0 0.0
    %2398 = vmatpush1.msra.mxu0 %v550
    %2399 = vmatprep.subr.mxu0 0.0
    %2400 = vmatpush1.msra.mxu0 %v553
    %2401 = vmatprep.subr.mxu0 0.0
    %2402 = vmatpush1.msra.mxu0 %v556
    %2403 = vmatprep.subr.mxu0 0.0
    %2404 = vmatpush1.msra.mxu0 %v559
    %2405 = vmatprep.subr.mxu0 0.0
    %2406 = vmatpush1.msra.mxu0 %v562
    %2407 = vmatprep.subr.mxu0 0.0
    %2408 = vmatpush1.msra.mxu0 0.0
    %2409 = vmatprep.subr.mxu0 0.0
    %2410 = vmatpush1.msra.mxu0 0.0
    %2411 = vmatprep.subr.mxu0 0.0
    %2412 = vmatpush1.msra.mxu0 0.0
    %2413 = vmatprep.subr.mxu0 0.0
    %2414 = vmatpush1.msra.mxu0 0.0
    %2415 = vmatprep.subr.mxu0 0.0
    %2416 = vmatpush1.msra.mxu0 0.0
    %2417 = vmatprep.subr.mxu0 0.0
    %2418 = vmatpush1.msra.mxu0 0.0
    %2419 = vmatprep.subr.mxu0 0.0
    %2420 = vmatpush1.msra.mxu0 0.0
    %2421 = vmatprep.subr.mxu0 0.0
    %2422 = vmatpush1.msra.mxu0 0.0
    %2423 = vmatprep.subr.mxu0 0.0
    %2424 = vmatpush1.msra.mxu0 0.0
    %2425 = vmatprep.subr.mxu0 0.0
    %2426 = vmatpush1.msra.mxu0 0.0
    %2427 = vmatprep.subr.mxu0 0.0
    %2428 = vmatpush1.msra.mxu0 0.0
    %2429 = vmatprep.subr.mxu0 0.0
    %2430 = vmatpush1.msra.mxu0 0.0
    %2431 = vmatprep.subr.mxu0 0.0
    %2432 = vmatpush1.msra.mxu0 0.0
    %2433 = vmatprep.subr.mxu0 0.0
    %2434 = vmatpush1.msra.mxu0 0.0
    %2435 = vmatprep.subr.mxu0 0.0
    %2436 = vmatpush1.msra.mxu0 0.0
    %2437 = vmatprep.subr.mxu0 0.0
    %2438 = vmatpush1.msra.mxu0 0.0
    %2439 = vmatprep.mubr.f32.mxu0 0.0
    %2440 = vmatmul.mubr.f32.gmra.mrb[0].mxu0 %v1997
    %v2441 = vpop.f32.mrb[0].mxu0
    %v2442 = vadd.f32 0.0, %v2441
    %v2443 = vpop.f32.mrb[0].mxu0
    %2444 = vdwg.mxu0
    %v2445 = vadd.f32 %v2230, %v2371
    %v2446 = vxor.u32 %v2445, 2147483648
    %v2447 = vmul.f32 %v2446, 1.442695
    %v2448 = vpow.pop %v2447
    %v2449 = vadd.f32 %v2448, 1.0
    %v2450 = vrcp.pop %v2449
    %v2451 = vmul.f32 1.0, %v2450
    %v2452 = vadd.f32 %v2232, %v2373
    %v2453 = vxor.u32 %v2452, 2147483648
    %v2454 = vmul.f32 %v2453, 1.442695
    %v2455 = vpow.pop %v2454
    %v2456 = vadd.f32 %v2455, 1.0
    %v2457 = vrcp.pop %v2456
    %v2458 = vmul.f32 1.0, %v2457
    %v2459 = vadd.f32 %v2442, %v592
    %v2460 = vmul.f32 %v2451, %v2459
    %v2461 = vadd.f32 %v2301, %v2460
    %v2462 = vtanh.pop %v2461
    %v2463 = vsub.f32 %v1997, %v2462
    %v2464 = vmul.f32 %v2458, %v2463
    %v2465 = vadd.f32 %v2462, %v2464
    %v2466 = vld [vmem:[#allocation2 + $0x60] sm:$0xff]
    %v2467 = vld [vmem:[#allocation2 + $0x68] sm:$0xff]
    %v2468 = vld [vmem:[#allocation2 + $0x70] sm:$0xff]
    %2469 = vmatprep.subr.mxu0 %v420
    %2470 = vmatpush1.msra.mxu0 %v419
    %2471 = vmatprep.subr.mxu0 %v423
    %2472 = vmatpush1.msra.mxu0 %v422
    %2473 = vmatprep.subr.mxu0 %v426
    %2474 = vmatpush1.msra.mxu0 %v425
    %2475 = vmatprep.subr.mxu0 %v429
    %2476 = vmatpush1.msra.mxu0 %v428
    %2477 = vmatprep.subr.mxu0 %v432
    %2478 = vmatpush1.msra.mxu0 %v431
    %2479 = vmatprep.subr.mxu0 %v435
    %2480 = vmatpush1.msra.mxu0 %v434
    %2481 = vmatprep.subr.mxu0 %v438
    %2482 = vmatpush1.msra.mxu0 %v437
    %2483 = vmatprep.subr.mxu0 %v441
    %2484 = vmatpush1.msra.mxu0 %v440
    %2485 = vmatprep.subr.mxu0 %v444
    %2486 = vmatpush1.msra.mxu0 %v443
    %2487 = vmatprep.subr.mxu0 %v447
    %2488 = vmatpush1.msra.mxu0 %v446
    %2489 = vmatprep.subr.mxu0 %v450
    %2490 = vmatpush1.msra.mxu0 %v449
    %2491 = vmatprep.subr.mxu0 %v453
    %2492 = vmatpush1.msra.mxu0 %v452
    %2493 = vmatprep.subr.mxu0 %v456
    %2494 = vmatpush1.msra.mxu0 %v455
    %2495 = vmatprep.subr.mxu0 %v459
    %2496 = vmatpush1.msra.mxu0 %v458
    %2497 = vmatprep.subr.mxu0 %v462
    %2498 = vmatpush1.msra.mxu0 %v461
    %2499 = vmatprep.subr.mxu0 %v465
    %2500 = vmatpush1.msra.mxu0 %v464
    %2501 = vmatprep.subr.mxu0 0.0
    %2502 = vmatpush1.msra.mxu0 0.0
    %2503 = vmatprep.subr.mxu0 0.0
    %2504 = vmatpush1.msra.mxu0 0.0
    %2505 = vmatprep.subr.mxu0 0.0
    %2506 = vmatpush1.msra.mxu0 0.0
    %2507 = vmatprep.subr.mxu0 0.0
    %2508 = vmatpush1.msra.mxu0 0.0
    %2509 = vmatprep.subr.mxu0 0.0
    %2510 = vmatpush1.msra.mxu0 0.0
    %2511 = vmatprep.subr.mxu0 0.0
    %2512 = vmatpush1.msra.mxu0 0.0
    %2513 = vmatprep.subr.mxu0 0.0
    %2514 = vmatpush1.msra.mxu0 0.0
    %2515 = vmatprep.subr.mxu0 0.0
    %2516 = vmatpush1.msra.mxu0 0.0
    %2517 = vmatprep.subr.mxu0 0.0
    %2518 = vmatpush1.msra.mxu0 0.0
    %2519 = vmatprep.subr.mxu0 0.0
    %2520 = vmatpush1.msra.mxu0 0.0
    %2521 = vmatprep.subr.mxu0 0.0
    %2522 = vmatpush1.msra.mxu0 0.0
    %2523 = vmatprep.subr.mxu0 0.0
    %2524 = vmatpush1.msra.mxu0 0.0
    %2525 = vmatprep.subr.mxu0 0.0
    %2526 = vmatpush1.msra.mxu0 0.0
    %2527 = vmatprep.subr.mxu0 0.0
    %2528 = vmatpush1.msra.mxu0 0.0
    %2529 = vmatprep.subr.mxu0 0.0
    %2530 = vmatpush1.msra.mxu0 0.0
    %2531 = vmatprep.subr.mxu0 0.0
    %2532 = vmatpush1.msra.mxu0 0.0
    %2533 = vmatprep.mubr.f32.mxu0 0.0
    %2534 = vmatmul.mubr.f32.gmra.mrb[0].mxu0 %v2162
    %v2535 = vpop.f32.mrb[0].mxu0
    %v2536 = vadd.f32 0.0, %v2535
    %v2537 = vpop.f32.mrb[0].mxu0
    %v2538 = vadd.f32 0.0, %v2537
    %2539 = vdwg.mxu0
    %2540 = vmatprep.subr.mxu0 0.0
    %2541 = vmatpush1.msra.mxu0 %v421
    %2542 = vmatprep.subr.mxu0 0.0
    %2543 = vmatpush1.msra.mxu0 %v424
    %2544 = vmatprep.subr.mxu0 0.0
    %2545 = vmatpush1.msra.mxu0 %v427
    %2546 = vmatprep.subr.mxu0 0.0
    %2547 = vmatpush1.msra.mxu0 %v430
    %2548 = vmatprep.subr.mxu0 0.0
    %2549 = vmatpush1.msra.mxu0 %v433
    %2550 = vmatprep.subr.mxu0 0.0
    %2551 = vmatpush1.msra.mxu0 %v436
    %2552 = vmatprep.subr.mxu0 0.0
    %2553 = vmatpush1.msra.mxu0 %v439
    %2554 = vmatprep.subr.mxu0 0.0
    %2555 = vmatpush1.msra.mxu0 %v442
    %2556 = vmatprep.subr.mxu0 0.0
    %2557 = vmatpush1.msra.mxu0 %v445
    %2558 = vmatprep.subr.mxu0 0.0
    %2559 = vmatpush1.msra.mxu0 %v448
    %2560 = vmatprep.subr.mxu0 0.0
    %2561 = vmatpush1.msra.mxu0 %v451
    %2562 = vmatprep.subr.mxu0 0.0
    %2563 = vmatpush1.msra.mxu0 %v454
    %2564 = vmatprep.subr.mxu0 0.0
    %2565 = vmatpush1.msra.mxu0 %v457
    %2566 = vmatprep.subr.mxu0 0.0
    %2567 = vmatpush1.msra.mxu0 %v460
    %2568 = vmatprep.subr.mxu0 0.0
    %2569 = vmatpush1.msra.mxu0 %v463
    %2570 = vmatprep.subr.mxu0 0.0
    %2571 = vmatpush1.msra.mxu0 %v466
    %2572 = vmatprep.subr.mxu0 0.0
    %2573 = vmatpush1.msra.mxu0 0.0
    %2574 = vmatprep.subr.mxu0 0.0
    %2575 = vmatpush1.msra.mxu0 0.0
    %2576 = vmatprep.subr.mxu0 0.0
    %2577 = vmatpush1.msra.mxu0 0.0
    %2578 = vmatprep.subr.mxu0 0.0
    %2579 = vmatpush1.msra.mxu0 0.0
    %2580 = vmatprep.subr.mxu0 0.0
    %2581 = vmatpush1.msra.mxu0 0.0
    %2582 = vmatprep.subr.mxu0 0.0
    %2583 = vmatpush1.msra.mxu0 0.0
    %2584 = vmatprep.subr.mxu0 0.0
    %2585 = vmatpush1.msra.mxu0 0.0
    %2586 = vmatprep.subr.mxu0 0.0
    %2587 = vmatpush1.msra.mxu0 0.0
    %2588 = vmatprep.subr.mxu0 0.0
    %2589 = vmatpush1.msra.mxu0 0.0
    %2590 = vmatprep.subr.mxu0 0.0
    %2591 = vmatpush1.msra.mxu0 0.0
    %2592 = vmatprep.subr.mxu0 0.0
    %2593 = vmatpush1.msra.mxu0 0.0
    %2594 = vmatprep.subr.mxu0 0.0
    %2595 = vmatpush1.msra.mxu0 0.0
    %2596 = vmatprep.subr.mxu0 0.0
    %2597 = vmatpush1.msra.mxu0 0.0
    %2598 = vmatprep.subr.mxu0 0.0
    %2599 = vmatpush1.msra.mxu0 0.0
    %2600 = vmatprep.subr.mxu0 0.0
    %2601 = vmatpush1.msra.mxu0 0.0
    %2602 = vmatprep.subr.mxu0 0.0
    %2603 = vmatpush1.msra.mxu0 0.0
    %2604 = vmatprep.mubr.f32.mxu0 0.0
    %2605 = vmatmul.mubr.f32.gmra.mrb[0].mxu0 %v2162
    %v2606 = vpop.f32.mrb[0].mxu0
    %v2607 = vadd.f32 0.0, %v2606
    %v2608 = vpop.f32.mrb[0].mxu0
    %2609 = vdwg.mxu0
    %v2610 = vadd.f32 %v2466, %v2536
    %v2611 = vxor.u32 %v2610, 2147483648
    %v2612 = vmul.f32 %v2611, 1.442695
    %v2613 = vpow.pop %v2612
    %v2614 = vadd.f32 %v2613, 1.0
    %v2615 = vrcp.pop %v2614
    %v2616 = vmul.f32 1.0, %v2615
    %v2617 = vadd.f32 %v2467, %v2538
    %v2618 = vxor.u32 %v2617, 2147483648
    %v2619 = vmul.f32 %v2618, 1.442695
    %v2620 = vpow.pop %v2619
    %v2621 = vadd.f32 %v2620, 1.0
    %v2622 = vrcp.pop %v2621
    %v2623 = vmul.f32 1.0, %v2622
    %v2624 = vadd.f32 %v2607, %v585
    %v2625 = vmul.f32 %v2616, %v2624
    %v2626 = vadd.f32 %v2468, %v2625
    %v2627 = vtanh.pop %v2626
    %v2628 = vsub.f32 %v2162, %v2627
    %v2629 = vmul.f32 %v2623, %v2628
    %v2630 = vadd.f32 %v2627, %v2629
    %2631 = vmatprep.subr.mxu0 %v468
    %2632 = vmatpush1.msra.mxu0 %v467
    %2633 = vmatprep.subr.mxu0 %v471
    %2634 = vmatpush1.msra.mxu0 %v470
    %2635 = vmatprep.subr.mxu0 %v474
    %2636 = vmatpush1.msra.mxu0 %v473
    %2637 = vmatprep.subr.mxu0 %v477
    %2638 = vmatpush1.msra.mxu0 %v476
    %2639 = vmatprep.subr.mxu0 %v480
    %2640 = vmatpush1.msra.mxu0 %v479
    %2641 = vmatprep.subr.mxu0 %v483
    %2642 = vmatpush1.msra.mxu0 %v482
    %2643 = vmatprep.subr.mxu0 %v486
    %2644 = vmatpush1.msra.mxu0 %v485
    %2645 = vmatprep.subr.mxu0 %v489
    %2646 = vmatpush1.msra.mxu0 %v488
    %2647 = vmatprep.subr.mxu0 %v492
    %2648 = vmatpush1.msra.mxu0 %v491
    %2649 = vmatprep.subr.mxu0 %v495
    %2650 = vmatpush1.msra.mxu0 %v494
    %2651 = vmatprep.subr.mxu0 %v498
    %2652 = vmatpush1.msra.mxu0 %v497
    %2653 = vmatprep.subr.mxu0 %v501
    %2654 = vmatpush1.msra.mxu0 %v500
    %2655 = vmatprep.subr.mxu0 %v504
    %2656 = vmatpush1.msra.mxu0 %v503
    %2657 = vmatprep.subr.mxu0 %v507
    %2658 = vmatpush1.msra.mxu0 %v506
    %2659 = vmatprep.subr.mxu0 %v510
    %2660 = vmatpush1.msra.mxu0 %v509
    %2661 = vmatprep.subr.mxu0 %v513
    %2662 = vmatpush1.msra.mxu0 %v512
    %2663 = vmatprep.subr.mxu0 0.0
    %2664 = vmatpush1.msra.mxu0 0.0
    %2665 = vmatprep.subr.mxu0 0.0
    %2666 = vmatpush1.msra.mxu0 0.0
    %2667 = vmatprep.subr.mxu0 0.0
    %2668 = vmatpush1.msra.mxu0 0.0
    %2669 = vmatprep.subr.mxu0 0.0
    %2670 = vmatpush1.msra.mxu0 0.0
    %2671 = vmatprep.subr.mxu0 0.0
    %2672 = vmatpush1.msra.mxu0 0.0
    %2673 = vmatprep.subr.mxu0 0.0
    %2674 = vmatpush1.msra.mxu0 0.0
    %2675 = vmatprep.subr.mxu0 0.0
    %2676 = vmatpush1.msra.mxu0 0.0
    %2677 = vmatprep.subr.mxu0 0.0
    %2678 = vmatpush1.msra.mxu0 0.0
    %2679 = vmatprep.subr.mxu0 0.0
    %2680 = vmatpush1.msra.mxu0 0.0
    %2681 = vmatprep.subr.mxu0 0.0
    %2682 = vmatpush1.msra.mxu0 0.0
    %2683 = vmatprep.subr.mxu0 0.0
    %2684 = vmatpush1.msra.mxu0 0.0
    %2685 = vmatprep.subr.mxu0 0.0
    %2686 = vmatpush1.msra.mxu0 0.0
    %2687 = vmatprep.subr.mxu0 0.0
    %2688 = vmatpush1.msra.mxu0 0.0
    %2689 = vmatprep.subr.mxu0 0.0
    %2690 = vmatpush1.msra.mxu0 0.0
    %2691 = vmatprep.subr.mxu0 0.0
    %2692 = vmatpush1.msra.mxu0 0.0
    %2693 = vmatprep.subr.mxu0 0.0
    %2694 = vmatpush1.msra.mxu0 0.0
    %2695 = vmatprep.mubr.f32.mxu0 0.0
    %2696 = vmatmul.mubr.f32.gmra.mrb[0].mxu0 %v2630
    %v2697 = vpop.f32.mrb[0].mxu0
    %v2698 = vadd.f32 %v568, %v2697
    %v2699 = vpop.f32.mrb[0].mxu0
    %v2700 = vadd.f32 %v572, %v2699
    %2701 = vdwg.mxu0
    %2702 = vmatprep.subr.mxu0 0.0
    %2703 = vmatpush1.msra.mxu0 %v469
    %2704 = vmatprep.subr.mxu0 0.0
    %2705 = vmatpush1.msra.mxu0 %v472
    %2706 = vmatprep.subr.mxu0 0.0
    %2707 = vmatpush1.msra.mxu0 %v475
    %2708 = vmatprep.subr.mxu0 0.0
    %2709 = vmatpush1.msra.mxu0 %v478
    %2710 = vmatprep.subr.mxu0 0.0
    %2711 = vmatpush1.msra.mxu0 %v481
    %2712 = vmatprep.subr.mxu0 0.0
    %2713 = vmatpush1.msra.mxu0 %v484
    %2714 = vmatprep.subr.mxu0 0.0
    %2715 = vmatpush1.msra.mxu0 %v487
    %2716 = vmatprep.subr.mxu0 0.0
    %2717 = vmatpush1.msra.mxu0 %v490
    %2718 = vmatprep.subr.mxu0 0.0
    %2719 = vmatpush1.msra.mxu0 %v493
    %2720 = vmatprep.subr.mxu0 0.0
    %2721 = vmatpush1.msra.mxu0 %v496
    %2722 = vmatprep.subr.mxu0 0.0
    %2723 = vmatpush1.msra.mxu0 %v499
    %2724 = vmatprep.subr.mxu0 0.0
    %2725 = vmatpush1.msra.mxu0 %v502
    %2726 = vmatprep.subr.mxu0 0.0
    %2727 = vmatpush1.msra.mxu0 %v505
    %2728 = vmatprep.subr.mxu0 0.0
    %2729 = vmatpush1.msra.mxu0 %v508
    %2730 = vmatprep.subr.mxu0 0.0
    %2731 = vmatpush1.msra.mxu0 %v511
    %2732 = vmatprep.subr.mxu0 0.0
    %2733 = vmatpush1.msra.mxu0 %v514
    %2734 = vmatprep.subr.mxu0 0.0
    %2735 = vmatpush1.msra.mxu0 0.0
    %2736 = vmatprep.subr.mxu0 0.0
    %2737 = vmatpush1.msra.mxu0 0.0
    %2738 = vmatprep.subr.mxu0 0.0
    %2739 = vmatpush1.msra.mxu0 0.0
    %2740 = vmatprep.subr.mxu0 0.0
    %2741 = vmatpush1.msra.mxu0 0.0
    %2742 = vmatprep.subr.mxu0 0.0
    %2743 = vmatpush1.msra.mxu0 0.0
    %2744 = vmatprep.subr.mxu0 0.0
    %2745 = vmatpush1.msra.mxu0 0.0
    %2746 = vmatprep.subr.mxu0 0.0
    %2747 = vmatpush1.msra.mxu0 0.0
    %2748 = vmatprep.subr.mxu0 0.0
    %2749 = vmatpush1.msra.mxu0 0.0
    %2750 = vmatprep.subr.mxu0 0.0
    %2751 = vmatpush1.msra.mxu0 0.0
    %2752 = vmatprep.subr.mxu0 0.0
    %2753 = vmatpush1.msra.mxu0 0.0
    %2754 = vmatprep.subr.mxu0 0.0
    %2755 = vmatpush1.msra.mxu0 0.0
    %2756 = vmatprep.subr.mxu0 0.0
    %2757 = vmatpush1.msra.mxu0 0.0
    %2758 = vmatprep.subr.mxu0 0.0
    %2759 = vmatpush1.msra.mxu0 0.0
    %2760 = vmatprep.subr.mxu0 0.0
    %2761 = vmatpush1.msra.mxu0 0.0
    %2762 = vmatprep.subr.mxu0 0.0
    %2763 = vmatpush1.msra.mxu0 0.0
    %2764 = vmatprep.subr.mxu0 0.0
    %2765 = vmatpush1.msra.mxu0 0.0
    %2766 = vmatprep.mubr.f32.mxu0 0.0
    %2767 = vmatmul.mubr.f32.gmra.mrb[0].mxu0 %v2630
    %v2768 = vpop.f32.mrb[0].mxu0
    %v2769 = vadd.f32 %v576, %v2768
    %v2770 = vpop.f32.mrb[0].mxu0
    %2771 = vdwg.mxu0
    %2772 = vmatprep.subr.mxu0 %v516
    %2773 = vmatpush1.msra.mxu0 %v515
    %2774 = vmatprep.subr.mxu0 %v519
    %2775 = vmatpush1.msra.mxu0 %v518
    %2776 = vmatprep.subr.mxu0 %v522
    %2777 = vmatpush1.msra.mxu0 %v521
    %2778 = vmatprep.subr.mxu0 %v525
    %2779 = vmatpush1.msra.mxu0 %v524
    %2780 = vmatprep.subr.mxu0 %v528
    %2781 = vmatpush1.msra.mxu0 %v527
    %2782 = vmatprep.subr.mxu0 %v531
    %2783 = vmatpush1.msra.mxu0 %v530
    %2784 = vmatprep.subr.mxu0 %v534
    %2785 = vmatpush1.msra.mxu0 %v533
    %2786 = vmatprep.subr.mxu0 %v537
    %2787 = vmatpush1.msra.mxu0 %v536
    %2788 = vmatprep.subr.mxu0 %v540
    %2789 = vmatpush1.msra.mxu0 %v539
    %2790 = vmatprep.subr.mxu0 %v543
    %2791 = vmatpush1.msra.mxu0 %v542
    %2792 = vmatprep.subr.mxu0 %v546
    %2793 = vmatpush1.msra.mxu0 %v545
    %2794 = vmatprep.subr.mxu0 %v549
    %2795 = vmatpush1.msra.mxu0 %v548
    %2796 = vmatprep.subr.mxu0 %v552
    %2797 = vmatpush1.msra.mxu0 %v551
    %2798 = vmatprep.subr.mxu0 %v555
    %2799 = vmatpush1.msra.mxu0 %v554
    %2800 = vmatprep.subr.mxu0 %v558
    %2801 = vmatpush1.msra.mxu0 %v557
    %2802 = vmatprep.subr.mxu0 %v561
    %2803 = vmatpush1.msra.mxu0 %v560
    %2804 = vmatprep.subr.mxu0 0.0
    %2805 = vmatpush1.msra.mxu0 0.0
    %2806 = vmatprep.subr.mxu0 0.0
    %2807 = vmatpush1.msra.mxu0 0.0
    %2808 = vmatprep.subr.mxu0 0.0
    %2809 = vmatpush1.msra.mxu0 0.0
    %2810 = vmatprep.subr.mxu0 0.0
    %2811 = vmatpush1.msra.mxu0 0.0
    %2812 = vmatprep.subr.mxu0 0.0
    %2813 = vmatpush1.msra.mxu0 0.0
    %2814 = vmatprep.subr.mxu0 0.0
    %2815 = vmatpush1.msra.mxu0 0.0
    %2816 = vmatprep.subr.mxu0 0.0
    %2817 = vmatpush1.msra.mxu0 0.0
    %2818 = vmatprep.subr.mxu0 0.0
    %2819 = vmatpush1.msra.mxu0 0.0
    %2820 = vmatprep.subr.mxu0 0.0
    %2821 = vmatpush1.msra.mxu0 0.0
    %2822 = vmatprep.subr.mxu0 0.0
    %2823 = vmatpush1.msra.mxu0 0.0
    %2824 = vmatprep.subr.mxu0 0.0
    %2825 = vmatpush1.msra.mxu0 0.0
    %2826 = vmatprep.subr.mxu0 0.0
    %2827 = vmatpush1.msra.mxu0 0.0
    %2828 = vmatprep.subr.mxu0 0.0
    %2829 = vmatpush1.msra.mxu0 0.0
    %2830 = vmatprep.subr.mxu0 0.0
    %2831 = vmatpush1.msra.mxu0 0.0
    %2832 = vmatprep.subr.mxu0 0.0
    %2833 = vmatpush1.msra.mxu0 0.0
    %2834 = vmatprep.subr.mxu0 0.0
    %2835 = vmatpush1.msra.mxu0 0.0
    %2836 = vmatprep.mubr.f32.mxu0 0.0
    %2837 = vmatmul.mubr.f32.gmra.mrb[0].mxu0 %v2465
    %v2838 = vpop.f32.mrb[0].mxu0
    %v2839 = vadd.f32 0.0, %v2838
    %v2840 = vpop.f32.mrb[0].mxu0
    %v2841 = vadd.f32 0.0, %v2840
    %2842 = vdwg.mxu0
    %2843 = vmatprep.subr.mxu0 0.0
    %2844 = vmatpush1.msra.mxu0 %v517
    %2845 = vmatprep.subr.mxu0 0.0
    %2846 = vmatpush1.msra.mxu0 %v520
    %2847 = vmatprep.subr.mxu0 0.0
    %2848 = vmatpush1.msra.mxu0 %v523
    %2849 = vmatprep.subr.mxu0 0.0
    %2850 = vmatpush1.msra.mxu0 %v526
    %2851 = vmatprep.subr.mxu0 0.0
    %2852 = vmatpush1.msra.mxu0 %v529
    %2853 = vmatprep.subr.mxu0 0.0
    %2854 = vmatpush1.msra.mxu0 %v532
    %2855 = vmatprep.subr.mxu0 0.0
    %2856 = vmatpush1.msra.mxu0 %v535
    %2857 = vmatprep.subr.mxu0 0.0
    %2858 = vmatpush1.msra.mxu0 %v538
    %2859 = vmatprep.subr.mxu0 0.0
    %2860 = vmatpush1.msra.mxu0 %v541
    %2861 = vmatprep.subr.mxu0 0.0
    %2862 = vmatpush1.msra.mxu0 %v544
    %2863 = vmatprep.subr.mxu0 0.0
    %2864 = vmatpush1.msra.mxu0 %v547
    %2865 = vmatprep.subr.mxu0 0.0
    %2866 = vmatpush1.msra.mxu0 %v550
    %2867 = vmatprep.subr.mxu0 0.0
    %2868 = vmatpush1.msra.mxu0 %v553
    %2869 = vmatprep.subr.mxu0 0.0
    %2870 = vmatpush1.msra.mxu0 %v556
    %2871 = vmatprep.subr.mxu0 0.0
    %2872 = vmatpush1.msra.mxu0 %v559
    %2873 = vmatprep.subr.mxu0 0.0
    %2874 = vmatpush1.msra.mxu0 %v562
    %2875 = vmatprep.subr.mxu0 0.0
    %2876 = vmatpush1.msra.mxu0 0.0
    %2877 = vmatprep.subr.mxu0 0.0
    %2878 = vmatpush1.msra.mxu0 0.0
    %2879 = vmatprep.subr.mxu0 0.0
    %2880 = vmatpush1.msra.mxu0 0.0
    %2881 = vmatprep.subr.mxu0 0.0
    %2882 = vmatpush1.msra.mxu0 0.0
    %2883 = vmatprep.subr.mxu0 0.0
    %2884 = vmatpush1.msra.mxu0 0.0
    %2885 = vmatprep.subr.mxu0 0.0
    %2886 = vmatpush1.msra.mxu0 0.0
    %2887 = vmatprep.subr.mxu0 0.0
    %2888 = vmatpush1.msra.mxu0 0.0
    %2889 = vmatprep.subr.mxu0 0.0
    %2890 = vmatpush1.msra.mxu0 0.0
    %2891 = vmatprep.subr.mxu0 0.0
    %2892 = vmatpush1.msra.mxu0 0.0
    %2893 = vmatprep.subr.mxu0 0.0
    %2894 = vmatpush1.msra.mxu0 0.0
    %2895 = vmatprep.subr.mxu0 0.0
    %2896 = vmatpush1.msra.mxu0 0.0
    %2897 = vmatprep.subr.mxu0 0.0
    %2898 = vmatpush1.msra.mxu0 0.0
    %2899 = vmatprep.subr.mxu0 0.0
    %2900 = vmatpush1.msra.mxu0 0.0
    %2901 = vmatprep.subr.mxu0 0.0
    %2902 = vmatpush1.msra.mxu0 0.0
    %2903 = vmatprep.subr.mxu0 0.0
    %2904 = vmatpush1.msra.mxu0 0.0
    %2905 = vmatprep.subr.mxu0 0.0
    %2906 = vmatpush1.msra.mxu0 0.0
    %2907 = vmatprep.mubr.f32.mxu0 0.0
    %2908 = vmatmul.mubr.f32.gmra.mrb[0].mxu0 %v2465
    %v2909 = vpop.f32.mrb[0].mxu0
    %v2910 = vadd.f32 0.0, %v2909
    %v2911 = vpop.f32.mrb[0].mxu0
    %2912 = vdwg.mxu0
    %v2913 = vadd.f32 %v2698, %v2839
    %v2914 = vxor.u32 %v2913, 2147483648
    %v2915 = vmul.f32 %v2914, 1.442695
    %v2916 = vpow.pop %v2915
    %v2917 = vadd.f32 %v2916, 1.0
    %v2918 = vrcp.pop %v2917
    %v2919 = vmul.f32 1.0, %v2918
    %v2920 = vadd.f32 %v2700, %v2841
    %v2921 = vxor.u32 %v2920, 2147483648
    %v2922 = vmul.f32 %v2921, 1.442695
    %v2923 = vpow.pop %v2922
    %v2924 = vadd.f32 %v2923, 1.0
    %v2925 = vrcp.pop %v2924
    %v2926 = vmul.f32 1.0, %v2925
    %v2927 = vadd.f32 %v2910, %v592
    %v2928 = vmul.f32 %v2919, %v2927
    %v2929 = vadd.f32 %v2769, %v2928
    %v2930 = vtanh.pop %v2929
    %v2931 = vsub.f32 %v2465, %v2930
    %v2932 = vmul.f32 %v2926, %v2931
    %v2933 = vadd.f32 %v2930, %v2932
    %v2934 = vld [vmem:[#allocation2 + $0x78] sm:$0xff]
    %v2935 = vld [vmem:[#allocation2 + $0x80] sm:$0xff]
    %v2936 = vld [vmem:[#allocation2 + $0x88] sm:$0xff]
    %2937 = vmatprep.subr.mxu0 %v420
    %2938 = vmatpush1.msra.mxu0 %v419
    %2939 = vmatprep.subr.mxu0 %v423
    %2940 = vmatpush1.msra.mxu0 %v422
    %2941 = vmatprep.subr.mxu0 %v426
    %2942 = vmatpush1.msra.mxu0 %v425
    %2943 = vmatprep.subr.mxu0 %v429
    %2944 = vmatpush1.msra.mxu0 %v428
    %2945 = vmatprep.subr.mxu0 %v432
    %2946 = vmatpush1.msra.mxu0 %v431
    %2947 = vmatprep.subr.mxu0 %v435
    %2948 = vmatpush1.msra.mxu0 %v434
    %2949 = vmatprep.subr.mxu0 %v438
    %2950 = vmatpush1.msra.mxu0 %v437
    %2951 = vmatprep.subr.mxu0 %v441
    %2952 = vmatpush1.msra.mxu0 %v440
    %2953 = vmatprep.subr.mxu0 %v444
    %2954 = vmatpush1.msra.mxu0 %v443
    %2955 = vmatprep.subr.mxu0 %v447
    %2956 = vmatpush1.msra.mxu0 %v446
    %2957 = vmatprep.subr.mxu0 %v450
    %2958 = vmatpush1.msra.mxu0 %v449
    %2959 = vmatprep.subr.mxu0 %v453
    %2960 = vmatpush1.msra.mxu0 %v452
    %2961 = vmatprep.subr.mxu0 %v456
    %2962 = vmatpush1.msra.mxu0 %v455
    %2963 = vmatprep.subr.mxu0 %v459
    %2964 = vmatpush1.msra.mxu0 %v458
    %2965 = vmatprep.subr.mxu0 %v462
    %2966 = vmatpush1.msra.mxu0 %v461
    %2967 = vmatprep.subr.mxu0 %v465
    %2968 = vmatpush1.msra.mxu0 %v464
    %2969 = vmatprep.subr.mxu0 0.0
    %2970 = vmatpush1.msra.mxu0 0.0
    %2971 = vmatprep.subr.mxu0 0.0
    %2972 = vmatpush1.msra.mxu0 0.0
    %2973 = vmatprep.subr.mxu0 0.0
    %2974 = vmatpush1.msra.mxu0 0.0
    %2975 = vmatprep.subr.mxu0 0.0
    %2976 = vmatpush1.msra.mxu0 0.0
    %2977 = vmatprep.subr.mxu0 0.0
    %2978 = vmatpush1.msra.mxu0 0.0
    %2979 = vmatprep.subr.mxu0 0.0
    %2980 = vmatpush1.msra.mxu0 0.0
    %2981 = vmatprep.subr.mxu0 0.0
    %2982 = vmatpush1.msra.mxu0 0.0
    %2983 = vmatprep.subr.mxu0 0.0
    %2984 = vmatpush1.msra.mxu0 0.0
    %2985 = vmatprep.subr.mxu0 0.0
    %2986 = vmatpush1.msra.mxu0 0.0
    %2987 = vmatprep.subr.mxu0 0.0
    %2988 = vmatpush1.msra.mxu0 0.0
    %2989 = vmatprep.subr.mxu0 0.0
    %2990 = vmatpush1.msra.mxu0 0.0
    %2991 = vmatprep.subr.mxu0 0.0
    %2992 = vmatpush1.msra.mxu0 0.0
    %2993 = vmatprep.subr.mxu0 0.0
    %2994 = vmatpush1.msra.mxu0 0.0
    %2995 = vmatprep.subr.mxu0 0.0
    %2996 = vmatpush1.msra.mxu0 0.0
    %2997 = vmatprep.subr.mxu0 0.0
    %2998 = vmatpush1.msra.mxu0 0.0
    %2999 = vmatprep.subr.mxu0 0.0
    %3000 = vmatpush1.msra.mxu0 0.0
    %3001 = vmatprep.mubr.f32.mxu0 0.0
    %3002 = vmatmul.mubr.f32.gmra.mrb[0].mxu0 %v2630
    %v3003 = vpop.f32.mrb[0].mxu0
    %v3004 = vadd.f32 0.0, %v3003
    %v3005 = vpop.f32.mrb[0].mxu0
    %v3006 = vadd.f32 0.0, %v3005
    %3007 = vdwg.mxu0
    %3008 = vmatprep.subr.mxu0 0.0
    %3009 = vmatpush1.msra.mxu0 %v421
    %3010 = vmatprep.subr.mxu0 0.0
    %3011 = vmatpush1.msra.mxu0 %v424
    %3012 = vmatprep.subr.mxu0 0.0
    %3013 = vmatpush1.msra.mxu0 %v427
    %3014 = vmatprep.subr.mxu0 0.0
    %3015 = vmatpush1.msra.mxu0 %v430
    %3016 = vmatprep.subr.mxu0 0.0
    %3017 = vmatpush1.msra.mxu0 %v433
    %3018 = vmatprep.subr.mxu0 0.0
    %3019 = vmatpush1.msra.mxu0 %v436
    %3020 = vmatprep.subr.mxu0 0.0
    %3021 = vmatpush1.msra.mxu0 %v439
    %3022 = vmatprep.subr.mxu0 0.0
    %3023 = vmatpush1.msra.mxu0 %v442
    %3024 = vmatprep.subr.mxu0 0.0
    %3025 = vmatpush1.msra.mxu0 %v445
    %3026 = vmatprep.subr.mxu0 0.0
    %3027 = vmatpush1.msra.mxu0 %v448
    %3028 = vmatprep.subr.mxu0 0.0
    %3029 = vmatpush1.msra.mxu0 %v451
    %3030 = vmatprep.subr.mxu0 0.0
    %3031 = vmatpush1.msra.mxu0 %v454
    %3032 = vmatprep.subr.mxu0 0.0
    %3033 = vmatpush1.msra.mxu0 %v457
    %3034 = vmatprep.subr.mxu0 0.0
    %3035 = vmatpush1.msra.mxu0 %v460
    %3036 = vmatprep.subr.mxu0 0.0
    %3037 = vmatpush1.msra.mxu0 %v463
    %3038 = vmatprep.subr.mxu0 0.0
    %3039 = vmatpush1.msra.mxu0 %v466
    %3040 = vmatprep.subr.mxu0 0.0
    %3041 = vmatpush1.msra.mxu0 0.0
    %3042 = vmatprep.subr.mxu0 0.0
    %3043 = vmatpush1.msra.mxu0 0.0
    %3044 = vmatprep.subr.mxu0 0.0
    %3045 = vmatpush1.msra.mxu0 0.0
    %3046 = vmatprep.subr.mxu0 0.0
    %3047 = vmatpush1.msra.mxu0 0.0
    %3048 = vmatprep.subr.mxu0 0.0
    %3049 = vmatpush1.msra.mxu0 0.0
    %3050 = vmatprep.subr.mxu0 0.0
    %3051 = vmatpush1.msra.mxu0 0.0
    %3052 = vmatprep.subr.mxu0 0.0
    %3053 = vmatpush1.msra.mxu0 0.0
    %3054 = vmatprep.subr.mxu0 0.0
    %3055 = vmatpush1.msra.mxu0 0.0
    %3056 = vmatprep.subr.mxu0 0.0
    %3057 = vmatpush1.msra.mxu0 0.0
    %3058 = vmatprep.subr.mxu0 0.0
    %3059 = vmatpush1.msra.mxu0 0.0
    %3060 = vmatprep.subr.mxu0 0.0
    %3061 = vmatpush1.msra.mxu0 0.0
    %3062 = vmatprep.subr.mxu0 0.0
    %3063 = vmatpush1.msra.mxu0 0.0
    %3064 = vmatprep.subr.mxu0 0.0
    %3065 = vmatpush1.msra.mxu0 0.0
    %3066 = vmatprep.subr.mxu0 0.0
    %3067 = vmatpush1.msra.mxu0 0.0
    %3068 = vmatprep.subr.mxu0 0.0
    %3069 = vmatpush1.msra.mxu0 0.0
    %3070 = vmatprep.subr.mxu0 0.0
    %3071 = vmatpush1.msra.mxu0 0.0
    %3072 = vmatprep.mubr.f32.mxu0 0.0
    %3073 = vmatmul.mubr.f32.gmra.mrb[0].mxu0 %v2630
    %v3074 = vpop.f32.mrb[0].mxu0
    %v3075 = vadd.f32 0.0, %v3074
    %v3076 = vpop.f32.mrb[0].mxu0
    %3077 = vdwg.mxu0
    %v3078 = vadd.f32 %v2934, %v3004
    %v3079 = vxor.u32 %v3078, 2147483648
    %v3080 = vmul.f32 %v3079, 1.442695
    %v3081 = vpow.pop %v3080
    %v3082 = vadd.f32 %v3081, 1.0
    %v3083 = vrcp.pop %v3082
    %v3084 = vmul.f32 1.0, %v3083
    %v3085 = vadd.f32 %v2935, %v3006
    %v3086 = vxor.u32 %v3085, 2147483648
    %v3087 = vmul.f32 %v3086, 1.442695
    %v3088 = vpow.pop %v3087
    %v3089 = vadd.f32 %v3088, 1.0
    %v3090 = vrcp.pop %v3089
    %v3091 = vmul.f32 1.0, %v3090
    %v3092 = vadd.f32 %v3075, %v585
    %v3093 = vmul.f32 %v3084, %v3092
    %v3094 = vadd.f32 %v2936, %v3093
    %v3095 = vtanh.pop %v3094
    %v3096 = vsub.f32 %v2630, %v3095
    %v3097 = vmul.f32 %v3091, %v3096
    %v3098 = vadd.f32 %v3095, %v3097
    %3099 = vmatprep.subr.mxu0 %v468
    %3100 = vmatpush1.msra.mxu0 %v467
    %3101 = vmatprep.subr.mxu0 %v471
    %3102 = vmatpush1.msra.mxu0 %v470
    %3103 = vmatprep.subr.mxu0 %v474
    %3104 = vmatpush1.msra.mxu0 %v473
    %3105 = vmatprep.subr.mxu0 %v477
    %3106 = vmatpush1.msra.mxu0 %v476
    %3107 = vmatprep.subr.mxu0 %v480
    %3108 = vmatpush1.msra.mxu0 %v479
    %3109 = vmatprep.subr.mxu0 %v483
    %3110 = vmatpush1.msra.mxu0 %v482
    %3111 = vmatprep.subr.mxu0 %v486
    %3112 = vmatpush1.msra.mxu0 %v485
    %3113 = vmatprep.subr.mxu0 %v489
    %3114 = vmatpush1.msra.mxu0 %v488
    %3115 = vmatprep.subr.mxu0 %v492
    %3116 = vmatpush1.msra.mxu0 %v491
    %3117 = vmatprep.subr.mxu0 %v495
    %3118 = vmatpush1.msra.mxu0 %v494
    %3119 = vmatprep.subr.mxu0 %v498
    %3120 = vmatpush1.msra.mxu0 %v497
    %3121 = vmatprep.subr.mxu0 %v501
    %3122 = vmatpush1.msra.mxu0 %v500
    %3123 = vmatprep.subr.mxu0 %v504
    %3124 = vmatpush1.msra.mxu0 %v503
    %3125 = vmatprep.subr.mxu0 %v507
    %3126 = vmatpush1.msra.mxu0 %v506
    %3127 = vmatprep.subr.mxu0 %v510
    %3128 = vmatpush1.msra.mxu0 %v509
    %3129 = vmatprep.subr.mxu0 %v513
    %3130 = vmatpush1.msra.mxu0 %v512
    %3131 = vmatprep.subr.mxu0 0.0
    %3132 = vmatpush1.msra.mxu0 0.0
    %3133 = vmatprep.subr.mxu0 0.0
    %3134 = vmatpush1.msra.mxu0 0.0
    %3135 = vmatprep.subr.mxu0 0.0
    %3136 = vmatpush1.msra.mxu0 0.0
    %3137 = vmatprep.subr.mxu0 0.0
    %3138 = vmatpush1.msra.mxu0 0.0
    %3139 = vmatprep.subr.mxu0 0.0
    %3140 = vmatpush1.msra.mxu0 0.0
    %3141 = vmatprep.subr.mxu0 0.0
    %3142 = vmatpush1.msra.mxu0 0.0
    %3143 = vmatprep.subr.mxu0 0.0
    %3144 = vmatpush1.msra.mxu0 0.0
    %3145 = vmatprep.subr.mxu0 0.0
    %3146 = vmatpush1.msra.mxu0 0.0
    %3147 = vmatprep.subr.mxu0 0.0
    %3148 = vmatpush1.msra.mxu0 0.0
    %3149 = vmatprep.subr.mxu0 0.0
    %3150 = vmatpush1.msra.mxu0 0.0
    %3151 = vmatprep.subr.mxu0 0.0
    %3152 = vmatpush1.msra.mxu0 0.0
    %3153 = vmatprep.subr.mxu0 0.0
    %3154 = vmatpush1.msra.mxu0 0.0
    %3155 = vmatprep.subr.mxu0 0.0
    %3156 = vmatpush1.msra.mxu0 0.0
    %3157 = vmatprep.subr.mxu0 0.0
    %3158 = vmatpush1.msra.mxu0 0.0
    %3159 = vmatprep.subr.mxu0 0.0
    %3160 = vmatpush1.msra.mxu0 0.0
    %3161 = vmatprep.subr.mxu0 0.0
    %3162 = vmatpush1.msra.mxu0 0.0
    %3163 = vmatprep.mubr.f32.mxu0 0.0
    %3164 = vmatmul.mubr.f32.gmra.mrb[0].mxu0 %v3098
    %v3165 = vpop.f32.mrb[0].mxu0
    %v3166 = vadd.f32 %v568, %v3165
    %v3167 = vpop.f32.mrb[0].mxu0
    %v3168 = vadd.f32 %v572, %v3167
    %3169 = vdwg.mxu0
    %3170 = vmatprep.subr.mxu0 0.0
    %3171 = vmatpush1.msra.mxu0 %v469
    %3172 = vmatprep.subr.mxu0 0.0
    %3173 = vmatpush1.msra.mxu0 %v472
    %3174 = vmatprep.subr.mxu0 0.0
    %3175 = vmatpush1.msra.mxu0 %v475
    %3176 = vmatprep.subr.mxu0 0.0
    %3177 = vmatpush1.msra.mxu0 %v478
    %3178 = vmatprep.subr.mxu0 0.0
    %3179 = vmatpush1.msra.mxu0 %v481
    %3180 = vmatprep.subr.mxu0 0.0
    %3181 = vmatpush1.msra.mxu0 %v484
    %3182 = vmatprep.subr.mxu0 0.0
    %3183 = vmatpush1.msra.mxu0 %v487
    %3184 = vmatprep.subr.mxu0 0.0
    %3185 = vmatpush1.msra.mxu0 %v490
    %3186 = vmatprep.subr.mxu0 0.0
    %3187 = vmatpush1.msra.mxu0 %v493
    %3188 = vmatprep.subr.mxu0 0.0
    %3189 = vmatpush1.msra.mxu0 %v496
    %3190 = vmatprep.subr.mxu0 0.0
    %3191 = vmatpush1.msra.mxu0 %v499
    %3192 = vmatprep.subr.mxu0 0.0
    %3193 = vmatpush1.msra.mxu0 %v502
    %3194 = vmatprep.subr.mxu0 0.0
    %3195 = vmatpush1.msra.mxu0 %v505
    %3196 = vmatprep.subr.mxu0 0.0
    %3197 = vmatpush1.msra.mxu0 %v508
    %3198 = vmatprep.subr.mxu0 0.0
    %3199 = vmatpush1.msra.mxu0 %v511
    %3200 = vmatprep.subr.mxu0 0.0
    %3201 = vmatpush1.msra.mxu0 %v514
    %3202 = vmatprep.subr.mxu0 0.0
    %3203 = vmatpush1.msra.mxu0 0.0
    %3204 = vmatprep.subr.mxu0 0.0
    %3205 = vmatpush1.msra.mxu0 0.0
    %3206 = vmatprep.subr.mxu0 0.0
    %3207 = vmatpush1.msra.mxu0 0.0
    %3208 = vmatprep.subr.mxu0 0.0
    %3209 = vmatpush1.msra.mxu0 0.0
    %3210 = vmatprep.subr.mxu0 0.0
    %3211 = vmatpush1.msra.mxu0 0.0
    %3212 = vmatprep.subr.mxu0 0.0
    %3213 = vmatpush1.msra.mxu0 0.0
    %3214 = vmatprep.subr.mxu0 0.0
    %3215 = vmatpush1.msra.mxu0 0.0
    %3216 = vmatprep.subr.mxu0 0.0
    %3217 = vmatpush1.msra.mxu0 0.0
    %3218 = vmatprep.subr.mxu0 0.0
    %3219 = vmatpush1.msra.mxu0 0.0
    %3220 = vmatprep.subr.mxu0 0.0
    %3221 = vmatpush1.msra.mxu0 0.0
    %3222 = vmatprep.subr.mxu0 0.0
    %3223 = vmatpush1.msra.mxu0 0.0
    %3224 = vmatprep.subr.mxu0 0.0
    %3225 = vmatpush1.msra.mxu0 0.0
    %3226 = vmatprep.subr.mxu0 0.0
    %3227 = vmatpush1.msra.mxu0 0.0
    %3228 = vmatprep.subr.mxu0 0.0
    %3229 = vmatpush1.msra.mxu0 0.0
    %3230 = vmatprep.subr.mxu0 0.0
    %3231 = vmatpush1.msra.mxu0 0.0
    %3232 = vmatprep.subr.mxu0 0.0
    %3233 = vmatpush1.msra.mxu0 0.0
    %3234 = vmatprep.mubr.f32.mxu0 0.0
    %3235 = vmatmul.mubr.f32.gmra.mrb[0].mxu0 %v3098
    %v3236 = vpop.f32.mrb[0].mxu0
    %v3237 = vadd.f32 %v576, %v3236
    %v3238 = vpop.f32.mrb[0].mxu0
    %3239 = vdwg.mxu0
    %3240 = vmatprep.subr.mxu0 %v516
    %3241 = vmatpush1.msra.mxu0 %v515
    %3242 = vmatprep.subr.mxu0 %v519
    %3243 = vmatpush1.msra.mxu0 %v518
    %3244 = vmatprep.subr.mxu0 %v522
    %3245 = vmatpush1.msra.mxu0 %v521
    %3246 = vmatprep.subr.mxu0 %v525
    %3247 = vmatpush1.msra.mxu0 %v524
    %3248 = vmatprep.subr.mxu0 %v528
    %3249 = vmatpush1.msra.mxu0 %v527
    %3250 = vmatprep.subr.mxu0 %v531
    %3251 = vmatpush1.msra.mxu0 %v530
    %3252 = vmatprep.subr.mxu0 %v534
    %3253 = vmatpush1.msra.mxu0 %v533
    %3254 = vmatprep.subr.mxu0 %v537
    %3255 = vmatpush1.msra.mxu0 %v536
    %3256 = vmatprep.subr.mxu0 %v540
    %3257 = vmatpush1.msra.mxu0 %v539
    %3258 = vmatprep.subr.mxu0 %v543
    %3259 = vmatpush1.msra.mxu0 %v542
    %3260 = vmatprep.subr.mxu0 %v546
    %3261 = vmatpush1.msra.mxu0 %v545
    %3262 = vmatprep.subr.mxu0 %v549
    %3263 = vmatpush1.msra.mxu0 %v548
    %3264 = vmatprep.subr.mxu0 %v552
    %3265 = vmatpush1.msra.mxu0 %v551
    %3266 = vmatprep.subr.mxu0 %v555
    %3267 = vmatpush1.msra.mxu0 %v554
    %3268 = vmatprep.subr.mxu0 %v558
    %3269 = vmatpush1.msra.mxu0 %v557
    %3270 = vmatprep.subr.mxu0 %v561
    %3271 = vmatpush1.msra.mxu0 %v560
    %3272 = vmatprep.subr.mxu0 0.0
    %3273 = vmatpush1.msra.mxu0 0.0
    %3274 = vmatprep.subr.mxu0 0.0
    %3275 = vmatpush1.msra.mxu0 0.0
    %3276 = vmatprep.subr.mxu0 0.0
    %3277 = vmatpush1.msra.mxu0 0.0
    %3278 = vmatprep.subr.mxu0 0.0
    %3279 = vmatpush1.msra.mxu0 0.0
    %3280 = vmatprep.subr.mxu0 0.0
    %3281 = vmatpush1.msra.mxu0 0.0
    %3282 = vmatprep.subr.mxu0 0.0
    %3283 = vmatpush1.msra.mxu0 0.0
    %3284 = vmatprep.subr.mxu0 0.0
    %3285 = vmatpush1.msra.mxu0 0.0
    %3286 = vmatprep.subr.mxu0 0.0
    %3287 = vmatpush1.msra.mxu0 0.0
    %3288 = vmatprep.subr.mxu0 0.0
    %3289 = vmatpush1.msra.mxu0 0.0
    %3290 = vmatprep.subr.mxu0 0.0
    %3291 = vmatpush1.msra.mxu0 0.0
    %3292 = vmatprep.subr.mxu0 0.0
    %3293 = vmatpush1.msra.mxu0 0.0
    %3294 = vmatprep.subr.mxu0 0.0
    %3295 = vmatpush1.msra.mxu0 0.0
    %3296 = vmatprep.subr.mxu0 0.0
    %3297 = vmatpush1.msra.mxu0 0.0
    %3298 = vmatprep.subr.mxu0 0.0
    %3299 = vmatpush1.msra.mxu0 0.0
    %3300 = vmatprep.subr.mxu0 0.0
    %3301 = vmatpush1.msra.mxu0 0.0
    %3302 = vmatprep.subr.mxu0 0.0
    %3303 = vmatpush1.msra.mxu0 0.0
    %3304 = vmatprep.mubr.f32.mxu0 0.0
    %3305 = vmatmul.mubr.f32.gmra.mrb[0].mxu0 %v2933
    %v3306 = vpop.f32.mrb[0].mxu0
    %v3307 = vadd.f32 0.0, %v3306
    %v3308 = vpop.f32.mrb[0].mxu0
    %v3309 = vadd.f32 0.0, %v3308
    %3310 = vdwg.mxu0
    %3311 = vmatprep.subr.mxu0 0.0
    %3312 = vmatpush1.msra.mxu0 %v517
    %3313 = vmatprep.subr.mxu0 0.0
    %3314 = vmatpush1.msra.mxu0 %v520
    %3315 = vmatprep.subr.mxu0 0.0
    %3316 = vmatpush1.msra.mxu0 %v523
    %3317 = vmatprep.subr.mxu0 0.0
    %3318 = vmatpush1.msra.mxu0 %v526
    %3319 = vmatprep.subr.mxu0 0.0
    %3320 = vmatpush1.msra.mxu0 %v529
    %3321 = vmatprep.subr.mxu0 0.0
    %3322 = vmatpush1.msra.mxu0 %v532
    %3323 = vmatprep.subr.mxu0 0.0
    %3324 = vmatpush1.msra.mxu0 %v535
    %3325 = vmatprep.subr.mxu0 0.0
    %3326 = vmatpush1.msra.mxu0 %v538
    %3327 = vmatprep.subr.mxu0 0.0
    %3328 = vmatpush1.msra.mxu0 %v541
    %3329 = vmatprep.subr.mxu0 0.0
    %3330 = vmatpush1.msra.mxu0 %v544
    %3331 = vmatprep.subr.mxu0 0.0
    %3332 = vmatpush1.msra.mxu0 %v547
    %3333 = vmatprep.subr.mxu0 0.0
    %3334 = vmatpush1.msra.mxu0 %v550
    %3335 = vmatprep.subr.mxu0 0.0
    %3336 = vmatpush1.msra.mxu0 %v553
    %3337 = vmatprep.subr.mxu0 0.0
    %3338 = vmatpush1.msra.mxu0 %v556
    %3339 = vmatprep.subr.mxu0 0.0
    %3340 = vmatpush1.msra.mxu0 %v559
    %3341 = vmatprep.subr.mxu0 0.0
    %3342 = vmatpush1.msra.mxu0 %v562
    %3343 = vmatprep.subr.mxu0 0.0
    %3344 = vmatpush1.msra.mxu0 0.0
    %3345 = vmatprep.subr.mxu0 0.0
    %3346 = vmatpush1.msra.mxu0 0.0
    %3347 = vmatprep.subr.mxu0 0.0
    %3348 = vmatpush1.msra.mxu0 0.0
    %3349 = vmatprep.subr.mxu0 0.0
    %3350 = vmatpush1.msra.mxu0 0.0
    %3351 = vmatprep.subr.mxu0 0.0
    %3352 = vmatpush1.msra.mxu0 0.0
    %3353 = vmatprep.subr.mxu0 0.0
    %3354 = vmatpush1.msra.mxu0 0.0
    %3355 = vmatprep.subr.mxu0 0.0
    %3356 = vmatpush1.msra.mxu0 0.0
    %3357 = vmatprep.subr.mxu0 0.0
    %3358 = vmatpush1.msra.mxu0 0.0
    %3359 = vmatprep.subr.mxu0 0.0
    %3360 = vmatpush1.msra.mxu0 0.0
    %3361 = vmatprep.subr.mxu0 0.0
    %3362 = vmatpush1.msra.mxu0 0.0
    %3363 = vmatprep.subr.mxu0 0.0
    %3364 = vmatpush1.msra.mxu0 0.0
    %3365 = vmatprep.subr.mxu0 0.0
    %3366 = vmatpush1.msra.mxu0 0.0
    %3367 = vmatprep.subr.mxu0 0.0
    %3368 = vmatpush1.msra.mxu0 0.0
    %3369 = vmatprep.subr.mxu0 0.0
    %3370 = vmatpush1.msra.mxu0 0.0
    %3371 = vmatprep.subr.mxu0 0.0
    %3372 = vmatpush1.msra.mxu0 0.0
    %3373 = vmatprep.subr.mxu0 0.0
    %3374 = vmatpush1.msra.mxu0 0.0
    %3375 = vmatprep.mubr.f32.mxu0 0.0
    %3376 = vmatmul.mubr.f32.gmra.mrb[0].mxu0 %v2933
    %v3377 = vpop.f32.mrb[0].mxu0
    %v3378 = vadd.f32 0.0, %v3377
    %v3379 = vpop.f32.mrb[0].mxu0
    %3380 = vdwg.mxu0
    %v3381 = vadd.f32 %v3166, %v3307
    %v3382 = vxor.u32 %v3381, 2147483648
    %v3383 = vmul.f32 %v3382, 1.442695
    %v3384 = vpow.pop %v3383
    %v3385 = vadd.f32 %v3384, 1.0
    %v3386 = vrcp.pop %v3385
    %v3387 = vmul.f32 1.0, %v3386
    %v3388 = vadd.f32 %v3168, %v3309
    %v3389 = vxor.u32 %v3388, 2147483648
    %v3390 = vmul.f32 %v3389, 1.442695
    %v3391 = vpow.pop %v3390
    %v3392 = vadd.f32 %v3391, 1.0
    %v3393 = vrcp.pop %v3392
    %v3394 = vmul.f32 1.0, %v3393
    %v3395 = vadd.f32 %v3378, %v592
    %v3396 = vmul.f32 %v3387, %v3395
    %v3397 = vadd.f32 %v3237, %v3396
    %v3398 = vtanh.pop %v3397
    %v3399 = vsub.f32 %v2933, %v3398
    %v3400 = vmul.f32 %v3394, %v3399
    %v3401 = vadd.f32 %v3398, %v3400
    %v3402 = vld [vmem:[#allocation2 + $0x90] sm:$0xff]
    %v3403 = vld [vmem:[#allocation2 + $0x98] sm:$0xff]
    %v3404 = vld [vmem:[#allocation2 + $0xa0] sm:$0xff]
    %3405 = vmatprep.subr.mxu0 %v420
    %3406 = vmatpush1.msra.mxu0 %v419
    %3407 = vmatprep.subr.mxu0 %v423
    %3408 = vmatpush1.msra.mxu0 %v422
    %3409 = vmatprep.subr.mxu0 %v426
    %3410 = vmatpush1.msra.mxu0 %v425
    %3411 = vmatprep.subr.mxu0 %v429
    %3412 = vmatpush1.msra.mxu0 %v428
    %3413 = vmatprep.subr.mxu0 %v432
    %3414 = vmatpush1.msra.mxu0 %v431
    %3415 = vmatprep.subr.mxu0 %v435
    %3416 = vmatpush1.msra.mxu0 %v434
    %3417 = vmatprep.subr.mxu0 %v438
    %3418 = vmatpush1.msra.mxu0 %v437
    %3419 = vmatprep.subr.mxu0 %v441
    %3420 = vmatpush1.msra.mxu0 %v440
    %3421 = vmatprep.subr.mxu0 %v444
    %3422 = vmatpush1.msra.mxu0 %v443
    %3423 = vmatprep.subr.mxu0 %v447
    %3424 = vmatpush1.msra.mxu0 %v446
    %3425 = vmatprep.subr.mxu0 %v450
    %3426 = vmatpush1.msra.mxu0 %v449
    %3427 = vmatprep.subr.mxu0 %v453
    %3428 = vmatpush1.msra.mxu0 %v452
    %3429 = vmatprep.subr.mxu0 %v456
    %3430 = vmatpush1.msra.mxu0 %v455
    %3431 = vmatprep.subr.mxu0 %v459
    %3432 = vmatpush1.msra.mxu0 %v458
    %3433 = vmatprep.subr.mxu0 %v462
    %3434 = vmatpush1.msra.mxu0 %v461
    %3435 = vmatprep.subr.mxu0 %v465
    %3436 = vmatpush1.msra.mxu0 %v464
    %3437 = vmatprep.subr.mxu0 0.0
    %3438 = vmatpush1.msra.mxu0 0.0
    %3439 = vmatprep.subr.mxu0 0.0
    %3440 = vmatpush1.msra.mxu0 0.0
    %3441 = vmatprep.subr.mxu0 0.0
    %3442 = vmatpush1.msra.mxu0 0.0
    %3443 = vmatprep.subr.mxu0 0.0
    %3444 = vmatpush1.msra.mxu0 0.0
    %3445 = vmatprep.subr.mxu0 0.0
    %3446 = vmatpush1.msra.mxu0 0.0
    %3447 = vmatprep.subr.mxu0 0.0
    %3448 = vmatpush1.msra.mxu0 0.0
    %3449 = vmatprep.subr.mxu0 0.0
    %3450 = vmatpush1.msra.mxu0 0.0
    %3451 = vmatprep.subr.mxu0 0.0
    %3452 = vmatpush1.msra.mxu0 0.0
    %3453 = vmatprep.subr.mxu0 0.0
    %3454 = vmatpush1.msra.mxu0 0.0
    %3455 = vmatprep.subr.mxu0 0.0
    %3456 = vmatpush1.msra.mxu0 0.0
    %3457 = vmatprep.subr.mxu0 0.0
    %3458 = vmatpush1.msra.mxu0 0.0
    %3459 = vmatprep.subr.mxu0 0.0
    %3460 = vmatpush1.msra.mxu0 0.0
    %3461 = vmatprep.subr.mxu0 0.0
    %3462 = vmatpush1.msra.mxu0 0.0
    %3463 = vmatprep.subr.mxu0 0.0
    %3464 = vmatpush1.msra.mxu0 0.0
    %3465 = vmatprep.subr.mxu0 0.0
    %3466 = vmatpush1.msra.mxu0 0.0
    %3467 = vmatprep.subr.mxu0 0.0
    %3468 = vmatpush1.msra.mxu0 0.0
    %3469 = vmatprep.mubr.f32.mxu0 0.0
    %3470 = vmatmul.mubr.f32.gmra.mrb[0].mxu0 %v3098
    %v3471 = vpop.f32.mrb[0].mxu0
    %v3472 = vadd.f32 0.0, %v3471
    %v3473 = vpop.f32.mrb[0].mxu0
    %v3474 = vadd.f32 0.0, %v3473
    %3475 = vdwg.mxu0
    %3476 = vmatprep.subr.mxu0 0.0
    %3477 = vmatpush1.msra.mxu0 %v421
    %3478 = vmatprep.subr.mxu0 0.0
    %3479 = vmatpush1.msra.mxu0 %v424
    %3480 = vmatprep.subr.mxu0 0.0
    %3481 = vmatpush1.msra.mxu0 %v427
    %3482 = vmatprep.subr.mxu0 0.0
    %3483 = vmatpush1.msra.mxu0 %v430
    %3484 = vmatprep.subr.mxu0 0.0
    %3485 = vmatpush1.msra.mxu0 %v433
    %3486 = vmatprep.subr.mxu0 0.0
    %3487 = vmatpush1.msra.mxu0 %v436
    %3488 = vmatprep.subr.mxu0 0.0
    %3489 = vmatpush1.msra.mxu0 %v439
    %3490 = vmatprep.subr.mxu0 0.0
    %3491 = vmatpush1.msra.mxu0 %v442
    %3492 = vmatprep.subr.mxu0 0.0
    %3493 = vmatpush1.msra.mxu0 %v445
    %3494 = vmatprep.subr.mxu0 0.0
    %3495 = vmatpush1.msra.mxu0 %v448
    %3496 = vmatprep.subr.mxu0 0.0
    %3497 = vmatpush1.msra.mxu0 %v451
    %3498 = vmatprep.subr.mxu0 0.0
    %3499 = vmatpush1.msra.mxu0 %v454
    %3500 = vmatprep.subr.mxu0 0.0
    %3501 = vmatpush1.msra.mxu0 %v457
    %3502 = vmatprep.subr.mxu0 0.0
    %3503 = vmatpush1.msra.mxu0 %v460
    %3504 = vmatprep.subr.mxu0 0.0
    %3505 = vmatpush1.msra.mxu0 %v463
    %3506 = vmatprep.subr.mxu0 0.0
    %3507 = vmatpush1.msra.mxu0 %v466
    %3508 = vmatprep.subr.mxu0 0.0
    %3509 = vmatpush1.msra.mxu0 0.0
    %3510 = vmatprep.subr.mxu0 0.0
    %3511 = vmatpush1.msra.mxu0 0.0
    %3512 = vmatprep.subr.mxu0 0.0
    %3513 = vmatpush1.msra.mxu0 0.0
    %3514 = vmatprep.subr.mxu0 0.0
    %3515 = vmatpush1.msra.mxu0 0.0
    %3516 = vmatprep.subr.mxu0 0.0
    %3517 = vmatpush1.msra.mxu0 0.0
    %3518 = vmatprep.subr.mxu0 0.0
    %3519 = vmatpush1.msra.mxu0 0.0
    %3520 = vmatprep.subr.mxu0 0.0
    %3521 = vmatpush1.msra.mxu0 0.0
    %3522 = vmatprep.subr.mxu0 0.0
    %3523 = vmatpush1.msra.mxu0 0.0
    %3524 = vmatprep.subr.mxu0 0.0
    %3525 = vmatpush1.msra.mxu0 0.0
    %3526 = vmatprep.subr.mxu0 0.0
    %3527 = vmatpush1.msra.mxu0 0.0
    %3528 = vmatprep.subr.mxu0 0.0
    %3529 = vmatpush1.msra.mxu0 0.0
    %3530 = vmatprep.subr.mxu0 0.0
    %3531 = vmatpush1.msra.mxu0 0.0
    %3532 = vmatprep.subr.mxu0 0.0
    %3533 = vmatpush1.msra.mxu0 0.0
    %3534 = vmatprep.subr.mxu0 0.0
    %3535 = vmatpush1.msra.mxu0 0.0
    %3536 = vmatprep.subr.mxu0 0.0
    %3537 = vmatpush1.msra.mxu0 0.0
    %3538 = vmatprep.subr.mxu0 0.0
    %3539 = vmatpush1.msra.mxu0 0.0
    %3540 = vmatprep.mubr.f32.mxu0 0.0
    %3541 = vmatmul.mubr.f32.gmra.mrb[0].mxu0 %v3098
    %v3542 = vpop.f32.mrb[0].mxu0
    %v3543 = vadd.f32 0.0, %v3542
    %v3544 = vpop.f32.mrb[0].mxu0
    %3545 = vdwg.mxu0
    %v3546 = vadd.f32 %v3402, %v3472
    %v3547 = vxor.u32 %v3546, 2147483648
    %v3548 = vmul.f32 %v3547, 1.442695
    %v3549 = vpow.pop %v3548
    %v3550 = vadd.f32 %v3549, 1.0
    %v3551 = vrcp.pop %v3550
    %v3552 = vmul.f32 1.0, %v3551
    %v3553 = vadd.f32 %v3403, %v3474
    %v3554 = vxor.u32 %v3553, 2147483648
    %v3555 = vmul.f32 %v3554, 1.442695
    %v3556 = vpow.pop %v3555
    %v3557 = vadd.f32 %v3556, 1.0
    %v3558 = vrcp.pop %v3557
    %v3559 = vmul.f32 1.0, %v3558
    %v3560 = vadd.f32 %v3543, %v585
    %v3561 = vmul.f32 %v3552, %v3560
    %v3562 = vadd.f32 %v3404, %v3561
    %v3563 = vtanh.pop %v3562
    %v3564 = vsub.f32 %v3098, %v3563
    %v3565 = vmul.f32 %v3559, %v3564
    %v3566 = vadd.f32 %v3563, %v3565
    %3567 = vmatprep.subr.mxu0 %v468
    %3568 = vmatpush1.msra.mxu0 %v467
    %3569 = vmatprep.subr.mxu0 %v471
    %3570 = vmatpush1.msra.mxu0 %v470
    %3571 = vmatprep.subr.mxu0 %v474
    %3572 = vmatpush1.msra.mxu0 %v473
    %3573 = vmatprep.subr.mxu0 %v477
    %3574 = vmatpush1.msra.mxu0 %v476
    %3575 = vmatprep.subr.mxu0 %v480
    %3576 = vmatpush1.msra.mxu0 %v479
    %3577 = vmatprep.subr.mxu0 %v483
    %3578 = vmatpush1.msra.mxu0 %v482
    %3579 = vmatprep.subr.mxu0 %v486
    %3580 = vmatpush1.msra.mxu0 %v485
    %3581 = vmatprep.subr.mxu0 %v489
    %3582 = vmatpush1.msra.mxu0 %v488
    %3583 = vmatprep.subr.mxu0 %v492
    %3584 = vmatpush1.msra.mxu0 %v491
    %3585 = vmatprep.subr.mxu0 %v495
    %3586 = vmatpush1.msra.mxu0 %v494
    %3587 = vmatprep.subr.mxu0 %v498
    %3588 = vmatpush1.msra.mxu0 %v497
    %3589 = vmatprep.subr.mxu0 %v501
    %3590 = vmatpush1.msra.mxu0 %v500
    %3591 = vmatprep.subr.mxu0 %v504
    %3592 = vmatpush1.msra.mxu0 %v503
    %3593 = vmatprep.subr.mxu0 %v507
    %3594 = vmatpush1.msra.mxu0 %v506
    %3595 = vmatprep.subr.mxu0 %v510
    %3596 = vmatpush1.msra.mxu0 %v509
    %3597 = vmatprep.subr.mxu0 %v513
    %3598 = vmatpush1.msra.mxu0 %v512
    %3599 = vmatprep.subr.mxu0 0.0
    %3600 = vmatpush1.msra.mxu0 0.0
    %3601 = vmatprep.subr.mxu0 0.0
    %3602 = vmatpush1.msra.mxu0 0.0
    %3603 = vmatprep.subr.mxu0 0.0
    %3604 = vmatpush1.msra.mxu0 0.0
    %3605 = vmatprep.subr.mxu0 0.0
    %3606 = vmatpush1.msra.mxu0 0.0
    %3607 = vmatprep.subr.mxu0 0.0
    %3608 = vmatpush1.msra.mxu0 0.0
    %3609 = vmatprep.subr.mxu0 0.0
    %3610 = vmatpush1.msra.mxu0 0.0
    %3611 = vmatprep.subr.mxu0 0.0
    %3612 = vmatpush1.msra.mxu0 0.0
    %3613 = vmatprep.subr.mxu0 0.0
    %3614 = vmatpush1.msra.mxu0 0.0
    %3615 = vmatprep.subr.mxu0 0.0
    %3616 = vmatpush1.msra.mxu0 0.0
    %3617 = vmatprep.subr.mxu0 0.0
    %3618 = vmatpush1.msra.mxu0 0.0
    %3619 = vmatprep.subr.mxu0 0.0
    %3620 = vmatpush1.msra.mxu0 0.0
    %3621 = vmatprep.subr.mxu0 0.0
    %3622 = vmatpush1.msra.mxu0 0.0
    %3623 = vmatprep.subr.mxu0 0.0
    %3624 = vmatpush1.msra.mxu0 0.0
    %3625 = vmatprep.subr.mxu0 0.0
    %3626 = vmatpush1.msra.mxu0 0.0
    %3627 = vmatprep.subr.mxu0 0.0
    %3628 = vmatpush1.msra.mxu0 0.0
    %3629 = vmatprep.subr.mxu0 0.0
    %3630 = vmatpush1.msra.mxu0 0.0
    %3631 = vmatprep.mubr.f32.mxu0 0.0
    %3632 = vmatmul.mubr.f32.gmra.mrb[0].mxu0 %v3566
    %v3633 = vpop.f32.mrb[0].mxu0
    %v3634 = vadd.f32 %v568, %v3633
    %v3635 = vpop.f32.mrb[0].mxu0
    %v3636 = vadd.f32 %v572, %v3635
    %3637 = vdwg.mxu0
    %3638 = vmatprep.subr.mxu0 0.0
    %3639 = vmatpush1.msra.mxu0 %v469
    %3640 = vmatprep.subr.mxu0 0.0
    %3641 = vmatpush1.msra.mxu0 %v472
    %3642 = vmatprep.subr.mxu0 0.0
    %3643 = vmatpush1.msra.mxu0 %v475
    %3644 = vmatprep.subr.mxu0 0.0
    %3645 = vmatpush1.msra.mxu0 %v478
    %3646 = vmatprep.subr.mxu0 0.0
    %3647 = vmatpush1.msra.mxu0 %v481
    %3648 = vmatprep.subr.mxu0 0.0
    %3649 = vmatpush1.msra.mxu0 %v484
    %3650 = vmatprep.subr.mxu0 0.0
    %3651 = vmatpush1.msra.mxu0 %v487
    %3652 = vmatprep.subr.mxu0 0.0
    %3653 = vmatpush1.msra.mxu0 %v490
    %3654 = vmatprep.subr.mxu0 0.0
    %3655 = vmatpush1.msra.mxu0 %v493
    %3656 = vmatprep.subr.mxu0 0.0
    %3657 = vmatpush1.msra.mxu0 %v496
    %3658 = vmatprep.subr.mxu0 0.0
    %3659 = vmatpush1.msra.mxu0 %v499
    %3660 = vmatprep.subr.mxu0 0.0
    %3661 = vmatpush1.msra.mxu0 %v502
    %3662 = vmatprep.subr.mxu0 0.0
    %3663 = vmatpush1.msra.mxu0 %v505
    %3664 = vmatprep.subr.mxu0 0.0
    %3665 = vmatpush1.msra.mxu0 %v508
    %3666 = vmatprep.subr.mxu0 0.0
    %3667 = vmatpush1.msra.mxu0 %v511
    %3668 = vmatprep.subr.mxu0 0.0
    %3669 = vmatpush1.msra.mxu0 %v514
    %3670 = vmatprep.subr.mxu0 0.0
    %3671 = vmatpush1.msra.mxu0 0.0
    %3672 = vmatprep.subr.mxu0 0.0
    %3673 = vmatpush1.msra.mxu0 0.0
    %3674 = vmatprep.subr.mxu0 0.0
    %3675 = vmatpush1.msra.mxu0 0.0
    %3676 = vmatprep.subr.mxu0 0.0
    %3677 = vmatpush1.msra.mxu0 0.0
    %3678 = vmatprep.subr.mxu0 0.0
    %3679 = vmatpush1.msra.mxu0 0.0
    %3680 = vmatprep.subr.mxu0 0.0
    %3681 = vmatpush1.msra.mxu0 0.0
    %3682 = vmatprep.subr.mxu0 0.0
    %3683 = vmatpush1.msra.mxu0 0.0
    %3684 = vmatprep.subr.mxu0 0.0
    %3685 = vmatpush1.msra.mxu0 0.0
    %3686 = vmatprep.subr.mxu0 0.0
    %3687 = vmatpush1.msra.mxu0 0.0
    %3688 = vmatprep.subr.mxu0 0.0
    %3689 = vmatpush1.msra.mxu0 0.0
    %3690 = vmatprep.subr.mxu0 0.0
    %3691 = vmatpush1.msra.mxu0 0.0
    %3692 = vmatprep.subr.mxu0 0.0
    %3693 = vmatpush1.msra.mxu0 0.0
    %3694 = vmatprep.subr.mxu0 0.0
    %3695 = vmatpush1.msra.mxu0 0.0
    %3696 = vmatprep.subr.mxu0 0.0
    %3697 = vmatpush1.msra.mxu0 0.0
    %3698 = vmatprep.subr.mxu0 0.0
    %3699 = vmatpush1.msra.mxu0 0.0
    %3700 = vmatprep.subr.mxu0 0.0
    %3701 = vmatpush1.msra.mxu0 0.0
    %3702 = vmatprep.mubr.f32.mxu0 0.0
    %3703 = vmatmul.mubr.f32.gmra.mrb[0].mxu0 %v3566
    %v3704 = vpop.f32.mrb[0].mxu0
    %v3705 = vadd.f32 %v576, %v3704
    %v3706 = vpop.f32.mrb[0].mxu0
    %3707 = vdwg.mxu0
    %3708 = vmatprep.subr.mxu0 %v516
    %3709 = vmatpush1.msra.mxu0 %v515
    %3710 = vmatprep.subr.mxu0 %v519
    %3711 = vmatpush1.msra.mxu0 %v518
    %3712 = vmatprep.subr.mxu0 %v522
    %3713 = vmatpush1.msra.mxu0 %v521
    %3714 = vmatprep.subr.mxu0 %v525
    %3715 = vmatpush1.msra.mxu0 %v524
    %3716 = vmatprep.subr.mxu0 %v528
    %3717 = vmatpush1.msra.mxu0 %v527
    %3718 = vmatprep.subr.mxu0 %v531
    %3719 = vmatpush1.msra.mxu0 %v530
    %3720 = vmatprep.subr.mxu0 %v534
    %3721 = vmatpush1.msra.mxu0 %v533
    %3722 = vmatprep.subr.mxu0 %v537
    %3723 = vmatpush1.msra.mxu0 %v536
    %3724 = vmatprep.subr.mxu0 %v540
    %3725 = vmatpush1.msra.mxu0 %v539
    %3726 = vmatprep.subr.mxu0 %v543
    %3727 = vmatpush1.msra.mxu0 %v542
    %3728 = vmatprep.subr.mxu0 %v546
    %3729 = vmatpush1.msra.mxu0 %v545
    %3730 = vmatprep.subr.mxu0 %v549
    %3731 = vmatpush1.msra.mxu0 %v548
    %3732 = vmatprep.subr.mxu0 %v552
    %3733 = vmatpush1.msra.mxu0 %v551
    %3734 = vmatprep.subr.mxu0 %v555
    %3735 = vmatpush1.msra.mxu0 %v554
    %3736 = vmatprep.subr.mxu0 %v558
    %3737 = vmatpush1.msra.mxu0 %v557
    %3738 = vmatprep.subr.mxu0 %v561
    %3739 = vmatpush1.msra.mxu0 %v560
    %3740 = vmatprep.subr.mxu0 0.0
    %3741 = vmatpush1.msra.mxu0 0.0
    %3742 = vmatprep.subr.mxu0 0.0
    %3743 = vmatpush1.msra.mxu0 0.0
    %3744 = vmatprep.subr.mxu0 0.0
    %3745 = vmatpush1.msra.mxu0 0.0
    %3746 = vmatprep.subr.mxu0 0.0
    %3747 = vmatpush1.msra.mxu0 0.0
    %3748 = vmatprep.subr.mxu0 0.0
    %3749 = vmatpush1.msra.mxu0 0.0
    %3750 = vmatprep.subr.mxu0 0.0
    %3751 = vmatpush1.msra.mxu0 0.0
    %3752 = vmatprep.subr.mxu0 0.0
    %3753 = vmatpush1.msra.mxu0 0.0
    %3754 = vmatprep.subr.mxu0 0.0
    %3755 = vmatpush1.msra.mxu0 0.0
    %3756 = vmatprep.subr.mxu0 0.0
    %3757 = vmatpush1.msra.mxu0 0.0
    %3758 = vmatprep.subr.mxu0 0.0
    %3759 = vmatpush1.msra.mxu0 0.0
    %3760 = vmatprep.subr.mxu0 0.0
    %3761 = vmatpush1.msra.mxu0 0.0
    %3762 = vmatprep.subr.mxu0 0.0
    %3763 = vmatpush1.msra.mxu0 0.0
    %3764 = vmatprep.subr.mxu0 0.0
    %3765 = vmatpush1.msra.mxu0 0.0
    %3766 = vmatprep.subr.mxu0 0.0
    %3767 = vmatpush1.msra.mxu0 0.0
    %3768 = vmatprep.subr.mxu0 0.0
    %3769 = vmatpush1.msra.mxu0 0.0
    %3770 = vmatprep.subr.mxu0 0.0
    %3771 = vmatpush1.msra.mxu0 0.0
    %3772 = vmatprep.mubr.f32.mxu0 0.0
    %3773 = vmatmul.mubr.f32.gmra.mrb[0].mxu0 %v3401
    %v3774 = vpop.f32.mrb[0].mxu0
    %v3775 = vadd.f32 0.0, %v3774
    %v3776 = vpop.f32.mrb[0].mxu0
    %v3777 = vadd.f32 0.0, %v3776
    %3778 = vdwg.mxu0
    %3779 = vmatprep.subr.mxu0 0.0
    %3780 = vmatpush1.msra.mxu0 %v517
    %3781 = vmatprep.subr.mxu0 0.0
    %3782 = vmatpush1.msra.mxu0 %v520
    %3783 = vmatprep.subr.mxu0 0.0
    %3784 = vmatpush1.msra.mxu0 %v523
    %3785 = vmatprep.subr.mxu0 0.0
    %3786 = vmatpush1.msra.mxu0 %v526
    %3787 = vmatprep.subr.mxu0 0.0
    %3788 = vmatpush1.msra.mxu0 %v529
    %3789 = vmatprep.subr.mxu0 0.0
    %3790 = vmatpush1.msra.mxu0 %v532
    %3791 = vmatprep.subr.mxu0 0.0
    %3792 = vmatpush1.msra.mxu0 %v535
    %3793 = vmatprep.subr.mxu0 0.0
    %3794 = vmatpush1.msra.mxu0 %v538
    %3795 = vmatprep.subr.mxu0 0.0
    %3796 = vmatpush1.msra.mxu0 %v541
    %3797 = vmatprep.subr.mxu0 0.0
    %3798 = vmatpush1.msra.mxu0 %v544
    %3799 = vmatprep.subr.mxu0 0.0
    %3800 = vmatpush1.msra.mxu0 %v547
    %3801 = vmatprep.subr.mxu0 0.0
    %3802 = vmatpush1.msra.mxu0 %v550
    %3803 = vmatprep.subr.mxu0 0.0
    %3804 = vmatpush1.msra.mxu0 %v553
    %3805 = vmatprep.subr.mxu0 0.0
    %3806 = vmatpush1.msra.mxu0 %v556
    %3807 = vmatprep.subr.mxu0 0.0
    %3808 = vmatpush1.msra.mxu0 %v559
    %3809 = vmatprep.subr.mxu0 0.0
    %3810 = vmatpush1.msra.mxu0 %v562
    %3811 = vmatprep.subr.mxu0 0.0
    %3812 = vmatpush1.msra.mxu0 0.0
    %3813 = vmatprep.subr.mxu0 0.0
    %3814 = vmatpush1.msra.mxu0 0.0
    %3815 = vmatprep.subr.mxu0 0.0
    %3816 = vmatpush1.msra.mxu0 0.0
    %3817 = vmatprep.subr.mxu0 0.0
    %3818 = vmatpush1.msra.mxu0 0.0
    %3819 = vmatprep.subr.mxu0 0.0
    %3820 = vmatpush1.msra.mxu0 0.0
    %3821 = vmatprep.subr.mxu0 0.0
    %3822 = vmatpush1.msra.mxu0 0.0
    %3823 = vmatprep.subr.mxu0 0.0
    %3824 = vmatpush1.msra.mxu0 0.0
    %3825 = vmatprep.subr.mxu0 0.0
    %3826 = vmatpush1.msra.mxu0 0.0
    %3827 = vmatprep.subr.mxu0 0.0
    %3828 = vmatpush1.msra.mxu0 0.0
    %3829 = vmatprep.subr.mxu0 0.0
    %3830 = vmatpush1.msra.mxu0 0.0
    %3831 = vmatprep.subr.mxu0 0.0
    %3832 = vmatpush1.msra.mxu0 0.0
    %3833 = vmatprep.subr.mxu0 0.0
    %3834 = vmatpush1.msra.mxu0 0.0
    %3835 = vmatprep.subr.mxu0 0.0
    %3836 = vmatpush1.msra.mxu0 0.0
    %3837 = vmatprep.subr.mxu0 0.0
    %3838 = vmatpush1.msra.mxu0 0.0
    %3839 = vmatprep.subr.mxu0 0.0
    %3840 = vmatpush1.msra.mxu0 0.0
    %3841 = vmatprep.subr.mxu0 0.0
    %3842 = vmatpush1.msra.mxu0 0.0
    %3843 = vmatprep.mubr.f32.mxu0 0.0
    %3844 = vmatmul.mubr.f32.gmra.mrb[0].mxu0 %v3401
    %v3845 = vpop.f32.mrb[0].mxu0
    %v3846 = vadd.f32 0.0, %v3845
    %v3847 = vpop.f32.mrb[0].mxu0
    %3848 = vdwg.mxu0
    %v3849 = vadd.f32 %v3634, %v3775
    %v3850 = vxor.u32 %v3849, 2147483648
    %v3851 = vmul.f32 %v3850, 1.442695
    %v3852 = vpow.pop %v3851
    %v3853 = vadd.f32 %v3852, 1.0
    %v3854 = vrcp.pop %v3853
    %v3855 = vmul.f32 1.0, %v3854
    %v3856 = vadd.f32 %v3636, %v3777
    %v3857 = vxor.u32 %v3856, 2147483648
    %v3858 = vmul.f32 %v3857, 1.442695
    %v3859 = vpow.pop %v3858
    %v3860 = vadd.f32 %v3859, 1.0
    %v3861 = vrcp.pop %v3860
    %v3862 = vmul.f32 1.0, %v3861
    %v3863 = vadd.f32 %v3846, %v592
    %v3864 = vmul.f32 %v3855, %v3863
    %v3865 = vadd.f32 %v3705, %v3864
    %v3866 = vtanh.pop %v3865
    %v3867 = vsub.f32 %v3401, %v3866
    %v3868 = vmul.f32 %v3862, %v3867
    %v3869 = vadd.f32 %v3866, %v3868
    %v3870 = vld [vmem:[#allocation2 + $0xa8] sm:$0xff]
    %v3871 = vld [vmem:[#allocation2 + $0xb0] sm:$0xff]
    %v3872 = vld [vmem:[#allocation2 + $0xb8] sm:$0xff]
    %3873 = vmatprep.subr.mxu0 %v420
    %3874 = vmatpush1.msra.mxu0 %v419
    %3875 = vmatprep.subr.mxu0 %v423
    %3876 = vmatpush1.msra.mxu0 %v422
    %3877 = vmatprep.subr.mxu0 %v426
    %3878 = vmatpush1.msra.mxu0 %v425
    %3879 = vmatprep.subr.mxu0 %v429
    %3880 = vmatpush1.msra.mxu0 %v428
    %3881 = vmatprep.subr.mxu0 %v432
    %3882 = vmatpush1.msra.mxu0 %v431
    %3883 = vmatprep.subr.mxu0 %v435
    %3884 = vmatpush1.msra.mxu0 %v434
    %3885 = vmatprep.subr.mxu0 %v438
    %3886 = vmatpush1.msra.mxu0 %v437
    %3887 = vmatprep.subr.mxu0 %v441
    %3888 = vmatpush1.msra.mxu0 %v440
    %3889 = vmatprep.subr.mxu0 %v444
    %3890 = vmatpush1.msra.mxu0 %v443
    %3891 = vmatprep.subr.mxu0 %v447
    %3892 = vmatpush1.msra.mxu0 %v446
    %3893 = vmatprep.subr.mxu0 %v450
    %3894 = vmatpush1.msra.mxu0 %v449
    %3895 = vmatprep.subr.mxu0 %v453
    %3896 = vmatpush1.msra.mxu0 %v452
    %3897 = vmatprep.subr.mxu0 %v456
    %3898 = vmatpush1.msra.mxu0 %v455
    %3899 = vmatprep.subr.mxu0 %v459
    %3900 = vmatpush1.msra.mxu0 %v458
    %3901 = vmatprep.subr.mxu0 %v462
    %3902 = vmatpush1.msra.mxu0 %v461
    %3903 = vmatprep.subr.mxu0 %v465
    %3904 = vmatpush1.msra.mxu0 %v464
    %3905 = vmatprep.subr.mxu0 0.0
    %3906 = vmatpush1.msra.mxu0 0.0
    %3907 = vmatprep.subr.mxu0 0.0
    %3908 = vmatpush1.msra.mxu0 0.0
    %3909 = vmatprep.subr.mxu0 0.0
    %3910 = vmatpush1.msra.mxu0 0.0
    %3911 = vmatprep.subr.mxu0 0.0
    %3912 = vmatpush1.msra.mxu0 0.0
    %3913 = vmatprep.subr.mxu0 0.0
    %3914 = vmatpush1.msra.mxu0 0.0
    %3915 = vmatprep.subr.mxu0 0.0
    %3916 = vmatpush1.msra.mxu0 0.0
    %3917 = vmatprep.subr.mxu0 0.0
    %3918 = vmatpush1.msra.mxu0 0.0
    %3919 = vmatprep.subr.mxu0 0.0
    %3920 = vmatpush1.msra.mxu0 0.0
    %3921 = vmatprep.subr.mxu0 0.0
    %3922 = vmatpush1.msra.mxu0 0.0
    %3923 = vmatprep.subr.mxu0 0.0
    %3924 = vmatpush1.msra.mxu0 0.0
    %3925 = vmatprep.subr.mxu0 0.0
    %3926 = vmatpush1.msra.mxu0 0.0
    %3927 = vmatprep.subr.mxu0 0.0
    %3928 = vmatpush1.msra.mxu0 0.0
    %3929 = vmatprep.subr.mxu0 0.0
    %3930 = vmatpush1.msra.mxu0 0.0
    %3931 = vmatprep.subr.mxu0 0.0
    %3932 = vmatpush1.msra.mxu0 0.0
    %3933 = vmatprep.subr.mxu0 0.0
    %3934 = vmatpush1.msra.mxu0 0.0
    %3935 = vmatprep.subr.mxu0 0.0
    %3936 = vmatpush1.msra.mxu0 0.0
    %3937 = vmatprep.mubr.f32.mxu0 0.0
    %3938 = vmatmul.mubr.f32.gmra.mrb[0].mxu0 %v3566
    %v3939 = vpop.f32.mrb[0].mxu0
    %v3940 = vadd.f32 0.0, %v3939
    %v3941 = vpop.f32.mrb[0].mxu0
    %v3942 = vadd.f32 0.0, %v3941
    %3943 = vdwg.mxu0
    %3944 = vmatprep.subr.mxu0 0.0
    %3945 = vmatpush1.msra.mxu0 %v421
    %3946 = vmatprep.subr.mxu0 0.0
    %3947 = vmatpush1.msra.mxu0 %v424
    %3948 = vmatprep.subr.mxu0 0.0
    %3949 = vmatpush1.msra.mxu0 %v427
    %3950 = vmatprep.subr.mxu0 0.0
    %3951 = vmatpush1.msra.mxu0 %v430
    %3952 = vmatprep.subr.mxu0 0.0
    %3953 = vmatpush1.msra.mxu0 %v433
    %3954 = vmatprep.subr.mxu0 0.0
    %3955 = vmatpush1.msra.mxu0 %v436
    %3956 = vmatprep.subr.mxu0 0.0
    %3957 = vmatpush1.msra.mxu0 %v439
    %3958 = vmatprep.subr.mxu0 0.0
    %3959 = vmatpush1.msra.mxu0 %v442
    %3960 = vmatprep.subr.mxu0 0.0
    %3961 = vmatpush1.msra.mxu0 %v445
    %3962 = vmatprep.subr.mxu0 0.0
    %3963 = vmatpush1.msra.mxu0 %v448
    %3964 = vmatprep.subr.mxu0 0.0
    %3965 = vmatpush1.msra.mxu0 %v451
    %3966 = vmatprep.subr.mxu0 0.0
    %3967 = vmatpush1.msra.mxu0 %v454
    %3968 = vmatprep.subr.mxu0 0.0
    %3969 = vmatpush1.msra.mxu0 %v457
    %3970 = vmatprep.subr.mxu0 0.0
    %3971 = vmatpush1.msra.mxu0 %v460
    %3972 = vmatprep.subr.mxu0 0.0
    %3973 = vmatpush1.msra.mxu0 %v463
    %3974 = vmatprep.subr.mxu0 0.0
    %3975 = vmatpush1.msra.mxu0 %v466
    %3976 = vmatprep.subr.mxu0 0.0
    %3977 = vmatpush1.msra.mxu0 0.0
    %3978 = vmatprep.subr.mxu0 0.0
    %3979 = vmatpush1.msra.mxu0 0.0
    %3980 = vmatprep.subr.mxu0 0.0
    %3981 = vmatpush1.msra.mxu0 0.0
    %3982 = vmatprep.subr.mxu0 0.0
    %3983 = vmatpush1.msra.mxu0 0.0
    %3984 = vmatprep.subr.mxu0 0.0
    %3985 = vmatpush1.msra.mxu0 0.0
    %3986 = vmatprep.subr.mxu0 0.0
    %3987 = vmatpush1.msra.mxu0 0.0
    %3988 = vmatprep.subr.mxu0 0.0
    %3989 = vmatpush1.msra.mxu0 0.0
    %3990 = vmatprep.subr.mxu0 0.0
    %3991 = vmatpush1.msra.mxu0 0.0
    %3992 = vmatprep.subr.mxu0 0.0
    %3993 = vmatpush1.msra.mxu0 0.0
    %3994 = vmatprep.subr.mxu0 0.0
    %3995 = vmatpush1.msra.mxu0 0.0
    %3996 = vmatprep.subr.mxu0 0.0
    %3997 = vmatpush1.msra.mxu0 0.0
    %3998 = vmatprep.subr.mxu0 0.0
    %3999 = vmatpush1.msra.mxu0 0.0
    %4000 = vmatprep.subr.mxu0 0.0
    %4001 = vmatpush1.msra.mxu0 0.0
    %4002 = vmatprep.subr.mxu0 0.0
    %4003 = vmatpush1.msra.mxu0 0.0
    %4004 = vmatprep.subr.mxu0 0.0
    %4005 = vmatpush1.msra.mxu0 0.0
    %4006 = vmatprep.subr.mxu0 0.0
    %4007 = vmatpush1.msra.mxu0 0.0
    %4008 = vmatprep.mubr.f32.mxu0 0.0
    %4009 = vmatmul.mubr.f32.gmra.mrb[0].mxu0 %v3566
    %v4010 = vpop.f32.mrb[0].mxu0
    %v4011 = vadd.f32 0.0, %v4010
    %v4012 = vpop.f32.mrb[0].mxu0
    %4013 = vdwg.mxu0
    %v4014 = vadd.f32 %v3870, %v3940
    %v4015 = vxor.u32 %v4014, 2147483648
    %v4016 = vmul.f32 %v4015, 1.442695
    %v4017 = vpow.pop %v4016
    %v4018 = vadd.f32 %v4017, 1.0
    %v4019 = vrcp.pop %v4018
    %v4020 = vmul.f32 1.0, %v4019
    %v4021 = vadd.f32 %v3871, %v3942
    %v4022 = vxor.u32 %v4021, 2147483648
    %v4023 = vmul.f32 %v4022, 1.442695
    %v4024 = vpow.pop %v4023
    %v4025 = vadd.f32 %v4024, 1.0
    %v4026 = vrcp.pop %v4025
    %v4027 = vmul.f32 1.0, %v4026
    %v4028 = vadd.f32 %v4011, %v585
    %v4029 = vmul.f32 %v4020, %v4028
    %v4030 = vadd.f32 %v3872, %v4029
    %v4031 = vtanh.pop %v4030
    %v4032 = vsub.f32 %v3566, %v4031
    %v4033 = vmul.f32 %v4027, %v4032
    %v4034 = vadd.f32 %v4031, %v4033
    %4035 = vmatprep.subr.mxu0 %v468
    %4036 = vmatpush1.msra.mxu0 %v467
    %4037 = vmatprep.subr.mxu0 %v471
    %4038 = vmatpush1.msra.mxu0 %v470
    %4039 = vmatprep.subr.mxu0 %v474
    %4040 = vmatpush1.msra.mxu0 %v473
    %4041 = vmatprep.subr.mxu0 %v477
    %4042 = vmatpush1.msra.mxu0 %v476
    %4043 = vmatprep.subr.mxu0 %v480
    %4044 = vmatpush1.msra.mxu0 %v479
    %4045 = vmatprep.subr.mxu0 %v483
    %4046 = vmatpush1.msra.mxu0 %v482
    %4047 = vmatprep.subr.mxu0 %v486
    %4048 = vmatpush1.msra.mxu0 %v485
    %4049 = vmatprep.subr.mxu0 %v489
    %4050 = vmatpush1.msra.mxu0 %v488
    %4051 = vmatprep.subr.mxu0 %v492
    %4052 = vmatpush1.msra.mxu0 %v491
    %4053 = vmatprep.subr.mxu0 %v495
    %4054 = vmatpush1.msra.mxu0 %v494
    %4055 = vmatprep.subr.mxu0 %v498
    %4056 = vmatpush1.msra.mxu0 %v497
    %4057 = vmatprep.subr.mxu0 %v501
    %4058 = vmatpush1.msra.mxu0 %v500
    %4059 = vmatprep.subr.mxu0 %v504
    %4060 = vmatpush1.msra.mxu0 %v503
    %4061 = vmatprep.subr.mxu0 %v507
    %4062 = vmatpush1.msra.mxu0 %v506
    %4063 = vmatprep.subr.mxu0 %v510
    %4064 = vmatpush1.msra.mxu0 %v509
    %4065 = vmatprep.subr.mxu0 %v513
    %4066 = vmatpush1.msra.mxu0 %v512
    %4067 = vmatprep.subr.mxu0 0.0
    %4068 = vmatpush1.msra.mxu0 0.0
    %4069 = vmatprep.subr.mxu0 0.0
    %4070 = vmatpush1.msra.mxu0 0.0
    %4071 = vmatprep.subr.mxu0 0.0
    %4072 = vmatpush1.msra.mxu0 0.0
    %4073 = vmatprep.subr.mxu0 0.0
    %4074 = vmatpush1.msra.mxu0 0.0
    %4075 = vmatprep.subr.mxu0 0.0
    %4076 = vmatpush1.msra.mxu0 0.0
    %4077 = vmatprep.subr.mxu0 0.0
    %4078 = vmatpush1.msra.mxu0 0.0
    %4079 = vmatprep.subr.mxu0 0.0
    %4080 = vmatpush1.msra.mxu0 0.0
    %4081 = vmatprep.subr.mxu0 0.0
    %4082 = vmatpush1.msra.mxu0 0.0
    %4083 = vmatprep.subr.mxu0 0.0
    %4084 = vmatpush1.msra.mxu0 0.0
    %4085 = vmatprep.subr.mxu0 0.0
    %4086 = vmatpush1.msra.mxu0 0.0
    %4087 = vmatprep.subr.mxu0 0.0
    %4088 = vmatpush1.msra.mxu0 0.0
    %4089 = vmatprep.subr.mxu0 0.0
    %4090 = vmatpush1.msra.mxu0 0.0
    %4091 = vmatprep.subr.mxu0 0.0
    %4092 = vmatpush1.msra.mxu0 0.0
    %4093 = vmatprep.subr.mxu0 0.0
    %4094 = vmatpush1.msra.mxu0 0.0
    %4095 = vmatprep.subr.mxu0 0.0
    %4096 = vmatpush1.msra.mxu0 0.0
    %4097 = vmatprep.subr.mxu0 0.0
    %4098 = vmatpush1.msra.mxu0 0.0
    %4099 = vmatprep.mubr.f32.mxu0 0.0
    %4100 = vmatmul.mubr.f32.gmra.mrb[0].mxu0 %v4034
    %v4101 = vpop.f32.mrb[0].mxu0
    %v4102 = vadd.f32 %v568, %v4101
    %v4103 = vpop.f32.mrb[0].mxu0
    %v4104 = vadd.f32 %v572, %v4103
    %4105 = vdwg.mxu0
    %4106 = vmatprep.subr.mxu0 0.0
    %4107 = vmatpush1.msra.mxu0 %v469
    %4108 = vmatprep.subr.mxu0 0.0
    %4109 = vmatpush1.msra.mxu0 %v472
    %4110 = vmatprep.subr.mxu0 0.0
    %4111 = vmatpush1.msra.mxu0 %v475
    %4112 = vmatprep.subr.mxu0 0.0
    %4113 = vmatpush1.msra.mxu0 %v478
    %4114 = vmatprep.subr.mxu0 0.0
    %4115 = vmatpush1.msra.mxu0 %v481
    %4116 = vmatprep.subr.mxu0 0.0
    %4117 = vmatpush1.msra.mxu0 %v484
    %4118 = vmatprep.subr.mxu0 0.0
    %4119 = vmatpush1.msra.mxu0 %v487
    %4120 = vmatprep.subr.mxu0 0.0
    %4121 = vmatpush1.msra.mxu0 %v490
    %4122 = vmatprep.subr.mxu0 0.0
    %4123 = vmatpush1.msra.mxu0 %v493
    %4124 = vmatprep.subr.mxu0 0.0
    %4125 = vmatpush1.msra.mxu0 %v496
    %4126 = vmatprep.subr.mxu0 0.0
    %4127 = vmatpush1.msra.mxu0 %v499
    %4128 = vmatprep.subr.mxu0 0.0
    %4129 = vmatpush1.msra.mxu0 %v502
    %4130 = vmatprep.subr.mxu0 0.0
    %4131 = vmatpush1.msra.mxu0 %v505
    %4132 = vmatprep.subr.mxu0 0.0
    %4133 = vmatpush1.msra.mxu0 %v508
    %4134 = vmatprep.subr.mxu0 0.0
    %4135 = vmatpush1.msra.mxu0 %v511
    %4136 = vmatprep.subr.mxu0 0.0
    %4137 = vmatpush1.msra.mxu0 %v514
    %4138 = vmatprep.subr.mxu0 0.0
    %4139 = vmatpush1.msra.mxu0 0.0
    %4140 = vmatprep.subr.mxu0 0.0
    %4141 = vmatpush1.msra.mxu0 0.0
    %4142 = vmatprep.subr.mxu0 0.0
    %4143 = vmatpush1.msra.mxu0 0.0
    %4144 = vmatprep.subr.mxu0 0.0
    %4145 = vmatpush1.msra.mxu0 0.0
    %4146 = vmatprep.subr.mxu0 0.0
    %4147 = vmatpush1.msra.mxu0 0.0
    %4148 = vmatprep.subr.mxu0 0.0
    %4149 = vmatpush1.msra.mxu0 0.0
    %4150 = vmatprep.subr.mxu0 0.0
    %4151 = vmatpush1.msra.mxu0 0.0
    %4152 = vmatprep.subr.mxu0 0.0
    %4153 = vmatpush1.msra.mxu0 0.0
    %4154 = vmatprep.subr.mxu0 0.0
    %4155 = vmatpush1.msra.mxu0 0.0
    %4156 = vmatprep.subr.mxu0 0.0
    %4157 = vmatpush1.msra.mxu0 0.0
    %4158 = vmatprep.subr.mxu0 0.0
    %4159 = vmatpush1.msra.mxu0 0.0
    %4160 = vmatprep.subr.mxu0 0.0
    %4161 = vmatpush1.msra.mxu0 0.0
    %4162 = vmatprep.subr.mxu0 0.0
    %4163 = vmatpush1.msra.mxu0 0.0
    %4164 = vmatprep.subr.mxu0 0.0
    %4165 = vmatpush1.msra.mxu0 0.0
    %4166 = vmatprep.subr.mxu0 0.0
    %4167 = vmatpush1.msra.mxu0 0.0
    %4168 = vmatprep.subr.mxu0 0.0
    %4169 = vmatpush1.msra.mxu0 0.0
    %4170 = vmatprep.mubr.f32.mxu0 0.0
    %4171 = vmatmul.mubr.f32.gmra.mrb[0].mxu0 %v4034
    %v4172 = vpop.f32.mrb[0].mxu0
    %v4173 = vadd.f32 %v576, %v4172
    %v4174 = vpop.f32.mrb[0].mxu0
    %4175 = vdwg.mxu0
    %4176 = vmatprep.subr.mxu0 %v516
    %4177 = vmatpush1.msra.mxu0 %v515
    %4178 = vmatprep.subr.mxu0 %v519
    %4179 = vmatpush1.msra.mxu0 %v518
    %4180 = vmatprep.subr.mxu0 %v522
    %4181 = vmatpush1.msra.mxu0 %v521
    %4182 = vmatprep.subr.mxu0 %v525
    %4183 = vmatpush1.msra.mxu0 %v524
    %4184 = vmatprep.subr.mxu0 %v528
    %4185 = vmatpush1.msra.mxu0 %v527
    %4186 = vmatprep.subr.mxu0 %v531
    %4187 = vmatpush1.msra.mxu0 %v530
    %4188 = vmatprep.subr.mxu0 %v534
    %4189 = vmatpush1.msra.mxu0 %v533
    %4190 = vmatprep.subr.mxu0 %v537
    %4191 = vmatpush1.msra.mxu0 %v536
    %4192 = vmatprep.subr.mxu0 %v540
    %4193 = vmatpush1.msra.mxu0 %v539
    %4194 = vmatprep.subr.mxu0 %v543
    %4195 = vmatpush1.msra.mxu0 %v542
    %4196 = vmatprep.subr.mxu0 %v546
    %4197 = vmatpush1.msra.mxu0 %v545
    %4198 = vmatprep.subr.mxu0 %v549
    %4199 = vmatpush1.msra.mxu0 %v548
    %4200 = vmatprep.subr.mxu0 %v552
    %4201 = vmatpush1.msra.mxu0 %v551
    %4202 = vmatprep.subr.mxu0 %v555
    %4203 = vmatpush1.msra.mxu0 %v554
    %4204 = vmatprep.subr.mxu0 %v558
    %4205 = vmatpush1.msra.mxu0 %v557
    %4206 = vmatprep.subr.mxu0 %v561
    %4207 = vmatpush1.msra.mxu0 %v560
    %4208 = vmatprep.subr.mxu0 0.0
    %4209 = vmatpush1.msra.mxu0 0.0
    %4210 = vmatprep.subr.mxu0 0.0
    %4211 = vmatpush1.msra.mxu0 0.0
    %4212 = vmatprep.subr.mxu0 0.0
    %4213 = vmatpush1.msra.mxu0 0.0
    %4214 = vmatprep.subr.mxu0 0.0
    %4215 = vmatpush1.msra.mxu0 0.0
    %4216 = vmatprep.subr.mxu0 0.0
    %4217 = vmatpush1.msra.mxu0 0.0
    %4218 = vmatprep.subr.mxu0 0.0
    %4219 = vmatpush1.msra.mxu0 0.0
    %4220 = vmatprep.subr.mxu0 0.0
    %4221 = vmatpush1.msra.mxu0 0.0
    %4222 = vmatprep.subr.mxu0 0.0
    %4223 = vmatpush1.msra.mxu0 0.0
    %4224 = vmatprep.subr.mxu0 0.0
    %4225 = vmatpush1.msra.mxu0 0.0
    %4226 = vmatprep.subr.mxu0 0.0
    %4227 = vmatpush1.msra.mxu0 0.0
    %4228 = vmatprep.subr.mxu0 0.0
    %4229 = vmatpush1.msra.mxu0 0.0
    %4230 = vmatprep.subr.mxu0 0.0
    %4231 = vmatpush1.msra.mxu0 0.0
    %4232 = vmatprep.subr.mxu0 0.0
    %4233 = vmatpush1.msra.mxu0 0.0
    %4234 = vmatprep.subr.mxu0 0.0
    %4235 = vmatpush1.msra.mxu0 0.0
    %4236 = vmatprep.subr.mxu0 0.0
    %4237 = vmatpush1.msra.mxu0 0.0
    %4238 = vmatprep.subr.mxu0 0.0
    %4239 = vmatpush1.msra.mxu0 0.0
    %4240 = vmatprep.mubr.f32.mxu0 0.0
    %4241 = vmatmul.mubr.f32.gmra.mrb[0].mxu0 %v3869
    %v4242 = vpop.f32.mrb[0].mxu0
    %v4243 = vadd.f32 0.0, %v4242
    %v4244 = vpop.f32.mrb[0].mxu0
    %v4245 = vadd.f32 0.0, %v4244
    %4246 = vdwg.mxu0
    %4247 = vmatprep.subr.mxu0 0.0
    %4248 = vmatpush1.msra.mxu0 %v517
    %4249 = vmatprep.subr.mxu0 0.0
    %4250 = vmatpush1.msra.mxu0 %v520
    %4251 = vmatprep.subr.mxu0 0.0
    %4252 = vmatpush1.msra.mxu0 %v523
    %4253 = vmatprep.subr.mxu0 0.0
    %4254 = vmatpush1.msra.mxu0 %v526
    %4255 = vmatprep.subr.mxu0 0.0
    %4256 = vmatpush1.msra.mxu0 %v529
    %4257 = vmatprep.subr.mxu0 0.0
    %4258 = vmatpush1.msra.mxu0 %v532
    %4259 = vmatprep.subr.mxu0 0.0
    %4260 = vmatpush1.msra.mxu0 %v535
    %4261 = vmatprep.subr.mxu0 0.0
    %4262 = vmatpush1.msra.mxu0 %v538
    %4263 = vmatprep.subr.mxu0 0.0
    %4264 = vmatpush1.msra.mxu0 %v541
    %4265 = vmatprep.subr.mxu0 0.0
    %4266 = vmatpush1.msra.mxu0 %v544
    %4267 = vmatprep.subr.mxu0 0.0
    %4268 = vmatpush1.msra.mxu0 %v547
    %4269 = vmatprep.subr.mxu0 0.0
    %4270 = vmatpush1.msra.mxu0 %v550
    %4271 = vmatprep.subr.mxu0 0.0
    %4272 = vmatpush1.msra.mxu0 %v553
    %4273 = vmatprep.subr.mxu0 0.0
    %4274 = vmatpush1.msra.mxu0 %v556
    %4275 = vmatprep.subr.mxu0 0.0
    %4276 = vmatpush1.msra.mxu0 %v559
    %4277 = vmatprep.subr.mxu0 0.0
    %4278 = vmatpush1.msra.mxu0 %v562
    %4279 = vmatprep.subr.mxu0 0.0
    %4280 = vmatpush1.msra.mxu0 0.0
    %4281 = vmatprep.subr.mxu0 0.0
    %4282 = vmatpush1.msra.mxu0 0.0
    %4283 = vmatprep.subr.mxu0 0.0
    %4284 = vmatpush1.msra.mxu0 0.0
    %4285 = vmatprep.subr.mxu0 0.0
    %4286 = vmatpush1.msra.mxu0 0.0
    %4287 = vmatprep.subr.mxu0 0.0
    %4288 = vmatpush1.msra.mxu0 0.0
    %4289 = vmatprep.subr.mxu0 0.0
    %4290 = vmatpush1.msra.mxu0 0.0
    %4291 = vmatprep.subr.mxu0 0.0
    %4292 = vmatpush1.msra.mxu0 0.0
    %4293 = vmatprep.subr.mxu0 0.0
    %4294 = vmatpush1.msra.mxu0 0.0
    %4295 = vmatprep.subr.mxu0 0.0
    %4296 = vmatpush1.msra.mxu0 0.0
    %4297 = vmatprep.subr.mxu0 0.0
    %4298 = vmatpush1.msra.mxu0 0.0
    %4299 = vmatprep.subr.mxu0 0.0
    %4300 = vmatpush1.msra.mxu0 0.0
    %4301 = vmatprep.subr.mxu0 0.0
    %4302 = vmatpush1.msra.mxu0 0.0
    %4303 = vmatprep.subr.mxu0 0.0
    %4304 = vmatpush1.msra.mxu0 0.0
    %4305 = vmatprep.subr.mxu0 0.0
    %4306 = vmatpush1.msra.mxu0 0.0
    %4307 = vmatprep.subr.mxu0 0.0
    %4308 = vmatpush1.msra.mxu0 0.0
    %4309 = vmatprep.subr.mxu0 0.0
    %4310 = vmatpush1.msra.mxu0 0.0
    %4311 = vmatprep.mubr.f32.mxu0 0.0
    %4312 = vmatmul.mubr.f32.gmra.mrb[0].mxu0 %v3869
    %v4313 = vpop.f32.mrb[0].mxu0
    %v4314 = vadd.f32 0.0, %v4313
    %v4315 = vpop.f32.mrb[0].mxu0
    %4316 = vdwg.mxu0
    %v4317 = vadd.f32 %v4102, %v4243
    %v4318 = vxor.u32 %v4317, 2147483648
    %v4319 = vmul.f32 %v4318, 1.442695
    %v4320 = vpow.pop %v4319
    %v4321 = vadd.f32 %v4320, 1.0
    %v4322 = vrcp.pop %v4321
    %v4323 = vmul.f32 1.0, %v4322
    %v4324 = vadd.f32 %v4104, %v4245
    %v4325 = vxor.u32 %v4324, 2147483648
    %v4326 = vmul.f32 %v4325, 1.442695
    %v4327 = vpow.pop %v4326
    %v4328 = vadd.f32 %v4327, 1.0
    %v4329 = vrcp.pop %v4328
    %v4330 = vmul.f32 1.0, %v4329
    %v4331 = vadd.f32 %v4314, %v592
    %v4332 = vmul.f32 %v4323, %v4331
    %v4333 = vadd.f32 %v4173, %v4332
    %v4334 = vtanh.pop %v4333
    %v4335 = vsub.f32 %v3869, %v4334
    %v4336 = vmul.f32 %v4330, %v4335
    %v4337 = vadd.f32 %v4334, %v4336
    %4338 = vst [vmem:[#allocation12] sm:$0xff] %v4034
    %4339 = vst [vmem:[#allocation13] sm:$0xff] %v4337
    // Predicated region
    $region58: #{tpu_custom_call.1} parent=1 // pred_check
      _
    $region59: #{tpu_custom_call.1} parent=1 // pred_check_branch
      %4341 = sbr.rel (0) target = $region61
    $region60: #{tpu_custom_call.1} parent=1 // pred_region
      %s4343 = ssub.s32 128, 128
      %4344 = vsyncadd [#allocation5], %s4343
      %s4346 = sshll.u32 [#allocation12], 4
      %s4347 = int_to_ptr.vmem [resolvable:$true] %s4346
      %4349 = dma.vmem_to_hbm [thread:$0]  %s4347, 128, %s9, [#allocation5]
    $region61: #{tpu_custom_call.1} parent=1 // pred_fallthru
      _
    // Predicated region
    $region62: #{tpu_custom_call.1} parent=1 // pred_check
      _
    $region63: #{tpu_custom_call.1} parent=1 // pred_check_branch
      %4351 = sbr.rel (0) target = $region65
    $region64: #{tpu_custom_call.1} parent=1 // pred_region
      %s4353 = ssub.s32 128, 128
      %4354 = vsyncadd [#allocation14], %s4353
      %s4356 = sshll.u32 [#allocation13], 4
      %s4357 = int_to_ptr.vmem [resolvable:$true] %s4356
      %4359 = dma.vmem_to_hbm [thread:$0]  %s4357, 128, %s10, [#allocation14]
    $region65: #{tpu_custom_call.1} parent=1 // pred_fallthru
      _
    // Predicated region
    $region66: #{tpu_custom_call.1} parent=1 // pred_check
      _
    $region67: #{tpu_custom_call.1} parent=1 // pred_check_branch
      %4361 = sbr.rel (0) target = $region69
    $region68: #{tpu_custom_call.1} parent=1 // pred_region
      %4362 = dma.done [#allocation5], 128
    $region69: #{tpu_custom_call.1} parent=1 // pred_fallthru
      _
    // Predicated region
    $region70: #{tpu_custom_call.1} parent=1 // pred_check
      _
    $region71: #{tpu_custom_call.1} parent=1 // pred_check_branch
      %4364 = sbr.rel (0) target = $region73
    $region72: #{tpu_custom_call.1} parent=1 // pred_region
      %4365 = dma.done [#allocation14], 128
    $region73: #{tpu_custom_call.1} parent=1 // pred_fallthru
      _
    %4366 = vsyncpa [#allocation4], 1
    %4367 = vsyncpa [#allocation7], 1
    %4368 = vsyncpa [#allocation10], 1
    %4369 = vsyncpa [#allocation5], 1
    %4370 = vsyncpa [#allocation14], 1

</llo_original>
